<compile_context>
chip_gen: v5e
topology: v5e:2x2
jax: 0.10.0
libtpu: 0.0.40
codegen_flags: <defaults>
</compile_context>

<pallas_src>
import functools
import math

import jax
import jax.numpy as jnp
from jax import lax
from jax.experimental import pallas as pl
from jax.experimental.pallas import tpu as pltpu


def _round_up(x, m):
    return ((x + m - 1) // m) * m


def _pick_t_chunk(T, B_pad, target_rows=256):
    """Largest divisor of T with ~target_rows matmul rows per chunk."""
    tc = max(1, min(T, max(1, target_rows // B_pad)))
    while T % tc != 0:
        tc -= 1
    return tc


# ----------------------------------------------------------------------------
# Fused kernel: LSTM stack (PyTorch gate order i,f,g,o) + ReLU/Linear tail.
# ----------------------------------------------------------------------------
def _make_fused_kernel(T, B, H, H_pad, num_lstm, tail_count, t_chunk):
    G = 4 * H
    n_chunks = T // t_chunk
    rows = t_chunk * B

    def kernel(*refs):
        idx = 0
        x_ref = refs[idx]; idx += 1
        lstm_refs = []
        for _ in range(num_lstm):
            lstm_refs.append((refs[idx], refs[idx + 1], refs[idx + 2]))
            idx += 3
        tail_refs = []
        for _ in range(tail_count):
            tail_refs.append((refs[idx], refs[idx + 1]))
            idx += 2
        out_ref = refs[idx]; idx += 1
        gx_ref = refs[idx]; idx += 1                 # (T, B, 4H) bf16 gate pre-acts
        seq_scratch = (refs[idx], refs[idx + 1])     # ping/pong (T, B, H_pad) bf16

        # Zero the lane-padded hidden scratches once: the [H:H_pad] pad lanes
        # are never rewritten and must be 0 (zero-padded weight rows rely on
        # finite values; uninitialised VMEM could hold NaN bit patterns).
        if H_pad > H:
            seq_scratch[0][...] = jnp.zeros(seq_scratch[0].shape,
                                            seq_scratch[0].dtype)
            seq_scratch[1][...] = jnp.zeros(seq_scratch[1].shape,
                                            seq_scratch[1].dtype)

        # Per-lane constants, hoisted once and reused for every step/layer:
        # g_mask selects the candidate ("g", tanh) gate lanes; gate_scale is
        # 2 on those lanes so a single sigmoid gives tanh via 2*s-1.
        lane = lax.broadcasted_iota(jnp.int32, (B, G), 1)
        g_mask = (lane >= 2 * H) & (lane < 3 * H)
        gate_scale = jnp.where(g_mask, 2.0, 1.0).astype(jnp.float32)

        for l, (wihT_ref, whhT_ref, b_ref) in enumerate(lstm_refs):
            in_ref = x_ref if l == 0 else seq_scratch[(l - 1) % 2]
            seq_ref = seq_scratch[l % 2]
            in_dim = in_ref.shape[-1]

            wihT = wihT_ref[...]                      # (in_dim, 4H) bf16
            bias = b_ref[...]                         # (1, 4H) f32

            # ---- hoisted input projection, chunked over T ----------------
            def proj(ci, carry, in_ref=in_ref, wihT=wihT, bias=bias):
                base = pl.multiple_of(ci * t_chunk, t_chunk)
                xs = in_ref[pl.ds(base, t_chunk)]     # (tc, B, in_dim) bf16
                g = jnp.dot(xs.reshape(rows, in_dim), wihT,
                            preferred_element_type=jnp.float32) + bias
                gx_ref[pl.ds(base, t_chunk)] = (
                    g.reshape(t_chunk, B, G).astype(jnp.bfloat16))
                return carry

            lax.fori_loop(0, n_chunks, proj, 0, unroll=False)

            # ---- serial recurrence ---------------------------------------
            whhT = whhT_ref[...]                      # (H, 4H) bf16, loop-invariant
            # TODO(synk): for large H, keep whhT resident in MXU staging regs
            # via pltpu.matmul_push_rhs / matmul_acc_lhs instead of re-pushing
            # it through the vex slot every time step.

            def step(t, carry, whhT=whhT, seq_ref=seq_ref):
                h_prev, c_prev = carry
                g = gx_ref[t].astype(jnp.float32) + jnp.dot(
                    h_prev.astype(jnp.bfloat16), whhT,
                    preferred_element_type=jnp.float32)
                # One full-width sigmoid; tanh lanes via tanh(x)=2*sigmoid(2x)-1.
                s = jax.nn.sigmoid(g * gate_scale)
                act = jnp.where(g_mask, 2.0 * s - 1.0, s)
                i_g = act[:, 0 * H:1 * H]
                f_g = act[:, 1 * H:2 * H]
                g_g = act[:, 2 * H:3 * H]
                o_g = act[:, 3 * H:4 * H]
                c_new = f_g * c_prev + i_g * g_g
                h_new = o_g * jnp.tanh(c_new)
                # Off the critical (register) dependency chain for step t+1.
                seq_ref[t, :, 0:H] = h_new.astype(jnp.bfloat16)
                return (h_new, c_new)

            zeros = jnp.zeros((B, H), jnp.float32)
            lax.fori_loop(0, T, step, (zeros, zeros),
                          unroll=True if T <= 32 else 8)

        # ---- fused ReLU + Linear tail, chunked over T, lane-dense output --
        last_seq = seq_scratch[(num_lstm - 1) % 2]
        tail_wb = [(w_ref[...], tb_ref[...]) for (w_ref, tb_ref) in tail_refs]

        def tail(ci, carry):
            base = pl.multiple_of(ci * t_chunk, t_chunk)
            feat = last_seq[pl.ds(base, t_chunk)].reshape(rows, H_pad)
            for (wT, tb) in tail_wb:
                feat = jnp.maximum(feat, 0.0).astype(jnp.bfloat16)
                feat = jnp.dot(feat, wT,
                               preferred_element_type=jnp.float32) + tb
            row0 = pl.multiple_of(ci * rows, rows)
            out_ref[pl.ds(row0, rows)] = feat
            return carry

        lax.fori_loop(0, n_chunks, tail, 0, unroll=False)

    return kernel


def lstm_imf_lite_forward(params, x_in, hidden_size):
    """x_in: (B, T, input_size) float32 -> (B*T, num_classes) float32.

    Matches the PyTorch module: nn.LSTM (batch_first, zero initial state),
    lstm_out.reshape(-1, H), then tail_sequential (ReLU + Linear pairs).
    """
    B, T, I = x_in.shape
    H = hidden_size
    num_classes = params["tail"][-1]["w"].shape[0]
    num_lstm = len(params["lstm"])
    tail_count = len(params["tail"])

    B_pad = _round_up(B, 16)        # bf16 sublane height
    I_pad = _round_up(I, 128)       # lane-dense input features
    H_pad = _round_up(H, 128)       # lane-dense hidden features
    G = 4 * H

    # Pad batch + feature lanes (padded rows/lanes are zero, matching padded
    # zero weight rows), go time-major, cast matmul operands to bf16.
    x = x_in.astype(jnp.float32)
    x = jnp.pad(x, ((0, B_pad - B), (0, 0), (0, I_pad - I)))
    x_tbi = jnp.transpose(x, (1, 0, 2)).astype(jnp.bfloat16)   # (T, B_pad, I_pad)

    inputs = [x_tbi]
    for li, lp in enumerate(params["lstm"]):
        in_real = I if li == 0 else H
        in_pad = I_pad if li == 0 else H_pad
        wihT = jnp.asarray(lp["w_ih"]).T                       # (in_real, 4H)
        wihT = jnp.pad(wihT, ((0, in_pad - in_real), (0, 0))).astype(jnp.bfloat16)
        whhT = jnp.asarray(lp["w_hh"]).T.astype(jnp.bfloat16)  # (H, 4H)
        bias = (lp["b_ih"] + lp["b_hh"]).reshape(1, G).astype(jnp.float32)
        inputs += [wihT, whhT, bias]

    tail_in_pad = H_pad
    C_pad = None
    for tp in params["tail"]:
        o_real, i_real = tp["w"].shape                         # (out, in)
        o_pad = _round_up(o_real, 128)
        wT = jnp.asarray(tp["w"]).T                            # (in_real, out_real)
        wT = jnp.pad(wT, ((0, tail_in_pad - i_real),
                          (0, o_pad - o_real))).astype(jnp.bfloat16)
        b = jnp.pad(jnp.asarray(tp["b"]).reshape(1, -1),
                    ((0, 0), (0, o_pad - o_real))).astype(jnp.float32)
        inputs += [wT, b]
        tail_in_pad = o_pad
        C_pad = o_pad

    # Chunk size for the throughput-bound matmuls (projection + tail):
    # ~256 rows per chunk feeds the v6e/v7x 256-wide MXU; divisor of T.
    t_chunk = _pick_t_chunk(T, B_pad, target_rows=256)

    kernel = _make_fused_kernel(T, B_pad, H, H_pad, num_lstm, tail_count,
                                t_chunk)

    # Scratches (all bf16): hoisted gate pre-activations + ping/pong h-sequence.
    gx_bytes = T * B_pad * G * 2
    seq_bytes = T * B_pad * H_pad * 2
    out_bytes = T * B_pad * C_pad * 4
    resident = sum(int(a.size) * a.dtype.itemsize for a in inputs)
    vmem_limit = int(min(96 * 2 ** 20,
                         max(16 * 2 ** 20,
                             2 * (resident + gx_bytes + 2 * seq_bytes
                                  + out_bytes) + (4 << 20))))

    out_tb = pl.pallas_call(
        kernel,
        out_shape=jax.ShapeDtypeStruct((T * B_pad, C_pad), jnp.float32),
        scratch_shapes=[
            pltpu.VMEM((T, B_pad, G), jnp.bfloat16),       # gate pre-acts
            pltpu.VMEM((T, B_pad, H_pad), jnp.bfloat16),   # layer out (ping)
            pltpu.VMEM((T, B_pad, H_pad), jnp.bfloat16),   # layer out (pong)
        ],
        compiler_params=pltpu.CompilerParams(vmem_limit_bytes=vmem_limit),
    )(*inputs)

    # Reorder only the tiny final tensor: time-major rows -> batch-first rows,
    # dropping the padded batch rows and padded class lanes.
    out = out_tb.reshape(T, B_pad, C_pad)[:, :B, :num_classes]
    return jnp.transpose(out, (1, 0, 2)).reshape(B * T, num_classes)


# ----------------------------------------------------------------------------
# Parameter construction (PyTorch-equivalent shapes / init ranges)
# ----------------------------------------------------------------------------
def init_params(key, num_classes, input_size, hidden_size, num_layers,
                nn_inter_dim, tail_length):
    params = {"lstm": [], "tail": []}
    k = 1.0 / math.sqrt(hidden_size)
    for layer in range(num_layers):
        in_sz = input_size if layer == 0 else hidden_size
        key, k1, k2, k3, k4 = jax.random.split(key, 5)
        params["lstm"].append({
            "w_ih": jax.random.uniform(k1, (4 * hidden_size, in_sz), jnp.float32, -k, k),
            "w_hh": jax.random.uniform(k2, (4 * hidden_size, hidden_size), jnp.float32, -k, k),
            "b_ih": jax.random.uniform(k3, (4 * hidden_size,), jnp.float32, -k, k),
            "b_hh": jax.random.uniform(k4, (4 * hidden_size,), jnp.float32, -k, k),
        })
    for i_layer in range(tail_length):
        in_sz = hidden_size if i_layer == 0 else nn_inter_dim
        out_sz = num_classes if i_layer == tail_length - 1 else nn_inter_dim
        kl = 1.0 / math.sqrt(in_sz)
        key, k1, k2 = jax.random.split(key, 3)
        params["tail"].append({
            "w": jax.random.uniform(k1, (out_sz, in_sz), jnp.float32, -kl, kl),
            "b": jax.random.uniform(k2, (out_sz,), jnp.float32, -kl, kl),
        })
    return params


# ----------------------------------------------------------------------------
# Pure-JAX f32 reference (correctness check)
# ----------------------------------------------------------------------------
def reference_forward(params, x_in, hidden_size):
    B, T, _ = x_in.shape
    seq = x_in.astype(jnp.float32)
    for lp in params["lstm"]:
        h = jnp.zeros((B, hidden_size), jnp.float32)
        c = jnp.zeros((B, hidden_size), jnp.float32)
        outs = []
        for t in range(T):
            g = (seq[:, t] @ lp["w_ih"].T + lp["b_ih"]
                 + h @ lp["w_hh"].T + lp["b_hh"])
            i_g = jax.nn.sigmoid(g[:, 0 * hidden_size:1 * hidden_size])
            f_g = jax.nn.sigmoid(g[:, 1 * hidden_size:2 * hidden_size])
            g_g = jnp.tanh(g[:, 2 * hidden_size:3 * hidden_size])
            o_g = jax.nn.sigmoid(g[:, 3 * hidden_size:4 * hidden_size])
            c = f_g * c + i_g * g_g
            h = o_g * jnp.tanh(c)
            outs.append(h)
        seq = jnp.stack(outs, axis=1)
    feat = seq.reshape(-1, hidden_size)
    for tp in params["tail"]:
        feat = jnp.maximum(feat, 0.0) @ tp["w"].T + tp["b"]
    return feat


if __name__ == "__main__":
    num_classes = 3
    input_size = 4
    hidden_size = 32
    num_layers = 2
    nn_inter_dim = 16
    tail_length = 2
    batch, seq_len = 2, 8

    key = jax.random.PRNGKey(0)
    key, kx = jax.random.split(key)
    x_in = jax.random.normal(kx, (batch, seq_len, input_size), jnp.float32)

    params = init_params(key, num_classes, input_size, hidden_size,
                         num_layers, nn_inter_dim, tail_length)

    fwd = jax.jit(functools.partial(lstm_imf_lite_forward,
                                    hidden_size=hidden_size))
    out = jax.block_until_ready(fwd(params, x_in))

    ref = reference_forward(params, x_in, hidden_size)
    assert out.shape == (batch * seq_len, num_classes), out.shape
    # bf16 matmul operands / bf16 scratches (f32 accumulation & carries)
    # vs f32 reference -> loosened tolerance.
    err = float(jnp.max(jnp.abs(out - ref)))
    assert err < 5e-2, f"mismatch vs reference: max abs err {err}"

    print("KERNEL_OK")
</pallas_src>

<mosaic_0001>
module attributes {stable_mosaic.version = 11 : i64} {
  func.func @kernel(%arg0: memref<8x16x128xbf16, #tpu.memory_space<vmem>>, %arg1: memref<128x128xbf16, #tpu.memory_space<vmem>>, %arg2: memref<32x128xbf16, #tpu.memory_space<vmem>>, %arg3: memref<1x128xf32, #tpu.memory_space<vmem>>, %arg4: memref<128x128xbf16, #tpu.memory_space<vmem>>, %arg5: memref<32x128xbf16, #tpu.memory_space<vmem>>, %arg6: memref<1x128xf32, #tpu.memory_space<vmem>>, %arg7: memref<128x128xbf16, #tpu.memory_space<vmem>>, %arg8: memref<1x128xf32, #tpu.memory_space<vmem>>, %arg9: memref<128x128xbf16, #tpu.memory_space<vmem>>, %arg10: memref<1x128xf32, #tpu.memory_space<vmem>>, %arg11: memref<128x128xf32, #tpu.memory_space<vmem>>, %arg12: memref<8x16x128xbf16, #tpu.memory_space<vmem>>, %arg13: memref<8x16x128xbf16, #tpu.memory_space<vmem>>, %arg14: memref<8x16x128xbf16, #tpu.memory_space<vmem>>) attributes {dimension_semantics = [], scalar_prefetch = 0 : i64, scratch_operands = 3 : i64, tpu.core_type = #tpu.core_type<tc>} {
    %cst = arith.constant 0.000000e+00 : bf16
    %0 = vector.broadcast %cst : bf16 to vector<8x16x128xbf16>
    %c0 = arith.constant 0 : index
    %c0_0 = arith.constant 0 : index
    %c0_1 = arith.constant 0 : index
    %1 = vector.load %arg13[%c0, %c0_0, %c0_1] : memref<8x16x128xbf16, #tpu.memory_space<vmem>>, vector<8x16x128xbf16>
    tpu.vector_store %arg13[%c0, %c0_0, %c0_1], %0 {strides = array<i32>} : memref<8x16x128xbf16, #tpu.memory_space<vmem>>, vector<8x16x128xbf16>,
    %cst_2 = arith.constant 0.000000e+00 : bf16
    %2 = vector.broadcast %cst_2 : bf16 to vector<8x16x128xbf16>
    %c0_3 = arith.constant 0 : index
    %c0_4 = arith.constant 0 : index
    %c0_5 = arith.constant 0 : index
    %3 = vector.load %arg14[%c0_3, %c0_4, %c0_5] : memref<8x16x128xbf16, #tpu.memory_space<vmem>>, vector<8x16x128xbf16>
    tpu.vector_store %arg14[%c0_3, %c0_4, %c0_5], %2 {strides = array<i32>} : memref<8x16x128xbf16, #tpu.memory_space<vmem>>, vector<8x16x128xbf16>,
    %4 = tpu.iota {dimensions = array<i32: 1>} : vector<16x128xi32>
    %c64_i32 = arith.constant 64 : i32
    %5 = vector.broadcast %c64_i32 : i32 to vector<16x128xi32>
    %6 = arith.cmpi sge, %4, %5 : vector<16x128xi32>
    %c96_i32 = arith.constant 96 : i32
    %7 = vector.broadcast %c96_i32 : i32 to vector<16x128xi32>
    %8 = arith.cmpi slt, %4, %7 : vector<16x128xi32>
    %9 = arith.andi %6, %8 : vector<16x128xi1>
    %cst_6 = arith.constant 2.000000e+00 : f32
    %cst_7 = arith.constant 1.000000e+00 : f32
    %10 = vector.broadcast %cst_6 : f32 to vector<16x128xf32>
    %11 = vector.broadcast %cst_7 : f32 to vector<16x128xf32>
    %12 = arith.select %9, %10, %11 : vector<16x128xi1>, vector<16x128xf32>
    %c0_8 = arith.constant 0 : index
    %c0_9 = arith.constant 0 : index
    %13 = vector.load %arg1[%c0_8, %c0_9] : memref<128x128xbf16, #tpu.memory_space<vmem>>, vector<128x128xbf16>
    %c0_10 = arith.constant 0 : index
    %c0_11 = arith.constant 0 : index
    %14 = vector.load %arg3[%c0_10, %c0_11] : memref<1x128xf32, #tpu.memory_space<vmem>>, vector<1x128xf32>
    %c0_i32 = arith.constant 0 : i32
    %c8_i32 = arith.constant 8 : i32
    %15 = arith.muli %c0_i32, %c8_i32 : i32
    %16 = tpu.assume_multiple %15, 8 : i32
    %17 = arith.index_cast %16 : i32 to index
    %c0_12 = arith.constant 0 : index
    %c0_13 = arith.constant 0 : index
    %18 = vector.load %arg0[%17, %c0_12, %c0_13] : memref<8x16x128xbf16, #tpu.memory_space<vmem>>, vector<8x16x128xbf16>
    %19 = vector.shape_cast %18 : vector<8x16x128xbf16> to vector<128x128xbf16>
    %cst_14 = arith.constant dense<0.000000e+00> : vector<128x128xf32>
    %20 = tpu.matmul %19, %13, %cst_14 {dimension_numbers = #tpu.dot_dimension_numbers<[1], [0], [0], [1], [0, 0, 1, 1], [], []>} : vector<128x128xbf16>, vector<128x128xbf16>, vector<128x128xf32> -> vector<128x128xf32>
    %21 = vector.broadcast %14 : vector<1x128xf32> to vector<128x128xf32>
    %22 = arith.addf %20, %21 : vector<128x128xf32>
    %23 = vector.shape_cast %22 : vector<128x128xf32> to vector<8x16x128xf32>
    %24 = arith.truncf %23 : vector<8x16x128xf32> to vector<8x16x128xbf16>
    %25 = arith.index_cast %16 : i32 to index
    %c0_15 = arith.constant 0 : index
    %c0_16 = arith.constant 0 : index
    %26 = vector.load %arg12[%25, %c0_15, %c0_16] : memref<8x16x128xbf16, #tpu.memory_space<vmem>>, vector<8x16x128xbf16>
    tpu.vector_store %arg12[%25, %c0_15, %c0_16], %24 {strides = array<i32>} : memref<8x16x128xbf16, #tpu.memory_space<vmem>>, vector<8x16x128xbf16>,
    %c1_i32 = arith.constant 1 : i32
    %c0_17 = arith.constant 0 : index
    %c0_18 = arith.constant 0 : index
    %27 = vector.load %arg2[%c0_17, %c0_18] : memref<32x128xbf16, #tpu.memory_space<vmem>>, vector<32x128xbf16>
    %cst_19 = arith.constant 0.000000e+00 : f32
    %28 = vector.broadcast %cst_19 : f32 to vector<16x32xf32>
    %c0_i32_20 = arith.constant 0 : i32
    %29 = arith.index_cast %c0_i32_20 : i32 to index
    %c0_21 = arith.constant 0 : index
    %c0_22 = arith.constant 0 : index
    %30 = vector.load %arg12[%29, %c0_21, %c0_22] : memref<8x16x128xbf16, #tpu.memory_space<vmem>>, vector<1x16x128xbf16>
    %31 = vector.shape_cast %30 : vector<1x16x128xbf16> to vector<16x128xbf16>
    %32 = arith.extf %31 : vector<16x128xbf16> to vector<16x128xf32>
    %33 = arith.truncf %28 : vector<16x32xf32> to vector<16x32xbf16>
    %cst_23 = arith.constant dense<0.000000e+00> : vector<16x128xf32>
    %34 = tpu.matmul %33, %27, %cst_23 {dimension_numbers = #tpu.dot_dimension_numbers<[1], [0], [0], [1], [0, 0, 1, 1], [], []>} : vector<16x32xbf16>, vector<32x128xbf16>, vector<16x128xf32> -> vector<16x128xf32>
    %35 = arith.addf %32, %34 : vector<16x128xf32>
    %36 = arith.mulf %35, %12 : vector<16x128xf32>
    %37 = arith.negf %36 : vector<16x128xf32>
    %38 = math.exp %37 : vector<16x128xf32>
    %cst_24 = arith.constant 1.000000e+00 : f32
    %39 = vector.broadcast %cst_24 : f32 to vector<16x128xf32>
    %40 = arith.addf %39, %38 : vector<16x128xf32>
    %41 = arith.divf %39, %40 : vector<16x128xf32>
    %cst_25 = arith.constant 2.000000e+00 : f32
    %42 = vector.broadcast %cst_25 : f32 to vector<16x128xf32>
    %43 = arith.mulf %42, %41 : vector<16x128xf32>
    %cst_26 = arith.constant 1.000000e+00 : f32
    %44 = vector.broadcast %cst_26 : f32 to vector<16x128xf32>
    %45 = arith.subf %43, %44 : vector<16x128xf32>
    %46 = arith.select %9, %45, %41 : vector<16x128xi1>, vector<16x128xf32>
    %47 = vector.extract_strided_slice %46 {offsets = [0, 0], sizes = [16, 32], strides = [1, 1]} : vector<16x128xf32> to vector<16x32xf32>
    %48 = vector.extract_strided_slice %46 {offsets = [0, 32], sizes = [16, 32], strides = [1, 1]} : vector<16x128xf32> to vector<16x32xf32>
    %49 = vector.extract_strided_slice %46 {offsets = [0, 64], sizes = [16, 32], strides = [1, 1]} : vector<16x128xf32> to vector<16x32xf32>
    %50 = vector.extract_strided_slice %46 {offsets = [0, 96], sizes = [16, 32], strides = [1, 1]} : vector<16x128xf32> to vector<16x32xf32>
    %51 = arith.mulf %48, %28 : vector<16x32xf32>
    %52 = arith.mulf %47, %49 : vector<16x32xf32>
    %53 = arith.addf %51, %52 : vector<16x32xf32>
    %54 = math.tanh %53 : vector<16x32xf32>
    %55 = arith.mulf %50, %54 : vector<16x32xf32>
    %56 = arith.truncf %55 : vector<16x32xf32> to vector<16x32xbf16>
    %57 = arith.index_cast %c0_i32_20 : i32 to index
    %c0_27 = arith.constant 0 : index
    %c0_28 = arith.constant 0 : index
    %58 = vector.load %arg13[%57, %c0_27, %c0_28] : memref<8x16x128xbf16, #tpu.memory_space<vmem>>, vector<1x16x32xbf16>
    %59 = vector.shape_cast %58 : vector<1x16x32xbf16> to vector<16x32xbf16>
    %60 = vector.shape_cast %56 : vector<16x32xbf16> to vector<1x16x32xbf16>
    tpu.vector_store %arg13[%57, %c0_27, %c0_28], %60 {strides = array<i32>} : memref<8x16x128xbf16, #tpu.memory_space<vmem>>, vector<1x16x32xbf16>,
    %c1_i32_29 = arith.constant 1 : i32
    %61 = arith.index_cast %c1_i32_29 : i32 to index
    %c0_30 = arith.constant 0 : index
    %c0_31 = arith.constant 0 : index
    %62 = vector.load %arg12[%61, %c0_30, %c0_31] : memref<8x16x128xbf16, #tpu.memory_space<vmem>>, vector<1x16x128xbf16>
    %63 = vector.shape_cast %62 : vector<1x16x128xbf16> to vector<16x128xbf16>
    %64 = arith.extf %63 : vector<16x128xbf16> to vector<16x128xf32>
    %65 = arith.truncf %55 : vector<16x32xf32> to vector<16x32xbf16>
    %cst_32 = arith.constant dense<0.000000e+00> : vector<16x128xf32>
    %66 = tpu.matmul %65, %27, %cst_32 {dimension_numbers = #tpu.dot_dimension_numbers<[1], [0], [0], [1], [0, 0, 1, 1], [], []>} : vector<16x32xbf16>, vector<32x128xbf16>, vector<16x128xf32> -> vector<16x128xf32>
    %67 = arith.addf %64, %66 : vector<16x128xf32>
    %68 = arith.mulf %67, %12 : vector<16x128xf32>
    %69 = arith.negf %68 : vector<16x128xf32>
    %70 = math.exp %69 : vector<16x128xf32>
    %cst_33 = arith.constant 1.000000e+00 : f32
    %71 = vector.broadcast %cst_33 : f32 to vector<16x128xf32>
    %72 = arith.addf %71, %70 : vector<16x128xf32>
    %73 = arith.divf %71, %72 : vector<16x128xf32>
    %cst_34 = arith.constant 2.000000e+00 : f32
    %74 = vector.broadcast %cst_34 : f32 to vector<16x128xf32>
    %75 = arith.mulf %74, %73 : vector<16x128xf32>
    %cst_35 = arith.constant 1.000000e+00 : f32
    %76 = vector.broadcast %cst_35 : f32 to vector<16x128xf32>
    %77 = arith.subf %75, %76 : vector<16x128xf32>
    %78 = arith.select %9, %77, %73 : vector<16x128xi1>, vector<16x128xf32>
    %79 = vector.extract_strided_slice %78 {offsets = [0, 0], sizes = [16, 32], strides = [1, 1]} : vector<16x128xf32> to vector<16x32xf32>
    %80 = vector.extract_strided_slice %78 {offsets = [0, 32], sizes = [16, 32], strides = [1, 1]} : vector<16x128xf32> to vector<16x32xf32>
    %81 = vector.extract_strided_slice %78 {offsets = [0, 64], sizes = [16, 32], strides = [1, 1]} : vector<16x128xf32> to vector<16x32xf32>
    %82 = vector.extract_strided_slice %78 {offsets = [0, 96], sizes = [16, 32], strides = [1, 1]} : vector<16x128xf32> to vector<16x32xf32>
    %83 = arith.mulf %80, %53 : vector<16x32xf32>
    %84 = arith.mulf %79, %81 : vector<16x32xf32>
    %85 = arith.addf %83, %84 : vector<16x32xf32>
    %86 = math.tanh %85 : vector<16x32xf32>
    %87 = arith.mulf %82, %86 : vector<16x32xf32>
    %88 = arith.truncf %87 : vector<16x32xf32> to vector<16x32xbf16>
    %89 = arith.index_cast %c1_i32_29 : i32 to index
    %c0_36 = arith.constant 0 : index
    %c0_37 = arith.constant 0 : index
    %90 = vector.load %arg13[%89, %c0_36, %c0_37] : memref<8x16x128xbf16, #tpu.memory_space<vmem>>, vector<1x16x32xbf16>
    %91 = vector.shape_cast %90 : vector<1x16x32xbf16> to vector<16x32xbf16>
    %92 = vector.shape_cast %88 : vector<16x32xbf16> to vector<1x16x32xbf16>
    tpu.vector_store %arg13[%89, %c0_36, %c0_37], %92 {strides = array<i32>} : memref<8x16x128xbf16, #tpu.memory_space<vmem>>, vector<1x16x32xbf16>,
    %c2_i32 = arith.constant 2 : i32
    %93 = arith.index_cast %c2_i32 : i32 to index
    %c0_38 = arith.constant 0 : index
    %c0_39 = arith.constant 0 : index
    %94 = vector.load %arg12[%93, %c0_38, %c0_39] : memref<8x16x128xbf16, #tpu.memory_space<vmem>>, vector<1x16x128xbf16>
    %95 = vector.shape_cast %94 : vector<1x16x128xbf16> to vector<16x128xbf16>
    %96 = arith.extf %95 : vector<16x128xbf16> to vector<16x128xf32>
    %97 = arith.truncf %87 : vector<16x32xf32> to vector<16x32xbf16>
    %cst_40 = arith.constant dense<0.000000e+00> : vector<16x128xf32>
    %98 = tpu.matmul %97, %27, %cst_40 {dimension_numbers = #tpu.dot_dimension_numbers<[1], [0], [0], [1], [0, 0, 1, 1], [], []>} : vector<16x32xbf16>, vector<32x128xbf16>, vector<16x128xf32> -> vector<16x128xf32>
    %99 = arith.addf %96, %98 : vector<16x128xf32>
    %100 = arith.mulf %99, %12 : vector<16x128xf32>
    %101 = arith.negf %100 : vector<16x128xf32>
    %102 = math.exp %101 : vector<16x128xf32>
    %cst_41 = arith.constant 1.000000e+00 : f32
    %103 = vector.broadcast %cst_41 : f32 to vector<16x128xf32>
    %104 = arith.addf %103, %102 : vector<16x128xf32>
    %105 = arith.divf %103, %104 : vector<16x128xf32>
    %cst_42 = arith.constant 2.000000e+00 : f32
    %106 = vector.broadcast %cst_42 : f32 to vector<16x128xf32>
    %107 = arith.mulf %106, %105 : vector<16x128xf32>
    %cst_43 = arith.constant 1.000000e+00 : f32
    %108 = vector.broadcast %cst_43 : f32 to vector<16x128xf32>
    %109 = arith.subf %107, %108 : vector<16x128xf32>
    %110 = arith.select %9, %109, %105 : vector<16x128xi1>, vector<16x128xf32>
    %111 = vector.extract_strided_slice %110 {offsets = [0, 0], sizes = [16, 32], strides = [1, 1]} : vector<16x128xf32> to vector<16x32xf32>
    %112 = vector.extract_strided_slice %110 {offsets = [0, 32], sizes = [16, 32], strides = [1, 1]} : vector<16x128xf32> to vector<16x32xf32>
    %113 = vector.extract_strided_slice %110 {offsets = [0, 64], sizes = [16, 32], strides = [1, 1]} : vector<16x128xf32> to vector<16x32xf32>
    %114 = vector.extract_strided_slice %110 {offsets = [0, 96], sizes = [16, 32], strides = [1, 1]} : vector<16x128xf32> to vector<16x32xf32>
    %115 = arith.mulf %112, %85 : vector<16x32xf32>
    %116 = arith.mulf %111, %113 : vector<16x32xf32>
    %117 = arith.addf %115, %116 : vector<16x32xf32>
    %118 = math.tanh %117 : vector<16x32xf32>
    %119 = arith.mulf %114, %118 : vector<16x32xf32>
    %120 = arith.truncf %119 : vector<16x32xf32> to vector<16x32xbf16>
    %121 = arith.index_cast %c2_i32 : i32 to index
    %c0_44 = arith.constant 0 : index
    %c0_45 = arith.constant 0 : index
    %122 = vector.load %arg13[%121, %c0_44, %c0_45] : memref<8x16x128xbf16, #tpu.memory_space<vmem>>, vector<1x16x32xbf16>
    %123 = vector.shape_cast %122 : vector<1x16x32xbf16> to vector<16x32xbf16>
    %124 = vector.shape_cast %120 : vector<16x32xbf16> to vector<1x16x32xbf16>
    tpu.vector_store %arg13[%121, %c0_44, %c0_45], %124 {strides = array<i32>} : memref<8x16x128xbf16, #tpu.memory_space<vmem>>, vector<1x16x32xbf16>,
    %c3_i32 = arith.constant 3 : i32
    %125 = arith.index_cast %c3_i32 : i32 to index
    %c0_46 = arith.constant 0 : index
    %c0_47 = arith.constant 0 : index
    %126 = vector.load %arg12[%125, %c0_46, %c0_47] : memref<8x16x128xbf16, #tpu.memory_space<vmem>>, vector<1x16x128xbf16>
    %127 = vector.shape_cast %126 : vector<1x16x128xbf16> to vector<16x128xbf16>
    %128 = arith.extf %127 : vector<16x128xbf16> to vector<16x128xf32>
    %129 = arith.truncf %119 : vector<16x32xf32> to vector<16x32xbf16>
    %cst_48 = arith.constant dense<0.000000e+00> : vector<16x128xf32>
    %130 = tpu.matmul %129, %27, %cst_48 {dimension_numbers = #tpu.dot_dimension_numbers<[1], [0], [0], [1], [0, 0, 1, 1], [], []>} : vector<16x32xbf16>, vector<32x128xbf16>, vector<16x128xf32> -> vector<16x128xf32>
    %131 = arith.addf %128, %130 : vector<16x128xf32>
    %132 = arith.mulf %131, %12 : vector<16x128xf32>
    %133 = arith.negf %132 : vector<16x128xf32>
    %134 = math.exp %133 : vector<16x128xf32>
    %cst_49 = arith.constant 1.000000e+00 : f32
    %135 = vector.broadcast %cst_49 : f32 to vector<16x128xf32>
    %136 = arith.addf %135, %134 : vector<16x128xf32>
    %137 = arith.divf %135, %136 : vector<16x128xf32>
    %cst_50 = arith.constant 2.000000e+00 : f32
    %138 = vector.broadcast %cst_50 : f32 to vector<16x128xf32>
    %139 = arith.mulf %138, %137 : vector<16x128xf32>
    %cst_51 = arith.constant 1.000000e+00 : f32
    %140 = vector.broadcast %cst_51 : f32 to vector<16x128xf32>
    %141 = arith.subf %139, %140 : vector<16x128xf32>
    %142 = arith.select %9, %141, %137 : vector<16x128xi1>, vector<16x128xf32>
    %143 = vector.extract_strided_slice %142 {offsets = [0, 0], sizes = [16, 32], strides = [1, 1]} : vector<16x128xf32> to vector<16x32xf32>
    %144 = vector.extract_strided_slice %142 {offsets = [0, 32], sizes = [16, 32], strides = [1, 1]} : vector<16x128xf32> to vector<16x32xf32>
    %145 = vector.extract_strided_slice %142 {offsets = [0, 64], sizes = [16, 32], strides = [1, 1]} : vector<16x128xf32> to vector<16x32xf32>
    %146 = vector.extract_strided_slice %142 {offsets = [0, 96], sizes = [16, 32], strides = [1, 1]} : vector<16x128xf32> to vector<16x32xf32>
    %147 = arith.mulf %144, %117 : vector<16x32xf32>
    %148 = arith.mulf %143, %145 : vector<16x32xf32>
    %149 = arith.addf %147, %148 : vector<16x32xf32>
    %150 = math.tanh %149 : vector<16x32xf32>
    %151 = arith.mulf %146, %150 : vector<16x32xf32>
    %152 = arith.truncf %151 : vector<16x32xf32> to vector<16x32xbf16>
    %153 = arith.index_cast %c3_i32 : i32 to index
    %c0_52 = arith.constant 0 : index
    %c0_53 = arith.constant 0 : index
    %154 = vector.load %arg13[%153, %c0_52, %c0_53] : memref<8x16x128xbf16, #tpu.memory_space<vmem>>, vector<1x16x32xbf16>
    %155 = vector.shape_cast %154 : vector<1x16x32xbf16> to vector<16x32xbf16>
    %156 = vector.shape_cast %152 : vector<16x32xbf16> to vector<1x16x32xbf16>
    tpu.vector_store %arg13[%153, %c0_52, %c0_53], %156 {strides = array<i32>} : memref<8x16x128xbf16, #tpu.memory_space<vmem>>, vector<1x16x32xbf16>,
    %c4_i32 = arith.constant 4 : i32
    %157 = arith.index_cast %c4_i32 : i32 to index
    %c0_54 = arith.constant 0 : index
    %c0_55 = arith.constant 0 : index
    %158 = vector.load %arg12[%157, %c0_54, %c0_55] : memref<8x16x128xbf16, #tpu.memory_space<vmem>>, vector<1x16x128xbf16>
    %159 = vector.shape_cast %158 : vector<1x16x128xbf16> to vector<16x128xbf16>
    %160 = arith.extf %159 : vector<16x128xbf16> to vector<16x128xf32>
    %161 = arith.truncf %151 : vector<16x32xf32> to vector<16x32xbf16>
    %cst_56 = arith.constant dense<0.000000e+00> : vector<16x128xf32>
    %162 = tpu.matmul %161, %27, %cst_56 {dimension_numbers = #tpu.dot_dimension_numbers<[1], [0], [0], [1], [0, 0, 1, 1], [], []>} : vector<16x32xbf16>, vector<32x128xbf16>, vector<16x128xf32> -> vector<16x128xf32>
    %163 = arith.addf %160, %162 : vector<16x128xf32>
    %164 = arith.mulf %163, %12 : vector<16x128xf32>
    %165 = arith.negf %164 : vector<16x128xf32>
    %166 = math.exp %165 : vector<16x128xf32>
    %cst_57 = arith.constant 1.000000e+00 : f32
    %167 = vector.broadcast %cst_57 : f32 to vector<16x128xf32>
    %168 = arith.addf %167, %166 : vector<16x128xf32>
    %169 = arith.divf %167, %168 : vector<16x128xf32>
    %cst_58 = arith.constant 2.000000e+00 : f32
    %170 = vector.broadcast %cst_58 : f32 to vector<16x128xf32>
    %171 = arith.mulf %170, %169 : vector<16x128xf32>
    %cst_59 = arith.constant 1.000000e+00 : f32
    %172 = vector.broadcast %cst_59 : f32 to vector<16x128xf32>
    %173 = arith.subf %171, %172 : vector<16x128xf32>
    %174 = arith.select %9, %173, %169 : vector<16x128xi1>, vector<16x128xf32>
    %175 = vector.extract_strided_slice %174 {offsets = [0, 0], sizes = [16, 32], strides = [1, 1]} : vector<16x128xf32> to vector<16x32xf32>
    %176 = vector.extract_strided_slice %174 {offsets = [0, 32], sizes = [16, 32], strides = [1, 1]} : vector<16x128xf32> to vector<16x32xf32>
    %177 = vector.extract_strided_slice %174 {offsets = [0, 64], sizes = [16, 32], strides = [1, 1]} : vector<16x128xf32> to vector<16x32xf32>
    %178 = vector.extract_strided_slice %174 {offsets = [0, 96], sizes = [16, 32], strides = [1, 1]} : vector<16x128xf32> to vector<16x32xf32>
    %179 = arith.mulf %176, %149 : vector<16x32xf32>
    %180 = arith.mulf %175, %177 : vector<16x32xf32>
    %181 = arith.addf %179, %180 : vector<16x32xf32>
    %182 = math.tanh %181 : vector<16x32xf32>
    %183 = arith.mulf %178, %182 : vector<16x32xf32>
    %184 = arith.truncf %183 : vector<16x32xf32> to vector<16x32xbf16>
    %185 = arith.index_cast %c4_i32 : i32 to index
    %c0_60 = arith.constant 0 : index
    %c0_61 = arith.constant 0 : index
    %186 = vector.load %arg13[%185, %c0_60, %c0_61] : memref<8x16x128xbf16, #tpu.memory_space<vmem>>, vector<1x16x32xbf16>
    %187 = vector.shape_cast %186 : vector<1x16x32xbf16> to vector<16x32xbf16>
    %188 = vector.shape_cast %184 : vector<16x32xbf16> to vector<1x16x32xbf16>
    tpu.vector_store %arg13[%185, %c0_60, %c0_61], %188 {strides = array<i32>} : memref<8x16x128xbf16, #tpu.memory_space<vmem>>, vector<1x16x32xbf16>,
    %c5_i32 = arith.constant 5 : i32
    %189 = arith.index_cast %c5_i32 : i32 to index
    %c0_62 = arith.constant 0 : index
    %c0_63 = arith.constant 0 : index
    %190 = vector.load %arg12[%189, %c0_62, %c0_63] : memref<8x16x128xbf16, #tpu.memory_space<vmem>>, vector<1x16x128xbf16>
    %191 = vector.shape_cast %190 : vector<1x16x128xbf16> to vector<16x128xbf16>
    %192 = arith.extf %191 : vector<16x128xbf16> to vector<16x128xf32>
    %193 = arith.truncf %183 : vector<16x32xf32> to vector<16x32xbf16>
    %cst_64 = arith.constant dense<0.000000e+00> : vector<16x128xf32>
    %194 = tpu.matmul %193, %27, %cst_64 {dimension_numbers = #tpu.dot_dimension_numbers<[1], [0], [0], [1], [0, 0, 1, 1], [], []>} : vector<16x32xbf16>, vector<32x128xbf16>, vector<16x128xf32> -> vector<16x128xf32>
    %195 = arith.addf %192, %194 : vector<16x128xf32>
    %196 = arith.mulf %195, %12 : vector<16x128xf32>
    %197 = arith.negf %196 : vector<16x128xf32>
    %198 = math.exp %197 : vector<16x128xf32>
    %cst_65 = arith.constant 1.000000e+00 : f32
    %199 = vector.broadcast %cst_65 : f32 to vector<16x128xf32>
    %200 = arith.addf %199, %198 : vector<16x128xf32>
    %201 = arith.divf %199, %200 : vector<16x128xf32>
    %cst_66 = arith.constant 2.000000e+00 : f32
    %202 = vector.broadcast %cst_66 : f32 to vector<16x128xf32>
    %203 = arith.mulf %202, %201 : vector<16x128xf32>
    %cst_67 = arith.constant 1.000000e+00 : f32
    %204 = vector.broadcast %cst_67 : f32 to vector<16x128xf32>
    %205 = arith.subf %203, %204 : vector<16x128xf32>
    %206 = arith.select %9, %205, %201 : vector<16x128xi1>, vector<16x128xf32>
    %207 = vector.extract_strided_slice %206 {offsets = [0, 0], sizes = [16, 32], strides = [1, 1]} : vector<16x128xf32> to vector<16x32xf32>
    %208 = vector.extract_strided_slice %206 {offsets = [0, 32], sizes = [16, 32], strides = [1, 1]} : vector<16x128xf32> to vector<16x32xf32>
    %209 = vector.extract_strided_slice %206 {offsets = [0, 64], sizes = [16, 32], strides = [1, 1]} : vector<16x128xf32> to vector<16x32xf32>
    %210 = vector.extract_strided_slice %206 {offsets = [0, 96], sizes = [16, 32], strides = [1, 1]} : vector<16x128xf32> to vector<16x32xf32>
    %211 = arith.mulf %208, %181 : vector<16x32xf32>
    %212 = arith.mulf %207, %209 : vector<16x32xf32>
    %213 = arith.addf %211, %212 : vector<16x32xf32>
    %214 = math.tanh %213 : vector<16x32xf32>
    %215 = arith.mulf %210, %214 : vector<16x32xf32>
    %216 = arith.truncf %215 : vector<16x32xf32> to vector<16x32xbf16>
    %217 = arith.index_cast %c5_i32 : i32 to index
    %c0_68 = arith.constant 0 : index
    %c0_69 = arith.constant 0 : index
    %218 = vector.load %arg13[%217, %c0_68, %c0_69] : memref<8x16x128xbf16, #tpu.memory_space<vmem>>, vector<1x16x32xbf16>
    %219 = vector.shape_cast %218 : vector<1x16x32xbf16> to vector<16x32xbf16>
    %220 = vector.shape_cast %216 : vector<16x32xbf16> to vector<1x16x32xbf16>
    tpu.vector_store %arg13[%217, %c0_68, %c0_69], %220 {strides = array<i32>} : memref<8x16x128xbf16, #tpu.memory_space<vmem>>, vector<1x16x32xbf16>,
    %c6_i32 = arith.constant 6 : i32
    %221 = arith.index_cast %c6_i32 : i32 to index
    %c0_70 = arith.constant 0 : index
    %c0_71 = arith.constant 0 : index
    %222 = vector.load %arg12[%221, %c0_70, %c0_71] : memref<8x16x128xbf16, #tpu.memory_space<vmem>>, vector<1x16x128xbf16>
    %223 = vector.shape_cast %222 : vector<1x16x128xbf16> to vector<16x128xbf16>
    %224 = arith.extf %223 : vector<16x128xbf16> to vector<16x128xf32>
    %225 = arith.truncf %215 : vector<16x32xf32> to vector<16x32xbf16>
    %cst_72 = arith.constant dense<0.000000e+00> : vector<16x128xf32>
    %226 = tpu.matmul %225, %27, %cst_72 {dimension_numbers = #tpu.dot_dimension_numbers<[1], [0], [0], [1], [0, 0, 1, 1], [], []>} : vector<16x32xbf16>, vector<32x128xbf16>, vector<16x128xf32> -> vector<16x128xf32>
    %227 = arith.addf %224, %226 : vector<16x128xf32>
    %228 = arith.mulf %227, %12 : vector<16x128xf32>
    %229 = arith.negf %228 : vector<16x128xf32>
    %230 = math.exp %229 : vector<16x128xf32>
    %cst_73 = arith.constant 1.000000e+00 : f32
    %231 = vector.broadcast %cst_73 : f32 to vector<16x128xf32>
    %232 = arith.addf %231, %230 : vector<16x128xf32>
    %233 = arith.divf %231, %232 : vector<16x128xf32>
    %cst_74 = arith.constant 2.000000e+00 : f32
    %234 = vector.broadcast %cst_74 : f32 to vector<16x128xf32>
    %235 = arith.mulf %234, %233 : vector<16x128xf32>
    %cst_75 = arith.constant 1.000000e+00 : f32
    %236 = vector.broadcast %cst_75 : f32 to vector<16x128xf32>
    %237 = arith.subf %235, %236 : vector<16x128xf32>
    %238 = arith.select %9, %237, %233 : vector<16x128xi1>, vector<16x128xf32>
    %239 = vector.extract_strided_slice %238 {offsets = [0, 0], sizes = [16, 32], strides = [1, 1]} : vector<16x128xf32> to vector<16x32xf32>
    %240 = vector.extract_strided_slice %238 {offsets = [0, 32], sizes = [16, 32], strides = [1, 1]} : vector<16x128xf32> to vector<16x32xf32>
    %241 = vector.extract_strided_slice %238 {offsets = [0, 64], sizes = [16, 32], strides = [1, 1]} : vector<16x128xf32> to vector<16x32xf32>
    %242 = vector.extract_strided_slice %238 {offsets = [0, 96], sizes = [16, 32], strides = [1, 1]} : vector<16x128xf32> to vector<16x32xf32>
    %243 = arith.mulf %240, %213 : vector<16x32xf32>
    %244 = arith.mulf %239, %241 : vector<16x32xf32>
    %245 = arith.addf %243, %244 : vector<16x32xf32>
    %246 = math.tanh %245 : vector<16x32xf32>
    %247 = arith.mulf %242, %246 : vector<16x32xf32>
    %248 = arith.truncf %247 : vector<16x32xf32> to vector<16x32xbf16>
    %249 = arith.index_cast %c6_i32 : i32 to index
    %c0_76 = arith.constant 0 : index
    %c0_77 = arith.constant 0 : index
    %250 = vector.load %arg13[%249, %c0_76, %c0_77] : memref<8x16x128xbf16, #tpu.memory_space<vmem>>, vector<1x16x32xbf16>
    %251 = vector.shape_cast %250 : vector<1x16x32xbf16> to vector<16x32xbf16>
    %252 = vector.shape_cast %248 : vector<16x32xbf16> to vector<1x16x32xbf16>
    tpu.vector_store %arg13[%249, %c0_76, %c0_77], %252 {strides = array<i32>} : memref<8x16x128xbf16, #tpu.memory_space<vmem>>, vector<1x16x32xbf16>,
    %c7_i32 = arith.constant 7 : i32
    %253 = arith.index_cast %c7_i32 : i32 to index
    %c0_78 = arith.constant 0 : index
    %c0_79 = arith.constant 0 : index
    %254 = vector.load %arg12[%253, %c0_78, %c0_79] : memref<8x16x128xbf16, #tpu.memory_space<vmem>>, vector<1x16x128xbf16>
    %255 = vector.shape_cast %254 : vector<1x16x128xbf16> to vector<16x128xbf16>
    %256 = arith.extf %255 : vector<16x128xbf16> to vector<16x128xf32>
    %257 = arith.truncf %247 : vector<16x32xf32> to vector<16x32xbf16>
    %cst_80 = arith.constant dense<0.000000e+00> : vector<16x128xf32>
    %258 = tpu.matmul %257, %27, %cst_80 {dimension_numbers = #tpu.dot_dimension_numbers<[1], [0], [0], [1], [0, 0, 1, 1], [], []>} : vector<16x32xbf16>, vector<32x128xbf16>, vector<16x128xf32> -> vector<16x128xf32>
    %259 = arith.addf %256, %258 : vector<16x128xf32>
    %260 = arith.mulf %259, %12 : vector<16x128xf32>
    %261 = arith.negf %260 : vector<16x128xf32>
    %262 = math.exp %261 : vector<16x128xf32>
    %cst_81 = arith.constant 1.000000e+00 : f32
    %263 = vector.broadcast %cst_81 : f32 to vector<16x128xf32>
    %264 = arith.addf %263, %262 : vector<16x128xf32>
    %265 = arith.divf %263, %264 : vector<16x128xf32>
    %cst_82 = arith.constant 2.000000e+00 : f32
    %266 = vector.broadcast %cst_82 : f32 to vector<16x128xf32>
    %267 = arith.mulf %266, %265 : vector<16x128xf32>
    %cst_83 = arith.constant 1.000000e+00 : f32
    %268 = vector.broadcast %cst_83 : f32 to vector<16x128xf32>
    %269 = arith.subf %267, %268 : vector<16x128xf32>
    %270 = arith.select %9, %269, %265 : vector<16x128xi1>, vector<16x128xf32>
    %271 = vector.extract_strided_slice %270 {offsets = [0, 0], sizes = [16, 32], strides = [1, 1]} : vector<16x128xf32> to vector<16x32xf32>
    %272 = vector.extract_strided_slice %270 {offsets = [0, 32], sizes = [16, 32], strides = [1, 1]} : vector<16x128xf32> to vector<16x32xf32>
    %273 = vector.extract_strided_slice %270 {offsets = [0, 64], sizes = [16, 32], strides = [1, 1]} : vector<16x128xf32> to vector<16x32xf32>
    %274 = vector.extract_strided_slice %270 {offsets = [0, 96], sizes = [16, 32], strides = [1, 1]} : vector<16x128xf32> to vector<16x32xf32>
    %275 = arith.mulf %272, %245 : vector<16x32xf32>
    %276 = arith.mulf %271, %273 : vector<16x32xf32>
    %277 = arith.addf %275, %276 : vector<16x32xf32>
    %278 = math.tanh %277 : vector<16x32xf32>
    %279 = arith.mulf %274, %278 : vector<16x32xf32>
    %280 = arith.truncf %279 : vector<16x32xf32> to vector<16x32xbf16>
    %281 = arith.index_cast %c7_i32 : i32 to index
    %c0_84 = arith.constant 0 : index
    %c0_85 = arith.constant 0 : index
    %282 = vector.load %arg13[%281, %c0_84, %c0_85] : memref<8x16x128xbf16, #tpu.memory_space<vmem>>, vector<1x16x32xbf16>
    %283 = vector.shape_cast %282 : vector<1x16x32xbf16> to vector<16x32xbf16>
    %284 = vector.shape_cast %280 : vector<16x32xbf16> to vector<1x16x32xbf16>
    tpu.vector_store %arg13[%281, %c0_84, %c0_85], %284 {strides = array<i32>} : memref<8x16x128xbf16, #tpu.memory_space<vmem>>, vector<1x16x32xbf16>,
    %c8_i32_86 = arith.constant 8 : i32
    %c0_87 = arith.constant 0 : index
    %c0_88 = arith.constant 0 : index
    %285 = vector.load %arg4[%c0_87, %c0_88] : memref<128x128xbf16, #tpu.memory_space<vmem>>, vector<128x128xbf16>
    %c0_89 = arith.constant 0 : index
    %c0_90 = arith.constant 0 : index
    %286 = vector.load %arg6[%c0_89, %c0_90] : memref<1x128xf32, #tpu.memory_space<vmem>>, vector<1x128xf32>
    %c0_i32_91 = arith.constant 0 : i32
    %c8_i32_92 = arith.constant 8 : i32
    %287 = arith.muli %c0_i32_91, %c8_i32_92 : i32
    %288 = tpu.assume_multiple %287, 8 : i32
    %289 = arith.index_cast %288 : i32 to index
    %c0_93 = arith.constant 0 : index
    %c0_94 = arith.constant 0 : index
    %290 = vector.load %arg13[%289, %c0_93, %c0_94] : memref<8x16x128xbf16, #tpu.memory_space<vmem>>, vector<8x16x128xbf16>
    %291 = vector.shape_cast %290 : vector<8x16x128xbf16> to vector<128x128xbf16>
    %cst_95 = arith.constant dense<0.000000e+00> : vector<128x128xf32>
    %292 = tpu.matmul %291, %285, %cst_95 {dimension_numbers = #tpu.dot_dimension_numbers<[1], [0], [0], [1], [0, 0, 1, 1], [], []>} : vector<128x128xbf16>, vector<128x128xbf16>, vector<128x128xf32> -> vector<128x128xf32>
    %293 = vector.broadcast %286 : vector<1x128xf32> to vector<128x128xf32>
    %294 = arith.addf %292, %293 : vector<128x128xf32>
    %295 = vector.shape_cast %294 : vector<128x128xf32> to vector<8x16x128xf32>
    %296 = arith.truncf %295 : vector<8x16x128xf32> to vector<8x16x128xbf16>
    %297 = arith.index_cast %288 : i32 to index
    %c0_96 = arith.constant 0 : index
    %c0_97 = arith.constant 0 : index
    %298 = vector.load %arg12[%297, %c0_96, %c0_97] : memref<8x16x128xbf16, #tpu.memory_space<vmem>>, vector<8x16x128xbf16>
    tpu.vector_store %arg12[%297, %c0_96, %c0_97], %296 {strides = array<i32>} : memref<8x16x128xbf16, #tpu.memory_space<vmem>>, vector<8x16x128xbf16>,
    %c1_i32_98 = arith.constant 1 : i32
    %c0_99 = arith.constant 0 : index
    %c0_100 = arith.constant 0 : index
    %299 = vector.load %arg5[%c0_99, %c0_100] : memref<32x128xbf16, #tpu.memory_space<vmem>>, vector<32x128xbf16>
    %cst_101 = arith.constant 0.000000e+00 : f32
    %300 = vector.broadcast %cst_101 : f32 to vector<16x32xf32>
    %c0_i32_102 = arith.constant 0 : i32
    %301 = arith.index_cast %c0_i32_102 : i32 to index
    %c0_103 = arith.constant 0 : index
    %c0_104 = arith.constant 0 : index
    %302 = vector.load %arg12[%301, %c0_103, %c0_104] : memref<8x16x128xbf16, #tpu.memory_space<vmem>>, vector<1x16x128xbf16>
    %303 = vector.shape_cast %302 : vector<1x16x128xbf16> to vector<16x128xbf16>
    %304 = arith.extf %303 : vector<16x128xbf16> to vector<16x128xf32>
    %305 = arith.truncf %300 : vector<16x32xf32> to vector<16x32xbf16>
    %cst_105 = arith.constant dense<0.000000e+00> : vector<16x128xf32>
    %306 = tpu.matmul %305, %299, %cst_105 {dimension_numbers = #tpu.dot_dimension_numbers<[1], [0], [0], [1], [0, 0, 1, 1], [], []>} : vector<16x32xbf16>, vector<32x128xbf16>, vector<16x128xf32> -> vector<16x128xf32>
    %307 = arith.addf %304, %306 : vector<16x128xf32>
    %308 = arith.mulf %307, %12 : vector<16x128xf32>
    %309 = arith.negf %308 : vector<16x128xf32>
    %310 = math.exp %309 : vector<16x128xf32>
    %cst_106 = arith.constant 1.000000e+00 : f32
    %311 = vector.broadcast %cst_106 : f32 to vector<16x128xf32>
    %312 = arith.addf %311, %310 : vector<16x128xf32>
    %313 = arith.divf %311, %312 : vector<16x128xf32>
    %cst_107 = arith.constant 2.000000e+00 : f32
    %314 = vector.broadcast %cst_107 : f32 to vector<16x128xf32>
    %315 = arith.mulf %314, %313 : vector<16x128xf32>
    %cst_108 = arith.constant 1.000000e+00 : f32
    %316 = vector.broadcast %cst_108 : f32 to vector<16x128xf32>
    %317 = arith.subf %315, %316 : vector<16x128xf32>
    %318 = arith.select %9, %317, %313 : vector<16x128xi1>, vector<16x128xf32>
    %319 = vector.extract_strided_slice %318 {offsets = [0, 0], sizes = [16, 32], strides = [1, 1]} : vector<16x128xf32> to vector<16x32xf32>
    %320 = vector.extract_strided_slice %318 {offsets = [0, 32], sizes = [16, 32], strides = [1, 1]} : vector<16x128xf32> to vector<16x32xf32>
    %321 = vector.extract_strided_slice %318 {offsets = [0, 64], sizes = [16, 32], strides = [1, 1]} : vector<16x128xf32> to vector<16x32xf32>
    %322 = vector.extract_strided_slice %318 {offsets = [0, 96], sizes = [16, 32], strides = [1, 1]} : vector<16x128xf32> to vector<16x32xf32>
    %323 = arith.mulf %320, %300 : vector<16x32xf32>
    %324 = arith.mulf %319, %321 : vector<16x32xf32>
    %325 = arith.addf %323, %324 : vector<16x32xf32>
    %326 = math.tanh %325 : vector<16x32xf32>
    %327 = arith.mulf %322, %326 : vector<16x32xf32>
    %328 = arith.truncf %327 : vector<16x32xf32> to vector<16x32xbf16>
    %329 = arith.index_cast %c0_i32_102 : i32 to index
    %c0_109 = arith.constant 0 : index
    %c0_110 = arith.constant 0 : index
    %330 = vector.load %arg14[%329, %c0_109, %c0_110] : memref<8x16x128xbf16, #tpu.memory_space<vmem>>, vector<1x16x32xbf16>
    %331 = vector.shape_cast %330 : vector<1x16x32xbf16> to vector<16x32xbf16>
    %332 = vector.shape_cast %328 : vector<16x32xbf16> to vector<1x16x32xbf16>
    tpu.vector_store %arg14[%329, %c0_109, %c0_110], %332 {strides = array<i32>} : memref<8x16x128xbf16, #tpu.memory_space<vmem>>, vector<1x16x32xbf16>,
    %c1_i32_111 = arith.constant 1 : i32
    %333 = arith.index_cast %c1_i32_111 : i32 to index
    %c0_112 = arith.constant 0 : index
    %c0_113 = arith.constant 0 : index
    %334 = vector.load %arg12[%333, %c0_112, %c0_113] : memref<8x16x128xbf16, #tpu.memory_space<vmem>>, vector<1x16x128xbf16>
    %335 = vector.shape_cast %334 : vector<1x16x128xbf16> to vector<16x128xbf16>
    %336 = arith.extf %335 : vector<16x128xbf16> to vector<16x128xf32>
    %337 = arith.truncf %327 : vector<16x32xf32> to vector<16x32xbf16>
    %cst_114 = arith.constant dense<0.000000e+00> : vector<16x128xf32>
    %338 = tpu.matmul %337, %299, %cst_114 {dimension_numbers = #tpu.dot_dimension_numbers<[1], [0], [0], [1], [0, 0, 1, 1], [], []>} : vector<16x32xbf16>, vector<32x128xbf16>, vector<16x128xf32> -> vector<16x128xf32>
    %339 = arith.addf %336, %338 : vector<16x128xf32>
    %340 = arith.mulf %339, %12 : vector<16x128xf32>
    %341 = arith.negf %340 : vector<16x128xf32>
    %342 = math.exp %341 : vector<16x128xf32>
    %cst_115 = arith.constant 1.000000e+00 : f32
    %343 = vector.broadcast %cst_115 : f32 to vector<16x128xf32>
    %344 = arith.addf %343, %342 : vector<16x128xf32>
    %345 = arith.divf %343, %344 : vector<16x128xf32>
    %cst_116 = arith.constant 2.000000e+00 : f32
    %346 = vector.broadcast %cst_116 : f32 to vector<16x128xf32>
    %347 = arith.mulf %346, %345 : vector<16x128xf32>
    %cst_117 = arith.constant 1.000000e+00 : f32
    %348 = vector.broadcast %cst_117 : f32 to vector<16x128xf32>
    %349 = arith.subf %347, %348 : vector<16x128xf32>
    %350 = arith.select %9, %349, %345 : vector<16x128xi1>, vector<16x128xf32>
    %351 = vector.extract_strided_slice %350 {offsets = [0, 0], sizes = [16, 32], strides = [1, 1]} : vector<16x128xf32> to vector<16x32xf32>
    %352 = vector.extract_strided_slice %350 {offsets = [0, 32], sizes = [16, 32], strides = [1, 1]} : vector<16x128xf32> to vector<16x32xf32>
    %353 = vector.extract_strided_slice %350 {offsets = [0, 64], sizes = [16, 32], strides = [1, 1]} : vector<16x128xf32> to vector<16x32xf32>
    %354 = vector.extract_strided_slice %350 {offsets = [0, 96], sizes = [16, 32], strides = [1, 1]} : vector<16x128xf32> to vector<16x32xf32>
    %355 = arith.mulf %352, %325 : vector<16x32xf32>
    %356 = arith.mulf %351, %353 : vector<16x32xf32>
    %357 = arith.addf %355, %356 : vector<16x32xf32>
    %358 = math.tanh %357 : vector<16x32xf32>
    %359 = arith.mulf %354, %358 : vector<16x32xf32>
    %360 = arith.truncf %359 : vector<16x32xf32> to vector<16x32xbf16>
    %361 = arith.index_cast %c1_i32_111 : i32 to index
    %c0_118 = arith.constant 0 : index
    %c0_119 = arith.constant 0 : index
    %362 = vector.load %arg14[%361, %c0_118, %c0_119] : memref<8x16x128xbf16, #tpu.memory_space<vmem>>, vector<1x16x32xbf16>
    %363 = vector.shape_cast %362 : vector<1x16x32xbf16> to vector<16x32xbf16>
    %364 = vector.shape_cast %360 : vector<16x32xbf16> to vector<1x16x32xbf16>
    tpu.vector_store %arg14[%361, %c0_118, %c0_119], %364 {strides = array<i32>} : memref<8x16x128xbf16, #tpu.memory_space<vmem>>, vector<1x16x32xbf16>,
    %c2_i32_120 = arith.constant 2 : i32
    %365 = arith.index_cast %c2_i32_120 : i32 to index
    %c0_121 = arith.constant 0 : index
    %c0_122 = arith.constant 0 : index
    %366 = vector.load %arg12[%365, %c0_121, %c0_122] : memref<8x16x128xbf16, #tpu.memory_space<vmem>>, vector<1x16x128xbf16>
    %367 = vector.shape_cast %366 : vector<1x16x128xbf16> to vector<16x128xbf16>
    %368 = arith.extf %367 : vector<16x128xbf16> to vector<16x128xf32>
    %369 = arith.truncf %359 : vector<16x32xf32> to vector<16x32xbf16>
    %cst_123 = arith.constant dense<0.000000e+00> : vector<16x128xf32>
    %370 = tpu.matmul %369, %299, %cst_123 {dimension_numbers = #tpu.dot_dimension_numbers<[1], [0], [0], [1], [0, 0, 1, 1], [], []>} : vector<16x32xbf16>, vector<32x128xbf16>, vector<16x128xf32> -> vector<16x128xf32>
    %371 = arith.addf %368, %370 : vector<16x128xf32>
    %372 = arith.mulf %371, %12 : vector<16x128xf32>
    %373 = arith.negf %372 : vector<16x128xf32>
    %374 = math.exp %373 : vector<16x128xf32>
    %cst_124 = arith.constant 1.000000e+00 : f32
    %375 = vector.broadcast %cst_124 : f32 to vector<16x128xf32>
    %376 = arith.addf %375, %374 : vector<16x128xf32>
    %377 = arith.divf %375, %376 : vector<16x128xf32>
    %cst_125 = arith.constant 2.000000e+00 : f32
    %378 = vector.broadcast %cst_125 : f32 to vector<16x128xf32>
    %379 = arith.mulf %378, %377 : vector<16x128xf32>
    %cst_126 = arith.constant 1.000000e+00 : f32
    %380 = vector.broadcast %cst_126 : f32 to vector<16x128xf32>
    %381 = arith.subf %379, %380 : vector<16x128xf32>
    %382 = arith.select %9, %381, %377 : vector<16x128xi1>, vector<16x128xf32>
    %383 = vector.extract_strided_slice %382 {offsets = [0, 0], sizes = [16, 32], strides = [1, 1]} : vector<16x128xf32> to vector<16x32xf32>
    %384 = vector.extract_strided_slice %382 {offsets = [0, 32], sizes = [16, 32], strides = [1, 1]} : vector<16x128xf32> to vector<16x32xf32>
    %385 = vector.extract_strided_slice %382 {offsets = [0, 64], sizes = [16, 32], strides = [1, 1]} : vector<16x128xf32> to vector<16x32xf32>
    %386 = vector.extract_strided_slice %382 {offsets = [0, 96], sizes = [16, 32], strides = [1, 1]} : vector<16x128xf32> to vector<16x32xf32>
    %387 = arith.mulf %384, %357 : vector<16x32xf32>
    %388 = arith.mulf %383, %385 : vector<16x32xf32>
    %389 = arith.addf %387, %388 : vector<16x32xf32>
    %390 = math.tanh %389 : vector<16x32xf32>
    %391 = arith.mulf %386, %390 : vector<16x32xf32>
    %392 = arith.truncf %391 : vector<16x32xf32> to vector<16x32xbf16>
    %393 = arith.index_cast %c2_i32_120 : i32 to index
    %c0_127 = arith.constant 0 : index
    %c0_128 = arith.constant 0 : index
    %394 = vector.load %arg14[%393, %c0_127, %c0_128] : memref<8x16x128xbf16, #tpu.memory_space<vmem>>, vector<1x16x32xbf16>
    %395 = vector.shape_cast %394 : vector<1x16x32xbf16> to vector<16x32xbf16>
    %396 = vector.shape_cast %392 : vector<16x32xbf16> to vector<1x16x32xbf16>
    tpu.vector_store %arg14[%393, %c0_127, %c0_128], %396 {strides = array<i32>} : memref<8x16x128xbf16, #tpu.memory_space<vmem>>, vector<1x16x32xbf16>,
    %c3_i32_129 = arith.constant 3 : i32
    %397 = arith.index_cast %c3_i32_129 : i32 to index
    %c0_130 = arith.constant 0 : index
    %c0_131 = arith.constant 0 : index
    %398 = vector.load %arg12[%397, %c0_130, %c0_131] : memref<8x16x128xbf16, #tpu.memory_space<vmem>>, vector<1x16x128xbf16>
    %399 = vector.shape_cast %398 : vector<1x16x128xbf16> to vector<16x128xbf16>
    %400 = arith.extf %399 : vector<16x128xbf16> to vector<16x128xf32>
    %401 = arith.truncf %391 : vector<16x32xf32> to vector<16x32xbf16>
    %cst_132 = arith.constant dense<0.000000e+00> : vector<16x128xf32>
    %402 = tpu.matmul %401, %299, %cst_132 {dimension_numbers = #tpu.dot_dimension_numbers<[1], [0], [0], [1], [0, 0, 1, 1], [], []>} : vector<16x32xbf16>, vector<32x128xbf16>, vector<16x128xf32> -> vector<16x128xf32>
    %403 = arith.addf %400, %402 : vector<16x128xf32>
    %404 = arith.mulf %403, %12 : vector<16x128xf32>
    %405 = arith.negf %404 : vector<16x128xf32>
    %406 = math.exp %405 : vector<16x128xf32>
    %cst_133 = arith.constant 1.000000e+00 : f32
    %407 = vector.broadcast %cst_133 : f32 to vector<16x128xf32>
    %408 = arith.addf %407, %406 : vector<16x128xf32>
    %409 = arith.divf %407, %408 : vector<16x128xf32>
    %cst_134 = arith.constant 2.000000e+00 : f32
    %410 = vector.broadcast %cst_134 : f32 to vector<16x128xf32>
    %411 = arith.mulf %410, %409 : vector<16x128xf32>
    %cst_135 = arith.constant 1.000000e+00 : f32
    %412 = vector.broadcast %cst_135 : f32 to vector<16x128xf32>
    %413 = arith.subf %411, %412 : vector<16x128xf32>
    %414 = arith.select %9, %413, %409 : vector<16x128xi1>, vector<16x128xf32>
    %415 = vector.extract_strided_slice %414 {offsets = [0, 0], sizes = [16, 32], strides = [1, 1]} : vector<16x128xf32> to vector<16x32xf32>
    %416 = vector.extract_strided_slice %414 {offsets = [0, 32], sizes = [16, 32], strides = [1, 1]} : vector<16x128xf32> to vector<16x32xf32>
    %417 = vector.extract_strided_slice %414 {offsets = [0, 64], sizes = [16, 32], strides = [1, 1]} : vector<16x128xf32> to vector<16x32xf32>
    %418 = vector.extract_strided_slice %414 {offsets = [0, 96], sizes = [16, 32], strides = [1, 1]} : vector<16x128xf32> to vector<16x32xf32>
    %419 = arith.mulf %416, %389 : vector<16x32xf32>
    %420 = arith.mulf %415, %417 : vector<16x32xf32>
    %421 = arith.addf %419, %420 : vector<16x32xf32>
    %422 = math.tanh %421 : vector<16x32xf32>
    %423 = arith.mulf %418, %422 : vector<16x32xf32>
    %424 = arith.truncf %423 : vector<16x32xf32> to vector<16x32xbf16>
    %425 = arith.index_cast %c3_i32_129 : i32 to index
    %c0_136 = arith.constant 0 : index
    %c0_137 = arith.constant 0 : index
    %426 = vector.load %arg14[%425, %c0_136, %c0_137] : memref<8x16x128xbf16, #tpu.memory_space<vmem>>, vector<1x16x32xbf16>
    %427 = vector.shape_cast %426 : vector<1x16x32xbf16> to vector<16x32xbf16>
    %428 = vector.shape_cast %424 : vector<16x32xbf16> to vector<1x16x32xbf16>
    tpu.vector_store %arg14[%425, %c0_136, %c0_137], %428 {strides = array<i32>} : memref<8x16x128xbf16, #tpu.memory_space<vmem>>, vector<1x16x32xbf16>,
    %c4_i32_138 = arith.constant 4 : i32
    %429 = arith.index_cast %c4_i32_138 : i32 to index
    %c0_139 = arith.constant 0 : index
    %c0_140 = arith.constant 0 : index
    %430 = vector.load %arg12[%429, %c0_139, %c0_140] : memref<8x16x128xbf16, #tpu.memory_space<vmem>>, vector<1x16x128xbf16>
    %431 = vector.shape_cast %430 : vector<1x16x128xbf16> to vector<16x128xbf16>
    %432 = arith.extf %431 : vector<16x128xbf16> to vector<16x128xf32>
    %433 = arith.truncf %423 : vector<16x32xf32> to vector<16x32xbf16>
    %cst_141 = arith.constant dense<0.000000e+00> : vector<16x128xf32>
    %434 = tpu.matmul %433, %299, %cst_141 {dimension_numbers = #tpu.dot_dimension_numbers<[1], [0], [0], [1], [0, 0, 1, 1], [], []>} : vector<16x32xbf16>, vector<32x128xbf16>, vector<16x128xf32> -> vector<16x128xf32>
    %435 = arith.addf %432, %434 : vector<16x128xf32>
    %436 = arith.mulf %435, %12 : vector<16x128xf32>
    %437 = arith.negf %436 : vector<16x128xf32>
    %438 = math.exp %437 : vector<16x128xf32>
    %cst_142 = arith.constant 1.000000e+00 : f32
    %439 = vector.broadcast %cst_142 : f32 to vector<16x128xf32>
    %440 = arith.addf %439, %438 : vector<16x128xf32>
    %441 = arith.divf %439, %440 : vector<16x128xf32>
    %cst_143 = arith.constant 2.000000e+00 : f32
    %442 = vector.broadcast %cst_143 : f32 to vector<16x128xf32>
    %443 = arith.mulf %442, %441 : vector<16x128xf32>
    %cst_144 = arith.constant 1.000000e+00 : f32
    %444 = vector.broadcast %cst_144 : f32 to vector<16x128xf32>
    %445 = arith.subf %443, %444 : vector<16x128xf32>
    %446 = arith.select %9, %445, %441 : vector<16x128xi1>, vector<16x128xf32>
    %447 = vector.extract_strided_slice %446 {offsets = [0, 0], sizes = [16, 32], strides = [1, 1]} : vector<16x128xf32> to vector<16x32xf32>
    %448 = vector.extract_strided_slice %446 {offsets = [0, 32], sizes = [16, 32], strides = [1, 1]} : vector<16x128xf32> to vector<16x32xf32>
    %449 = vector.extract_strided_slice %446 {offsets = [0, 64], sizes = [16, 32], strides = [1, 1]} : vector<16x128xf32> to vector<16x32xf32>
    %450 = vector.extract_strided_slice %446 {offsets = [0, 96], sizes = [16, 32], strides = [1, 1]} : vector<16x128xf32> to vector<16x32xf32>
    %451 = arith.mulf %448, %421 : vector<16x32xf32>
    %452 = arith.mulf %447, %449 : vector<16x32xf32>
    %453 = arith.addf %451, %452 : vector<16x32xf32>
    %454 = math.tanh %453 : vector<16x32xf32>
    %455 = arith.mulf %450, %454 : vector<16x32xf32>
    %456 = arith.truncf %455 : vector<16x32xf32> to vector<16x32xbf16>
    %457 = arith.index_cast %c4_i32_138 : i32 to index
    %c0_145 = arith.constant 0 : index
    %c0_146 = arith.constant 0 : index
    %458 = vector.load %arg14[%457, %c0_145, %c0_146] : memref<8x16x128xbf16, #tpu.memory_space<vmem>>, vector<1x16x32xbf16>
    %459 = vector.shape_cast %458 : vector<1x16x32xbf16> to vector<16x32xbf16>
    %460 = vector.shape_cast %456 : vector<16x32xbf16> to vector<1x16x32xbf16>
    tpu.vector_store %arg14[%457, %c0_145, %c0_146], %460 {strides = array<i32>} : memref<8x16x128xbf16, #tpu.memory_space<vmem>>, vector<1x16x32xbf16>,
    %c5_i32_147 = arith.constant 5 : i32
    %461 = arith.index_cast %c5_i32_147 : i32 to index
    %c0_148 = arith.constant 0 : index
    %c0_149 = arith.constant 0 : index
    %462 = vector.load %arg12[%461, %c0_148, %c0_149] : memref<8x16x128xbf16, #tpu.memory_space<vmem>>, vector<1x16x128xbf16>
    %463 = vector.shape_cast %462 : vector<1x16x128xbf16> to vector<16x128xbf16>
    %464 = arith.extf %463 : vector<16x128xbf16> to vector<16x128xf32>
    %465 = arith.truncf %455 : vector<16x32xf32> to vector<16x32xbf16>
    %cst_150 = arith.constant dense<0.000000e+00> : vector<16x128xf32>
    %466 = tpu.matmul %465, %299, %cst_150 {dimension_numbers = #tpu.dot_dimension_numbers<[1], [0], [0], [1], [0, 0, 1, 1], [], []>} : vector<16x32xbf16>, vector<32x128xbf16>, vector<16x128xf32> -> vector<16x128xf32>
    %467 = arith.addf %464, %466 : vector<16x128xf32>
    %468 = arith.mulf %467, %12 : vector<16x128xf32>
    %469 = arith.negf %468 : vector<16x128xf32>
    %470 = math.exp %469 : vector<16x128xf32>
    %cst_151 = arith.constant 1.000000e+00 : f32
    %471 = vector.broadcast %cst_151 : f32 to vector<16x128xf32>
    %472 = arith.addf %471, %470 : vector<16x128xf32>
    %473 = arith.divf %471, %472 : vector<16x128xf32>
    %cst_152 = arith.constant 2.000000e+00 : f32
    %474 = vector.broadcast %cst_152 : f32 to vector<16x128xf32>
    %475 = arith.mulf %474, %473 : vector<16x128xf32>
    %cst_153 = arith.constant 1.000000e+00 : f32
    %476 = vector.broadcast %cst_153 : f32 to vector<16x128xf32>
    %477 = arith.subf %475, %476 : vector<16x128xf32>
    %478 = arith.select %9, %477, %473 : vector<16x128xi1>, vector<16x128xf32>
    %479 = vector.extract_strided_slice %478 {offsets = [0, 0], sizes = [16, 32], strides = [1, 1]} : vector<16x128xf32> to vector<16x32xf32>
    %480 = vector.extract_strided_slice %478 {offsets = [0, 32], sizes = [16, 32], strides = [1, 1]} : vector<16x128xf32> to vector<16x32xf32>
    %481 = vector.extract_strided_slice %478 {offsets = [0, 64], sizes = [16, 32], strides = [1, 1]} : vector<16x128xf32> to vector<16x32xf32>
    %482 = vector.extract_strided_slice %478 {offsets = [0, 96], sizes = [16, 32], strides = [1, 1]} : vector<16x128xf32> to vector<16x32xf32>
    %483 = arith.mulf %480, %453 : vector<16x32xf32>
    %484 = arith.mulf %479, %481 : vector<16x32xf32>
    %485 = arith.addf %483, %484 : vector<16x32xf32>
    %486 = math.tanh %485 : vector<16x32xf32>
    %487 = arith.mulf %482, %486 : vector<16x32xf32>
    %488 = arith.truncf %487 : vector<16x32xf32> to vector<16x32xbf16>
    %489 = arith.index_cast %c5_i32_147 : i32 to index
    %c0_154 = arith.constant 0 : index
    %c0_155 = arith.constant 0 : index
    %490 = vector.load %arg14[%489, %c0_154, %c0_155] : memref<8x16x128xbf16, #tpu.memory_space<vmem>>, vector<1x16x32xbf16>
    %491 = vector.shape_cast %490 : vector<1x16x32xbf16> to vector<16x32xbf16>
    %492 = vector.shape_cast %488 : vector<16x32xbf16> to vector<1x16x32xbf16>
    tpu.vector_store %arg14[%489, %c0_154, %c0_155], %492 {strides = array<i32>} : memref<8x16x128xbf16, #tpu.memory_space<vmem>>, vector<1x16x32xbf16>,
    %c6_i32_156 = arith.constant 6 : i32
    %493 = arith.index_cast %c6_i32_156 : i32 to index
    %c0_157 = arith.constant 0 : index
    %c0_158 = arith.constant 0 : index
    %494 = vector.load %arg12[%493, %c0_157, %c0_158] : memref<8x16x128xbf16, #tpu.memory_space<vmem>>, vector<1x16x128xbf16>
    %495 = vector.shape_cast %494 : vector<1x16x128xbf16> to vector<16x128xbf16>
    %496 = arith.extf %495 : vector<16x128xbf16> to vector<16x128xf32>
    %497 = arith.truncf %487 : vector<16x32xf32> to vector<16x32xbf16>
    %cst_159 = arith.constant dense<0.000000e+00> : vector<16x128xf32>
    %498 = tpu.matmul %497, %299, %cst_159 {dimension_numbers = #tpu.dot_dimension_numbers<[1], [0], [0], [1], [0, 0, 1, 1], [], []>} : vector<16x32xbf16>, vector<32x128xbf16>, vector<16x128xf32> -> vector<16x128xf32>
    %499 = arith.addf %496, %498 : vector<16x128xf32>
    %500 = arith.mulf %499, %12 : vector<16x128xf32>
    %501 = arith.negf %500 : vector<16x128xf32>
    %502 = math.exp %501 : vector<16x128xf32>
    %cst_160 = arith.constant 1.000000e+00 : f32
    %503 = vector.broadcast %cst_160 : f32 to vector<16x128xf32>
    %504 = arith.addf %503, %502 : vector<16x128xf32>
    %505 = arith.divf %503, %504 : vector<16x128xf32>
    %cst_161 = arith.constant 2.000000e+00 : f32
    %506 = vector.broadcast %cst_161 : f32 to vector<16x128xf32>
    %507 = arith.mulf %506, %505 : vector<16x128xf32>
    %cst_162 = arith.constant 1.000000e+00 : f32
    %508 = vector.broadcast %cst_162 : f32 to vector<16x128xf32>
    %509 = arith.subf %507, %508 : vector<16x128xf32>
    %510 = arith.select %9, %509, %505 : vector<16x128xi1>, vector<16x128xf32>
    %511 = vector.extract_strided_slice %510 {offsets = [0, 0], sizes = [16, 32], strides = [1, 1]} : vector<16x128xf32> to vector<16x32xf32>
    %512 = vector.extract_strided_slice %510 {offsets = [0, 32], sizes = [16, 32], strides = [1, 1]} : vector<16x128xf32> to vector<16x32xf32>
    %513 = vector.extract_strided_slice %510 {offsets = [0, 64], sizes = [16, 32], strides = [1, 1]} : vector<16x128xf32> to vector<16x32xf32>
    %514 = vector.extract_strided_slice %510 {offsets = [0, 96], sizes = [16, 32], strides = [1, 1]} : vector<16x128xf32> to vector<16x32xf32>
    %515 = arith.mulf %512, %485 : vector<16x32xf32>
    %516 = arith.mulf %511, %513 : vector<16x32xf32>
    %517 = arith.addf %515, %516 : vector<16x32xf32>
    %518 = math.tanh %517 : vector<16x32xf32>
    %519 = arith.mulf %514, %518 : vector<16x32xf32>
    %520 = arith.truncf %519 : vector<16x32xf32> to vector<16x32xbf16>
    %521 = arith.index_cast %c6_i32_156 : i32 to index
    %c0_163 = arith.constant 0 : index
    %c0_164 = arith.constant 0 : index
    %522 = vector.load %arg14[%521, %c0_163, %c0_164] : memref<8x16x128xbf16, #tpu.memory_space<vmem>>, vector<1x16x32xbf16>
    %523 = vector.shape_cast %522 : vector<1x16x32xbf16> to vector<16x32xbf16>
    %524 = vector.shape_cast %520 : vector<16x32xbf16> to vector<1x16x32xbf16>
    tpu.vector_store %arg14[%521, %c0_163, %c0_164], %524 {strides = array<i32>} : memref<8x16x128xbf16, #tpu.memory_space<vmem>>, vector<1x16x32xbf16>,
    %c7_i32_165 = arith.constant 7 : i32
    %525 = arith.index_cast %c7_i32_165 : i32 to index
    %c0_166 = arith.constant 0 : index
    %c0_167 = arith.constant 0 : index
    %526 = vector.load %arg12[%525, %c0_166, %c0_167] : memref<8x16x128xbf16, #tpu.memory_space<vmem>>, vector<1x16x128xbf16>
    %527 = vector.shape_cast %526 : vector<1x16x128xbf16> to vector<16x128xbf16>
    %528 = arith.extf %527 : vector<16x128xbf16> to vector<16x128xf32>
    %529 = arith.truncf %519 : vector<16x32xf32> to vector<16x32xbf16>
    %cst_168 = arith.constant dense<0.000000e+00> : vector<16x128xf32>
    %530 = tpu.matmul %529, %299, %cst_168 {dimension_numbers = #tpu.dot_dimension_numbers<[1], [0], [0], [1], [0, 0, 1, 1], [], []>} : vector<16x32xbf16>, vector<32x128xbf16>, vector<16x128xf32> -> vector<16x128xf32>
    %531 = arith.addf %528, %530 : vector<16x128xf32>
    %532 = arith.mulf %531, %12 : vector<16x128xf32>
    %533 = arith.negf %532 : vector<16x128xf32>
    %534 = math.exp %533 : vector<16x128xf32>
    %cst_169 = arith.constant 1.000000e+00 : f32
    %535 = vector.broadcast %cst_169 : f32 to vector<16x128xf32>
    %536 = arith.addf %535, %534 : vector<16x128xf32>
    %537 = arith.divf %535, %536 : vector<16x128xf32>
    %cst_170 = arith.constant 2.000000e+00 : f32
    %538 = vector.broadcast %cst_170 : f32 to vector<16x128xf32>
    %539 = arith.mulf %538, %537 : vector<16x128xf32>
    %cst_171 = arith.constant 1.000000e+00 : f32
    %540 = vector.broadcast %cst_171 : f32 to vector<16x128xf32>
    %541 = arith.subf %539, %540 : vector<16x128xf32>
    %542 = arith.select %9, %541, %537 : vector<16x128xi1>, vector<16x128xf32>
    %543 = vector.extract_strided_slice %542 {offsets = [0, 0], sizes = [16, 32], strides = [1, 1]} : vector<16x128xf32> to vector<16x32xf32>
    %544 = vector.extract_strided_slice %542 {offsets = [0, 32], sizes = [16, 32], strides = [1, 1]} : vector<16x128xf32> to vector<16x32xf32>
    %545 = vector.extract_strided_slice %542 {offsets = [0, 64], sizes = [16, 32], strides = [1, 1]} : vector<16x128xf32> to vector<16x32xf32>
    %546 = vector.extract_strided_slice %542 {offsets = [0, 96], sizes = [16, 32], strides = [1, 1]} : vector<16x128xf32> to vector<16x32xf32>
    %547 = arith.mulf %544, %517 : vector<16x32xf32>
    %548 = arith.mulf %543, %545 : vector<16x32xf32>
    %549 = arith.addf %547, %548 : vector<16x32xf32>
    %550 = math.tanh %549 : vector<16x32xf32>
    %551 = arith.mulf %546, %550 : vector<16x32xf32>
    %552 = arith.truncf %551 : vector<16x32xf32> to vector<16x32xbf16>
    %553 = arith.index_cast %c7_i32_165 : i32 to index
    %c0_172 = arith.constant 0 : index
    %c0_173 = arith.constant 0 : index
    %554 = vector.load %arg14[%553, %c0_172, %c0_173] : memref<8x16x128xbf16, #tpu.memory_space<vmem>>, vector<1x16x32xbf16>
    %555 = vector.shape_cast %554 : vector<1x16x32xbf16> to vector<16x32xbf16>
    %556 = vector.shape_cast %552 : vector<16x32xbf16> to vector<1x16x32xbf16>
    tpu.vector_store %arg14[%553, %c0_172, %c0_173], %556 {strides = array<i32>} : memref<8x16x128xbf16, #tpu.memory_space<vmem>>, vector<1x16x32xbf16>,
    %c8_i32_174 = arith.constant 8 : i32
    %c0_175 = arith.constant 0 : index
    %c0_176 = arith.constant 0 : index
    %557 = vector.load %arg7[%c0_175, %c0_176] : memref<128x128xbf16, #tpu.memory_space<vmem>>, vector<128x128xbf16>
    %c0_177 = arith.constant 0 : index
    %c0_178 = arith.constant 0 : index
    %558 = vector.load %arg8[%c0_177, %c0_178] : memref<1x128xf32, #tpu.memory_space<vmem>>, vector<1x128xf32>
    %c0_179 = arith.constant 0 : index
    %c0_180 = arith.constant 0 : index
    %559 = vector.load %arg9[%c0_179, %c0_180] : memref<128x128xbf16, #tpu.memory_space<vmem>>, vector<128x128xbf16>
    %c0_181 = arith.constant 0 : index
    %c0_182 = arith.constant 0 : index
    %560 = vector.load %arg10[%c0_181, %c0_182] : memref<1x128xf32, #tpu.memory_space<vmem>>, vector<1x128xf32>
    %c0_i32_183 = arith.constant 0 : i32
    %c8_i32_184 = arith.constant 8 : i32
    %561 = arith.muli %c0_i32_183, %c8_i32_184 : i32
    %562 = tpu.assume_multiple %561, 8 : i32
    %563 = arith.index_cast %562 : i32 to index
    %c0_185 = arith.constant 0 : index
    %c0_186 = arith.constant 0 : index
    %564 = vector.load %arg14[%563, %c0_185, %c0_186] : memref<8x16x128xbf16, #tpu.memory_space<vmem>>, vector<8x16x128xbf16>
    %565 = vector.shape_cast %564 : vector<8x16x128xbf16> to vector<128x128xbf16>
    %cst_187 = arith.constant 0.000000e+00 : bf16
    %566 = vector.broadcast %cst_187 : bf16 to vector<128x128xbf16>
    %567 = arith.maximumf %565, %566 : vector<128x128xbf16>
    %cst_188 = arith.constant dense<0.000000e+00> : vector<128x128xf32>
    %568 = tpu.matmul %567, %557, %cst_188 {dimension_numbers = #tpu.dot_dimension_numbers<[1], [0], [0], [1], [0, 0, 1, 1], [], []>} : vector<128x128xbf16>, vector<128x128xbf16>, vector<128x128xf32> -> vector<128x128xf32>
    %569 = vector.broadcast %558 : vector<1x128xf32> to vector<128x128xf32>
    %570 = arith.addf %568, %569 : vector<128x128xf32>
    %cst_189 = arith.constant 0.000000e+00 : f32
    %571 = vector.broadcast %cst_189 : f32 to vector<128x128xf32>
    %572 = arith.maximumf %570, %571 : vector<128x128xf32>
    %573 = arith.truncf %572 : vector<128x128xf32> to vector<128x128xbf16>
    %cst_190 = arith.constant dense<0.000000e+00> : vector<128x128xf32>
    %574 = tpu.matmul %573, %559, %cst_190 {dimension_numbers = #tpu.dot_dimension_numbers<[1], [0], [0], [1], [0, 0, 1, 1], [], []>} : vector<128x128xbf16>, vector<128x128xbf16>, vector<128x128xf32> -> vector<128x128xf32>
    %575 = vector.broadcast %560 : vector<1x128xf32> to vector<128x128xf32>
    %576 = arith.addf %574, %575 : vector<128x128xf32>
    %c128_i32 = arith.constant 128 : i32
    %577 = arith.muli %c0_i32_183, %c128_i32 : i32
    %578 = tpu.assume_multiple %577, 128 : i32
    %579 = arith.index_cast %578 : i32 to index
    %c0_191 = arith.constant 0 : index
    %580 = vector.load %arg11[%579, %c0_191] : memref<128x128xf32, #tpu.memory_space<vmem>>, vector<128x128xf32>
    tpu.vector_store %arg11[%579, %c0_191], %576 {strides = array<i32>} : memref<128x128xf32, #tpu.memory_space<vmem>>, vector<128x128xf32>,
    %c1_i32_192 = arith.constant 1 : i32
    return
  }
}

</mosaic_0001>

<llo_original>
// kernel: lstm_imf_lite_forward.1
$region0: #{lstm_imf_lite_forward.1}
  #allocation0 [shape = 'u32[]', space=smem, size = 0x4, offset = 0x4, fixed_abs, tag = 'smem constant byte address 0x4 - core index']
  #allocation1 [shape = 'u32[72,128]{1,0:T(1,128)}', space=vmem, size = 0x9000, scoped, tag = 'internal scratch']
  #allocation2 [shape = 'bf16[8,16,128]{2,1,0:T(8,128)(2,1)}', space=vmem, size = 0x8000, scoped, tag = 'scratch operand']
  #allocation3 [shape = 'bf16[8,16,128]{2,1,0:T(8,128)(2,1)}', space=vmem, size = 0x8000, scoped, tag = 'scratch operand']
  #allocation4 [shape = 'bf16[8,16,128]{2,1,0:T(8,128)(2,1)}', space=vmem, size = 0x8000, scoped, tag = 'scratch operand']
  %s0 = inlined_call_operand.vmem [shape: bf16[8,16,128], index: 0, kind: input, shape index: {}]
  %s1 = inlined_call_operand.vmem [shape: bf16[128,128], index: 1, kind: input, shape index: {}]
  %s2 = inlined_call_operand.vmem [shape: bf16[32,128], index: 2, kind: input, shape index: {}]
  %s3 = inlined_call_operand.vmem [shape: f32[1,128], index: 3, kind: input, shape index: {}]
  %s4 = inlined_call_operand.vmem [shape: bf16[128,128], index: 4, kind: input, shape index: {}]
  %s5 = inlined_call_operand.vmem [shape: bf16[32,128], index: 5, kind: input, shape index: {}]
  %s6 = inlined_call_operand.vmem [shape: f32[1,128], index: 6, kind: input, shape index: {}]
  %s7 = inlined_call_operand.vmem [shape: bf16[128,128], index: 7, kind: input, shape index: {}]
  %s8 = inlined_call_operand.vmem [shape: f32[1,128], index: 8, kind: input, shape index: {}]
  %s9 = inlined_call_operand.vmem [shape: bf16[128,128], index: 9, kind: input, shape index: {}]
  %s10 = inlined_call_operand.vmem [shape: f32[1,128], index: 10, kind: input, shape index: {}]
  %s11 = inlined_call_operand.vmem [shape: f32[128,128], index: 11, kind: output, shape index: {}]
  %s12 = sld [smem:[#allocation0]]
  $region54: #{lstm_imf_lite_forward.1} parent=0
    _
  %s14 = ssub.s32 1, %s12
  %s15 = scalar_select 0, %s14, %s12
  // Predicated region
  $region2: #{lstm_imf_lite_forward.1} parent=0 // pred_check
    _
  $region3: #{lstm_imf_lite_forward.1} parent=0 // pred_check_branch
    %17 = sbr.rel (0) target = $region5
  $region4: #{lstm_imf_lite_forward.1} parent=0 // pred_region
    _
  $region5: #{lstm_imf_lite_forward.1} parent=0 // pred_fallthru
    _
  // Predicated region
  $region6: #{lstm_imf_lite_forward.1} parent=0 // pred_check
    _
  $region7: #{lstm_imf_lite_forward.1} parent=0 // pred_check_branch
    %19 = sbr.rel (0) target = $region9
  $region8: #{lstm_imf_lite_forward.1} parent=0 // pred_region
    _
  $region9: #{lstm_imf_lite_forward.1} parent=0 // pred_fallthru
    _
  // Predicated region
  $region10: #{lstm_imf_lite_forward.1} parent=0 // pred_check
    _
  $region11: #{lstm_imf_lite_forward.1} parent=0 // pred_check_branch
    %21 = sbr.rel (0) target = $region13
  $region12: #{lstm_imf_lite_forward.1} parent=0 // pred_region
    _
  $region13: #{lstm_imf_lite_forward.1} parent=0 // pred_fallthru
    _
  // Predicated region
  $region14: #{lstm_imf_lite_forward.1} parent=0 // pred_check
    _
  $region15: #{lstm_imf_lite_forward.1} parent=0 // pred_check_branch
    %23 = sbr.rel (0) target = $region17
  $region16: #{lstm_imf_lite_forward.1} parent=0 // pred_region
    _
  $region17: #{lstm_imf_lite_forward.1} parent=0 // pred_fallthru
    _
  // Predicated region
  $region18: #{lstm_imf_lite_forward.1} parent=0 // pred_check
    _
  $region19: #{lstm_imf_lite_forward.1} parent=0 // pred_check_branch
    %25 = sbr.rel (0) target = $region21
  $region20: #{lstm_imf_lite_forward.1} parent=0 // pred_region
    _
  $region21: #{lstm_imf_lite_forward.1} parent=0 // pred_fallthru
    _
  // Predicated region
  $region22: #{lstm_imf_lite_forward.1} parent=0 // pred_check
    _
  $region23: #{lstm_imf_lite_forward.1} parent=0 // pred_check_branch
    %27 = sbr.rel (0) target = $region25
  $region24: #{lstm_imf_lite_forward.1} parent=0 // pred_region
    _
  $region25: #{lstm_imf_lite_forward.1} parent=0 // pred_fallthru
    _
  // Predicated region
  $region26: #{lstm_imf_lite_forward.1} parent=0 // pred_check
    _
  $region27: #{lstm_imf_lite_forward.1} parent=0 // pred_check_branch
    %29 = sbr.rel (0) target = $region29
  $region28: #{lstm_imf_lite_forward.1} parent=0 // pred_region
    _
  $region29: #{lstm_imf_lite_forward.1} parent=0 // pred_fallthru
    _
  // Predicated region
  $region30: #{lstm_imf_lite_forward.1} parent=0 // pred_check
    _
  $region31: #{lstm_imf_lite_forward.1} parent=0 // pred_check_branch
    %31 = sbr.rel (0) target = $region33
  $region32: #{lstm_imf_lite_forward.1} parent=0 // pred_region
    _
  $region33: #{lstm_imf_lite_forward.1} parent=0 // pred_fallthru
    _
  // Predicated region
  $region34: #{lstm_imf_lite_forward.1} parent=0 // pred_check
    _
  $region35: #{lstm_imf_lite_forward.1} parent=0 // pred_check_branch
    %33 = sbr.rel (0) target = $region37
  $region36: #{lstm_imf_lite_forward.1} parent=0 // pred_region
    _
  $region37: #{lstm_imf_lite_forward.1} parent=0 // pred_fallthru
    _
  // Predicated region
  $region38: #{lstm_imf_lite_forward.1} parent=0 // pred_check
    _
  $region39: #{lstm_imf_lite_forward.1} parent=0 // pred_check_branch
    %35 = sbr.rel (0) target = $region41
  $region40: #{lstm_imf_lite_forward.1} parent=0 // pred_region
    _
  $region41: #{lstm_imf_lite_forward.1} parent=0 // pred_fallthru
    _
  // Predicated region
  $region42: #{lstm_imf_lite_forward.1} parent=0 // pred_check
    _
  $region43: #{lstm_imf_lite_forward.1} parent=0 // pred_check_branch
    %37 = sbr.rel (0) target = $region45
  $region44: #{lstm_imf_lite_forward.1} parent=0 // pred_region
    _
  $region45: #{lstm_imf_lite_forward.1} parent=0 // pred_fallthru
    _
  %39 = vst [vmem:[#allocation3] sm:$0xf] 0
  %40 = vst [vmem:[#allocation3 + $0x4] sm:$0xf] 0
  %41 = vst [vmem:[#allocation3 + $0x8] sm:$0xf] 0
  %42 = vst [vmem:[#allocation3 + $0xc] sm:$0xf] 0
  %43 = vst [vmem:[#allocation3 + $0x10] sm:$0xf] 0
  %44 = vst [vmem:[#allocation3 + $0x14] sm:$0xf] 0
  %45 = vst [vmem:[#allocation3 + $0x18] sm:$0xf] 0
  %46 = vst [vmem:[#allocation3 + $0x1c] sm:$0xf] 0
  %47 = vst [vmem:[#allocation3 + $0x20] sm:$0xf] 0
  %48 = vst [vmem:[#allocation3 + $0x24] sm:$0xf] 0
  %49 = vst [vmem:[#allocation3 + $0x28] sm:$0xf] 0
  %50 = vst [vmem:[#allocation3 + $0x2c] sm:$0xf] 0
  %51 = vst [vmem:[#allocation3 + $0x30] sm:$0xf] 0
  %52 = vst [vmem:[#allocation3 + $0x34] sm:$0xf] 0
  %53 = vst [vmem:[#allocation3 + $0x38] sm:$0xf] 0
  %54 = vst [vmem:[#allocation3 + $0x3c] sm:$0xf] 0
  %55 = vst [vmem:[#allocation4] sm:$0xf] 0
  %56 = vst [vmem:[#allocation4 + $0x4] sm:$0xf] 0
  %57 = vst [vmem:[#allocation4 + $0x8] sm:$0xf] 0
  %58 = vst [vmem:[#allocation4 + $0xc] sm:$0xf] 0
  %59 = vst [vmem:[#allocation4 + $0x10] sm:$0xf] 0
  %60 = vst [vmem:[#allocation4 + $0x14] sm:$0xf] 0
  %61 = vst [vmem:[#allocation4 + $0x18] sm:$0xf] 0
  %62 = vst [vmem:[#allocation4 + $0x1c] sm:$0xf] 0
  %63 = vst [vmem:[#allocation4 + $0x20] sm:$0xf] 0
  %64 = vst [vmem:[#allocation4 + $0x24] sm:$0xf] 0
  %65 = vst [vmem:[#allocation4 + $0x28] sm:$0xf] 0
  %66 = vst [vmem:[#allocation4 + $0x2c] sm:$0xf] 0
  %67 = vst [vmem:[#allocation4 + $0x30] sm:$0xf] 0
  %68 = vst [vmem:[#allocation4 + $0x34] sm:$0xf] 0
  %69 = vst [vmem:[#allocation4 + $0x38] sm:$0xf] 0
  %70 = vst [vmem:[#allocation4 + $0x3c] sm:$0xf] 0
  %v71 = vlaneseq
  %v72 = vand.u32 %v71, 127
  %vm73 = vcmp.ge.s32.totalorder %v72, 64
  %vm74 = vcmp.lt.s32.totalorder %v72, 96
  %vm75 = vmand %vm73, %vm74
  %v76 = vsel %vm75, 2.0, 1.0
  %v77 = vld [vmem:[%s1] sm:$0xf]
  %v78 = vld [vmem:[%s1 + $0x4] sm:$0xf]
  %v79 = vld [vmem:[%s1 + $0x8] sm:$0xf]
  %v80 = vld [vmem:[%s1 + $0xc] sm:$0xf]
  %v81 = vld [vmem:[%s1 + $0x10] sm:$0xf]
  %v82 = vld [vmem:[%s1 + $0x14] sm:$0xf]
  %v83 = vld [vmem:[%s1 + $0x18] sm:$0xf]
  %v84 = vld [vmem:[%s1 + $0x1c] sm:$0xf]
  %v85 = vld [vmem:[%s1 + $0x20] sm:$0xf]
  %v86 = vld [vmem:[%s1 + $0x24] sm:$0xf]
  %v87 = vld [vmem:[%s1 + $0x28] sm:$0xf]
  %v88 = vld [vmem:[%s1 + $0x2c] sm:$0xf]
  %v89 = vld [vmem:[%s1 + $0x30] sm:$0xf]
  %v90 = vld [vmem:[%s1 + $0x34] sm:$0xf]
  %v91 = vld [vmem:[%s1 + $0x38] sm:$0xf]
  %v92 = vld [vmem:[%s1 + $0x3c] sm:$0xf]
  %v93 = vld [vmem:[%s3] sm:$0x1]
  %s94 = smul.u32 0, 2
  %s95 = smul.addr %s94, 4
  %s96 = scalar_lea.vmem %s0, %s95
  %v97 = vld [vmem:[%s96] sm:$0xf]
  %v98 = vld [vmem:[%s96 + $0x4] sm:$0xf]
  %v99 = vld [vmem:[%s96 + $0x8] sm:$0xf]
  %v100 = vld [vmem:[%s96 + $0xc] sm:$0xf]
  %v101 = vld [vmem:[%s96 + $0x10] sm:$0xf]
  %v102 = vld [vmem:[%s96 + $0x14] sm:$0xf]
  %v103 = vld [vmem:[%s96 + $0x18] sm:$0xf]
  %v104 = vld [vmem:[%s96 + $0x1c] sm:$0xf]
  %v105 = vld [vmem:[%s96 + $0x20] sm:$0xf]
  %v106 = vld [vmem:[%s96 + $0x24] sm:$0xf]
  %v107 = vld [vmem:[%s96 + $0x28] sm:$0xf]
  %v108 = vld [vmem:[%s96 + $0x2c] sm:$0xf]
  %v109 = vld [vmem:[%s96 + $0x30] sm:$0xf]
  %v110 = vld [vmem:[%s96 + $0x34] sm:$0xf]
  %v111 = vld [vmem:[%s96 + $0x38] sm:$0xf]
  %v112 = vld [vmem:[%s96 + $0x3c] sm:$0xf]
  %v114 = vperm.slane %v93, 0
  %v132 = vunpack.c.l.b16 %v97
  %v133 = vunpack.c.l.b16 %v98
  %v134 = vunpack.c.l.b16 %v99
  %v135 = vunpack.c.l.b16 %v100
  %v136 = vunpack.c.l.b16 %v101
  %v137 = vunpack.c.l.b16 %v102
  %v138 = vunpack.c.l.b16 %v103
  %v139 = vunpack.c.l.b16 %v104
  %v140 = vunpack.c.l.b16 %v105
  %v141 = vunpack.c.l.b16 %v106
  %v142 = vunpack.c.l.b16 %v107
  %v143 = vunpack.c.l.b16 %v108
  %v144 = vunpack.c.l.b16 %v109
  %v145 = vunpack.c.l.b16 %v110
  %v146 = vunpack.c.l.b16 %v111
  %v147 = vunpack.c.l.b16 %v112
  %v148 = vpack.c.b16 %v133, %v132
  %v149 = vpack.c.b16 %v135, %v134
  %v150 = vpack.c.b16 %v137, %v136
  %v151 = vpack.c.b16 %v139, %v138
  %v152 = vpack.c.b16 %v141, %v140
  %v153 = vpack.c.b16 %v143, %v142
  %v154 = vpack.c.b16 %v145, %v144
  %v155 = vpack.c.b16 %v147, %v146
  %v180 = vunpack.c.l.b16 %v77
  %v181 = vunpack.c.l.b16 %v78
  %v182 = vunpack.c.l.b16 %v79
  %v183 = vunpack.c.l.b16 %v80
  %v184 = vunpack.c.l.b16 %v81
  %v185 = vunpack.c.l.b16 %v82
  %v186 = vunpack.c.l.b16 %v83
  %v187 = vunpack.c.l.b16 %v84
  %v188 = vunpack.c.l.b16 %v85
  %v189 = vunpack.c.l.b16 %v86
  %v190 = vunpack.c.l.b16 %v87
  %v191 = vunpack.c.l.b16 %v88
  %v192 = vunpack.c.l.b16 %v89
  %v193 = vunpack.c.l.b16 %v90
  %v194 = vunpack.c.l.b16 %v91
  %v195 = vunpack.c.l.b16 %v92
  %v196 = vpack.c.b16 %v181, %v180
  %v197 = vpack.c.b16 %v183, %v182
  %v198 = vpack.c.b16 %v185, %v184
  %v199 = vpack.c.b16 %v187, %v186
  %v200 = vpack.c.b16 %v189, %v188
  %v201 = vpack.c.b16 %v191, %v190
  %v202 = vpack.c.b16 %v193, %v192
  %v203 = vpack.c.b16 %v195, %v194
  %212 = vmatpush.bf16.msra.mxu0 %v203
  %213 = vmatpush.bf16.msra.mxu0 %v202
  %214 = vmatpush.bf16.msra.mxu0 %v201
  %215 = vmatpush.bf16.msra.mxu0 %v200
  %216 = vmatpush.bf16.msra.mxu0 %v199
  %217 = vmatpush.bf16.msra.mxu0 %v198
  %218 = vmatpush.bf16.msra.mxu0 %v197
  %219 = vmatpush.bf16.msra.mxu0 %v196
  %220 = vmatmul.bf16.gmra.mxu0 %v148
  %v221 = vpop.f32.mrf.mxu0
  %v222 = vadd.f32 %v114, %v221
  %v223 = vpop.f32.mrf.mxu0
  %v224 = vadd.f32 %v114, %v223
  %225 = vmatmul.bf16.gmra.mxu0 %v149
  %v226 = vpop.f32.mrf.mxu0
  %v227 = vadd.f32 %v114, %v226
  %v228 = vpop.f32.mrf.mxu0
  %v229 = vadd.f32 %v114, %v228
  %230 = vmatmul.bf16.gmra.mxu0 %v150
  %v231 = vpop.f32.mrf.mxu0
  %v232 = vadd.f32 %v114, %v231
  %v233 = vpop.f32.mrf.mxu0
  %v234 = vadd.f32 %v114, %v233
  %235 = vmatmul.bf16.gmra.mxu0 %v151
  %v236 = vpop.f32.mrf.mxu0
  %v237 = vadd.f32 %v114, %v236
  %v238 = vpop.f32.mrf.mxu0
  %v239 = vadd.f32 %v114, %v238
  %240 = vmatmul.bf16.gmra.mxu0 %v152
  %v241 = vpop.f32.mrf.mxu0
  %v242 = vadd.f32 %v114, %v241
  %v243 = vpop.f32.mrf.mxu0
  %v244 = vadd.f32 %v114, %v243
  %245 = vmatmul.bf16.gmra.mxu0 %v153
  %v246 = vpop.f32.mrf.mxu0
  %v247 = vadd.f32 %v114, %v246
  %v248 = vpop.f32.mrf.mxu0
  %v249 = vadd.f32 %v114, %v248
  %250 = vmatmul.bf16.gmra.mxu0 %v154
  %v251 = vpop.f32.mrf.mxu0
  %v252 = vadd.f32 %v114, %v251
  %v253 = vpop.f32.mrf.mxu0
  %v254 = vadd.f32 %v114, %v253
  %255 = vmatmul.bf16.gmra.mxu0 %v155
  %v256 = vpop.f32.mrf.mxu0
  %v257 = vadd.f32 %v114, %v256
  %v258 = vpop.f32.mrf.mxu0
  %v259 = vadd.f32 %v114, %v258
  %260 = vdwg.mxu0
  %v261 = vpack.c.bf16 %v222, %v222
  %v262 = vpack.c.bf16 %v224, %v224
  %v263 = vpack.c.bf16 %v227, %v227
  %v264 = vpack.c.bf16 %v229, %v229
  %v265 = vpack.c.bf16 %v232, %v232
  %v266 = vpack.c.bf16 %v234, %v234
  %v267 = vpack.c.bf16 %v237, %v237
  %v268 = vpack.c.bf16 %v239, %v239
  %v269 = vpack.c.bf16 %v242, %v242
  %v270 = vpack.c.bf16 %v244, %v244
  %v271 = vpack.c.bf16 %v247, %v247
  %v272 = vpack.c.bf16 %v249, %v249
  %v273 = vpack.c.bf16 %v252, %v252
  %v274 = vpack.c.bf16 %v254, %v254
  %v275 = vpack.c.bf16 %v257, %v257
  %v276 = vpack.c.bf16 %v259, %v259
  %s277 = smul.addr %s94, 4
  %s278 = scalar_lea.vmem [#allocation2], %s277
  %279 = vst [vmem:[%s278] sm:$0xf] %v261
  %280 = vst [vmem:[%s278 + $0x4] sm:$0xf] %v262
  %281 = vst [vmem:[%s278 + $0x8] sm:$0xf] %v263
  %282 = vst [vmem:[%s278 + $0xc] sm:$0xf] %v264
  %283 = vst [vmem:[%s278 + $0x10] sm:$0xf] %v265
  %284 = vst [vmem:[%s278 + $0x14] sm:$0xf] %v266
  %285 = vst [vmem:[%s278 + $0x18] sm:$0xf] %v267
  %286 = vst [vmem:[%s278 + $0x1c] sm:$0xf] %v268
  %287 = vst [vmem:[%s278 + $0x20] sm:$0xf] %v269
  %288 = vst [vmem:[%s278 + $0x24] sm:$0xf] %v270
  %289 = vst [vmem:[%s278 + $0x28] sm:$0xf] %v271
  %290 = vst [vmem:[%s278 + $0x2c] sm:$0xf] %v272
  %291 = vst [vmem:[%s278 + $0x30] sm:$0xf] %v273
  %292 = vst [vmem:[%s278 + $0x34] sm:$0xf] %v274
  %293 = vst [vmem:[%s278 + $0x38] sm:$0xf] %v275
  %294 = vst [vmem:[%s278 + $0x3c] sm:$0xf] %v276
  %v295 = vld [vmem:[%s2] sm:$0xf]
  %v296 = vld [vmem:[%s2 + $0x4] sm:$0xf]
  %v297 = vld [vmem:[%s2 + $0x8] sm:$0xf]
  %v298 = vld [vmem:[%s2 + $0xc] sm:$0xf]
  %v299 = vld [vmem:[#allocation2] sm:$0xf]
  %v300 = vld [vmem:[#allocation2 + $0x4] sm:$0xf]
  %v301 = vunpack.c.l.bf16 %v299
  %v302 = vunpack.c.l.bf16 %v300
  %v307 = vunpack.c.l.b16 %v295
  %v308 = vunpack.c.l.b16 %v296
  %v309 = vunpack.c.l.b16 %v297
  %v310 = vunpack.c.l.b16 %v298
  %v311 = vpack.c.b16 %v308, %v307
  %v312 = vpack.c.b16 %v310, %v309
  %vm315 = vcmask 261120
  %v317 = vsel %vm315, 0, 0
  %319 = vmatpush.bf16.msra.mxu0 0
  %320 = vmatpush.bf16.msra.mxu0 0
  %321 = vmatpush.bf16.msra.mxu0 0
  %322 = vmatpush.bf16.msra.mxu0 0
  %323 = vmatpush.bf16.msra.mxu0 0
  %324 = vmatpush.bf16.msra.mxu0 0
  %325 = vmatpush.bf16.msra.mxu0 %v312
  %326 = vmatpush.bf16.msra.mxu0 %v311
  %327 = vmatmul.bf16.gmra.mxu0 %v317
  %v328 = vpop.f32.mrf.mxu0
  %v329 = vadd.f32 0.0, %v328
  %v330 = vpop.f32.mrf.mxu0
  %v331 = vadd.f32 0.0, %v330
  %332 = vdwg.mxu0
  %v333 = vadd.f32 %v301, %v329
  %v334 = vadd.f32 %v302, %v331
  %v335 = vmul.f32 %v333, %v76
  %v336 = vmul.f32 %v334, %v76
  %v337 = vxor.u32 %v335, 2147483648
  %v338 = vxor.u32 %v336, 2147483648
  %v339 = vmul.f32 %v337, 1.442695
  %v340 = vpow.pop %v339
  %v341 = vmul.f32 %v338, 1.442695
  %v342 = vpow.pop %v341
  %v343 = vadd.f32 %v340, 1.0
  %v344 = vadd.f32 %v342, 1.0
  %v345 = vrcp.pop %v343
  %v346 = vmul.f32 %v343, %v345
  %v347 = vsub.f32 1.0, %v346
  %v348 = vmul.f32 %v345, %v347
  %v349 = vadd.f32 %v345, %v348
  %vm350 = vweird.f32 %v343
  %vm351 = vweird.f32 %v345
  %vm352 = vmor %vm350, %vm351
  %v353 = vsel %vm352, %v345, %v349
  %v354 = vand.u32 2147483647, %v343
  %vm355 = vcmp.eq.f32.partialorder %v354, 8.507059e+37
  %v356 = vand.u32 %v343, 2147483648
  %v357 = vor.u32 1.1754944e-38, %v356
  %v358 = vsel %vm355, %v357, %v353
  %v359 = vmul.f32 1.0, %v358
  %v360 = vrcp.pop %v344
  %v361 = vmul.f32 %v344, %v360
  %v362 = vsub.f32 1.0, %v361
  %v363 = vmul.f32 %v360, %v362
  %v364 = vadd.f32 %v360, %v363
  %vm365 = vweird.f32 %v344
  %vm366 = vweird.f32 %v360
  %vm367 = vmor %vm365, %vm366
  %v368 = vsel %vm367, %v360, %v364
  %v369 = vand.u32 2147483647, %v344
  %vm370 = vcmp.eq.f32.partialorder %v369, 8.507059e+37
  %v371 = vand.u32 %v344, 2147483648
  %v372 = vor.u32 1.1754944e-38, %v371
  %v373 = vsel %vm370, %v372, %v368
  %v374 = vmul.f32 1.0, %v373
  %v375 = vmul.f32 %v359, 2.0
  %v376 = vmul.f32 %v374, 2.0
  %v377 = vsub.f32 %v375, 1.0
  %v378 = vsub.f32 %v376, 1.0
  %v379 = vsel %vm75, %v377, %v359
  %v380 = vsel %vm75, %v378, %v374
  %v381 = vmul.f32 %v379, 0.0
  %v382 = vmul.f32 %v380, 0.0
  %385 = vrot.lane.b32.xlu0 %v379, 64
  %v386 = vpop.permute.xlu0 %385
  %387 = vrot.lane.b32.xlu0 %v380, 64
  %v388 = vpop.permute.xlu0 %387
  %v391 = vmul.f32 %v379, %v386
  %v392 = vmul.f32 %v380, %v388
  %395 = vrot.lane.b32.xlu0 %v391, 32
  %v396 = vpop.permute.xlu0 %395
  %397 = vrot.lane.b32.xlu0 %v392, 32
  %v398 = vpop.permute.xlu0 %397
  %v401 = vadd.f32 %v381, %v396
  %v402 = vadd.f32 %v382, %v398
  %v403 = vtanh.pop %v401
  %v404 = vtanh.pop %v402
  %407 = vrot.lane.b32.xlu0 %v403, 64
  %v408 = vpop.permute.xlu0 %407
  %409 = vrot.lane.b32.xlu0 %v404, 64
  %v410 = vpop.permute.xlu0 %409
  %v413 = vmul.f32 %v379, %v408
  %v414 = vmul.f32 %v380, %v410
  %v415 = vpack.c.bf16 %v413, %v413
  %v416 = vpack.c.bf16 %v414, %v414
  %419 = vrot.lane.b32.xlu0 %v415, 32
  %v420 = vpop.permute.xlu0 %419
  %421 = vrot.lane.b32.xlu0 %v416, 32
  %v422 = vpop.permute.xlu0 %421
  %vm425 = vcmask 257024
  %426 = vst.msk [vmem:[#allocation3] sm:$0xf] %vm425, %v420
  %427 = vst.msk [vmem:[#allocation3 + $0x4] sm:$0xf] %vm425, %v422
  %s428 = scalar_lea.vmem [#allocation2], 8
  %v429 = vld [vmem:[%s428] sm:$0xf]
  %v430 = vld [vmem:[%s428 + $0x4] sm:$0xf]
  %v431 = vunpack.c.l.bf16 %v429
  %v432 = vunpack.c.l.bf16 %v430
  %v433 = vunpack.c.l.b16 %v415
  %v434 = vunpack.c.l.b16 %v416
  %v435 = vpack.c.b16 %v434, %v433
  %436 = vrot.lane.b32.xlu0 %v435, 32
  %v437 = vpop.permute.xlu0 %436
  %v439 = vsel %vm315, %v437, 0
  %441 = vmatpush.bf16.msra.mxu0 0
  %442 = vmatpush.bf16.msra.mxu0 0
  %443 = vmatpush.bf16.msra.mxu0 0
  %444 = vmatpush.bf16.msra.mxu0 0
  %445 = vmatpush.bf16.msra.mxu0 0
  %446 = vmatpush.bf16.msra.mxu0 0
  %447 = vmatpush.bf16.msra.mxu0 %v312
  %448 = vmatpush.bf16.msra.mxu0 %v311
  %449 = vmatmul.bf16.gmra.mxu0 %v439
  %v450 = vpop.f32.mrf.mxu0
  %v451 = vadd.f32 0.0, %v450
  %v452 = vpop.f32.mrf.mxu0
  %v453 = vadd.f32 0.0, %v452
  %454 = vdwg.mxu0
  %v455 = vadd.f32 %v431, %v451
  %v456 = vadd.f32 %v432, %v453
  %v457 = vmul.f32 %v455, %v76
  %v458 = vmul.f32 %v456, %v76
  %v459 = vxor.u32 %v457, 2147483648
  %v460 = vxor.u32 %v458, 2147483648
  %v461 = vmul.f32 %v459, 1.442695
  %v462 = vpow.pop %v461
  %v463 = vmul.f32 %v460, 1.442695
  %v464 = vpow.pop %v463
  %v465 = vadd.f32 %v462, 1.0
  %v466 = vadd.f32 %v464, 1.0
  %v467 = vrcp.pop %v465
  %v468 = vmul.f32 %v465, %v467
  %v469 = vsub.f32 1.0, %v468
  %v470 = vmul.f32 %v467, %v469
  %v471 = vadd.f32 %v467, %v470
  %vm472 = vweird.f32 %v465
  %vm473 = vweird.f32 %v467
  %vm474 = vmor %vm472, %vm473
  %v475 = vsel %vm474, %v467, %v471
  %v476 = vand.u32 2147483647, %v465
  %vm477 = vcmp.eq.f32.partialorder %v476, 8.507059e+37
  %v478 = vand.u32 %v465, 2147483648
  %v479 = vor.u32 1.1754944e-38, %v478
  %v480 = vsel %vm477, %v479, %v475
  %v481 = vmul.f32 1.0, %v480
  %v482 = vrcp.pop %v466
  %v483 = vmul.f32 %v466, %v482
  %v484 = vsub.f32 1.0, %v483
  %v485 = vmul.f32 %v482, %v484
  %v486 = vadd.f32 %v482, %v485
  %vm487 = vweird.f32 %v466
  %vm488 = vweird.f32 %v482
  %vm489 = vmor %vm487, %vm488
  %v490 = vsel %vm489, %v482, %v486
  %v491 = vand.u32 2147483647, %v466
  %vm492 = vcmp.eq.f32.partialorder %v491, 8.507059e+37
  %v493 = vand.u32 %v466, 2147483648
  %v494 = vor.u32 1.1754944e-38, %v493
  %v495 = vsel %vm492, %v494, %v490
  %v496 = vmul.f32 1.0, %v495
  %v497 = vmul.f32 %v481, 2.0
  %v498 = vmul.f32 %v496, 2.0
  %v499 = vsub.f32 %v497, 1.0
  %v500 = vsub.f32 %v498, 1.0
  %v501 = vsel %vm75, %v499, %v481
  %v502 = vsel %vm75, %v500, %v496
  %v503 = vmul.f32 %v501, %v401
  %v504 = vmul.f32 %v502, %v402
  %507 = vrot.lane.b32.xlu0 %v501, 64
  %v508 = vpop.permute.xlu0 %507
  %509 = vrot.lane.b32.xlu0 %v502, 64
  %v510 = vpop.permute.xlu0 %509
  %v513 = vmul.f32 %v501, %v508
  %v514 = vmul.f32 %v502, %v510
  %517 = vrot.lane.b32.xlu0 %v513, 32
  %v518 = vpop.permute.xlu0 %517
  %519 = vrot.lane.b32.xlu0 %v514, 32
  %v520 = vpop.permute.xlu0 %519
  %v523 = vadd.f32 %v503, %v518
  %v524 = vadd.f32 %v504, %v520
  %v525 = vtanh.pop %v523
  %v526 = vtanh.pop %v524
  %529 = vrot.lane.b32.xlu0 %v525, 64
  %v530 = vpop.permute.xlu0 %529
  %531 = vrot.lane.b32.xlu0 %v526, 64
  %v532 = vpop.permute.xlu0 %531
  %v535 = vmul.f32 %v501, %v530
  %v536 = vmul.f32 %v502, %v532
  %v537 = vpack.c.bf16 %v535, %v535
  %v538 = vpack.c.bf16 %v536, %v536
  %541 = vrot.lane.b32.xlu0 %v537, 32
  %v542 = vpop.permute.xlu0 %541
  %543 = vrot.lane.b32.xlu0 %v538, 32
  %v544 = vpop.permute.xlu0 %543
  %s547 = scalar_lea.vmem [#allocation3], 8
  %548 = vst.msk [vmem:[%s547] sm:$0xf] %vm425, %v542
  %549 = vst.msk [vmem:[%s547 + $0x4] sm:$0xf] %vm425, %v544
  %s550 = scalar_lea.vmem [#allocation2], 16
  %v551 = vld [vmem:[%s550] sm:$0xf]
  %v552 = vld [vmem:[%s550 + $0x4] sm:$0xf]
  %v553 = vunpack.c.l.bf16 %v551
  %v554 = vunpack.c.l.bf16 %v552
  %v555 = vunpack.c.l.b16 %v537
  %v556 = vunpack.c.l.b16 %v538
  %v557 = vpack.c.b16 %v556, %v555
  %558 = vrot.lane.b32.xlu0 %v557, 32
  %v559 = vpop.permute.xlu0 %558
  %v561 = vsel %vm315, %v559, 0
  %563 = vmatpush.bf16.msra.mxu0 0
  %564 = vmatpush.bf16.msra.mxu0 0
  %565 = vmatpush.bf16.msra.mxu0 0
  %566 = vmatpush.bf16.msra.mxu0 0
  %567 = vmatpush.bf16.msra.mxu0 0
  %568 = vmatpush.bf16.msra.mxu0 0
  %569 = vmatpush.bf16.msra.mxu0 %v312
  %570 = vmatpush.bf16.msra.mxu0 %v311
  %571 = vmatmul.bf16.gmra.mxu0 %v561
  %v572 = vpop.f32.mrf.mxu0
  %v573 = vadd.f32 0.0, %v572
  %v574 = vpop.f32.mrf.mxu0
  %v575 = vadd.f32 0.0, %v574
  %576 = vdwg.mxu0
  %v577 = vadd.f32 %v553, %v573
  %v578 = vadd.f32 %v554, %v575
  %v579 = vmul.f32 %v577, %v76
  %v580 = vmul.f32 %v578, %v76
  %v581 = vxor.u32 %v579, 2147483648
  %v582 = vxor.u32 %v580, 2147483648
  %v583 = vmul.f32 %v581, 1.442695
  %v584 = vpow.pop %v583
  %v585 = vmul.f32 %v582, 1.442695
  %v586 = vpow.pop %v585
  %v587 = vadd.f32 %v584, 1.0
  %v588 = vadd.f32 %v586, 1.0
  %v589 = vrcp.pop %v587
  %v590 = vmul.f32 %v587, %v589
  %v591 = vsub.f32 1.0, %v590
  %v592 = vmul.f32 %v589, %v591
  %v593 = vadd.f32 %v589, %v592
  %vm594 = vweird.f32 %v587
  %vm595 = vweird.f32 %v589
  %vm596 = vmor %vm594, %vm595
  %v597 = vsel %vm596, %v589, %v593
  %v598 = vand.u32 2147483647, %v587
  %vm599 = vcmp.eq.f32.partialorder %v598, 8.507059e+37
  %v600 = vand.u32 %v587, 2147483648
  %v601 = vor.u32 1.1754944e-38, %v600
  %v602 = vsel %vm599, %v601, %v597
  %v603 = vmul.f32 1.0, %v602
  %v604 = vrcp.pop %v588
  %v605 = vmul.f32 %v588, %v604
  %v606 = vsub.f32 1.0, %v605
  %v607 = vmul.f32 %v604, %v606
  %v608 = vadd.f32 %v604, %v607
  %vm609 = vweird.f32 %v588
  %vm610 = vweird.f32 %v604
  %vm611 = vmor %vm609, %vm610
  %v612 = vsel %vm611, %v604, %v608
  %v613 = vand.u32 2147483647, %v588
  %vm614 = vcmp.eq.f32.partialorder %v613, 8.507059e+37
  %v615 = vand.u32 %v588, 2147483648
  %v616 = vor.u32 1.1754944e-38, %v615
  %v617 = vsel %vm614, %v616, %v612
  %v618 = vmul.f32 1.0, %v617
  %v619 = vmul.f32 %v603, 2.0
  %v620 = vmul.f32 %v618, 2.0
  %v621 = vsub.f32 %v619, 1.0
  %v622 = vsub.f32 %v620, 1.0
  %v623 = vsel %vm75, %v621, %v603
  %v624 = vsel %vm75, %v622, %v618
  %v625 = vmul.f32 %v623, %v523
  %v626 = vmul.f32 %v624, %v524
  %629 = vrot.lane.b32.xlu0 %v623, 64
  %v630 = vpop.permute.xlu0 %629
  %631 = vrot.lane.b32.xlu0 %v624, 64
  %v632 = vpop.permute.xlu0 %631
  %v635 = vmul.f32 %v623, %v630
  %v636 = vmul.f32 %v624, %v632
  %639 = vrot.lane.b32.xlu0 %v635, 32
  %v640 = vpop.permute.xlu0 %639
  %641 = vrot.lane.b32.xlu0 %v636, 32
  %v642 = vpop.permute.xlu0 %641
  %v645 = vadd.f32 %v625, %v640
  %v646 = vadd.f32 %v626, %v642
  %v647 = vtanh.pop %v645
  %v648 = vtanh.pop %v646
  %651 = vrot.lane.b32.xlu0 %v647, 64
  %v652 = vpop.permute.xlu0 %651
  %653 = vrot.lane.b32.xlu0 %v648, 64
  %v654 = vpop.permute.xlu0 %653
  %v657 = vmul.f32 %v623, %v652
  %v658 = vmul.f32 %v624, %v654
  %v659 = vpack.c.bf16 %v657, %v657
  %v660 = vpack.c.bf16 %v658, %v658
  %663 = vrot.lane.b32.xlu0 %v659, 32
  %v664 = vpop.permute.xlu0 %663
  %665 = vrot.lane.b32.xlu0 %v660, 32
  %v666 = vpop.permute.xlu0 %665
  %s669 = scalar_lea.vmem [#allocation3], 16
  %670 = vst.msk [vmem:[%s669] sm:$0xf] %vm425, %v664
  %671 = vst.msk [vmem:[%s669 + $0x4] sm:$0xf] %vm425, %v666
  %s672 = scalar_lea.vmem [#allocation2], 24
  %v673 = vld [vmem:[%s672] sm:$0xf]
  %v674 = vld [vmem:[%s672 + $0x4] sm:$0xf]
  %v675 = vunpack.c.l.bf16 %v673
  %v676 = vunpack.c.l.bf16 %v674
  %v677 = vunpack.c.l.b16 %v659
  %v678 = vunpack.c.l.b16 %v660
  %v679 = vpack.c.b16 %v678, %v677
  %680 = vrot.lane.b32.xlu0 %v679, 32
  %v681 = vpop.permute.xlu0 %680
  %v683 = vsel %vm315, %v681, 0
  %685 = vmatpush.bf16.msra.mxu0 0
  %686 = vmatpush.bf16.msra.mxu0 0
  %687 = vmatpush.bf16.msra.mxu0 0
  %688 = vmatpush.bf16.msra.mxu0 0
  %689 = vmatpush.bf16.msra.mxu0 0
  %690 = vmatpush.bf16.msra.mxu0 0
  %691 = vmatpush.bf16.msra.mxu0 %v312
  %692 = vmatpush.bf16.msra.mxu0 %v311
  %693 = vmatmul.bf16.gmra.mxu0 %v683
  %v694 = vpop.f32.mrf.mxu0
  %v695 = vadd.f32 0.0, %v694
  %v696 = vpop.f32.mrf.mxu0
  %v697 = vadd.f32 0.0, %v696
  %698 = vdwg.mxu0
  %v699 = vadd.f32 %v675, %v695
  %v700 = vadd.f32 %v676, %v697
  %v701 = vmul.f32 %v699, %v76
  %v702 = vmul.f32 %v700, %v76
  %v703 = vxor.u32 %v701, 2147483648
  %v704 = vxor.u32 %v702, 2147483648
  %v705 = vmul.f32 %v703, 1.442695
  %v706 = vpow.pop %v705
  %v707 = vmul.f32 %v704, 1.442695
  %v708 = vpow.pop %v707
  %v709 = vadd.f32 %v706, 1.0
  %v710 = vadd.f32 %v708, 1.0
  %v711 = vrcp.pop %v709
  %v712 = vmul.f32 %v709, %v711
  %v713 = vsub.f32 1.0, %v712
  %v714 = vmul.f32 %v711, %v713
  %v715 = vadd.f32 %v711, %v714
  %vm716 = vweird.f32 %v709
  %vm717 = vweird.f32 %v711
  %vm718 = vmor %vm716, %vm717
  %v719 = vsel %vm718, %v711, %v715
  %v720 = vand.u32 2147483647, %v709
  %vm721 = vcmp.eq.f32.partialorder %v720, 8.507059e+37
  %v722 = vand.u32 %v709, 2147483648
  %v723 = vor.u32 1.1754944e-38, %v722
  %v724 = vsel %vm721, %v723, %v719
  %v725 = vmul.f32 1.0, %v724
  %v726 = vrcp.pop %v710
  %v727 = vmul.f32 %v710, %v726
  %v728 = vsub.f32 1.0, %v727
  %v729 = vmul.f32 %v726, %v728
  %v730 = vadd.f32 %v726, %v729
  %vm731 = vweird.f32 %v710
  %vm732 = vweird.f32 %v726
  %vm733 = vmor %vm731, %vm732
  %v734 = vsel %vm733, %v726, %v730
  %v735 = vand.u32 2147483647, %v710
  %vm736 = vcmp.eq.f32.partialorder %v735, 8.507059e+37
  %v737 = vand.u32 %v710, 2147483648
  %v738 = vor.u32 1.1754944e-38, %v737
  %v739 = vsel %vm736, %v738, %v734
  %v740 = vmul.f32 1.0, %v739
  %v741 = vmul.f32 %v725, 2.0
  %v742 = vmul.f32 %v740, 2.0
  %v743 = vsub.f32 %v741, 1.0
  %v744 = vsub.f32 %v742, 1.0
  %v745 = vsel %vm75, %v743, %v725
  %v746 = vsel %vm75, %v744, %v740
  %v747 = vmul.f32 %v745, %v645
  %v748 = vmul.f32 %v746, %v646
  %751 = vrot.lane.b32.xlu0 %v745, 64
  %v752 = vpop.permute.xlu0 %751
  %753 = vrot.lane.b32.xlu0 %v746, 64
  %v754 = vpop.permute.xlu0 %753
  %v757 = vmul.f32 %v745, %v752
  %v758 = vmul.f32 %v746, %v754
  %761 = vrot.lane.b32.xlu0 %v757, 32
  %v762 = vpop.permute.xlu0 %761
  %763 = vrot.lane.b32.xlu0 %v758, 32
  %v764 = vpop.permute.xlu0 %763
  %v767 = vadd.f32 %v747, %v762
  %v768 = vadd.f32 %v748, %v764
  %v769 = vtanh.pop %v767
  %v770 = vtanh.pop %v768
  %773 = vrot.lane.b32.xlu0 %v769, 64
  %v774 = vpop.permute.xlu0 %773
  %775 = vrot.lane.b32.xlu0 %v770, 64
  %v776 = vpop.permute.xlu0 %775
  %v779 = vmul.f32 %v745, %v774
  %v780 = vmul.f32 %v746, %v776
  %v781 = vpack.c.bf16 %v779, %v779
  %v782 = vpack.c.bf16 %v780, %v780
  %785 = vrot.lane.b32.xlu0 %v781, 32
  %v786 = vpop.permute.xlu0 %785
  %787 = vrot.lane.b32.xlu0 %v782, 32
  %v788 = vpop.permute.xlu0 %787
  %s791 = scalar_lea.vmem [#allocation3], 24
  %792 = vst.msk [vmem:[%s791] sm:$0xf] %vm425, %v786
  %793 = vst.msk [vmem:[%s791 + $0x4] sm:$0xf] %vm425, %v788
  %s794 = scalar_lea.vmem [#allocation2], 32
  %v795 = vld [vmem:[%s794] sm:$0xf]
  %v796 = vld [vmem:[%s794 + $0x4] sm:$0xf]
  %v797 = vunpack.c.l.bf16 %v795
  %v798 = vunpack.c.l.bf16 %v796
  %v799 = vunpack.c.l.b16 %v781
  %v800 = vunpack.c.l.b16 %v782
  %v801 = vpack.c.b16 %v800, %v799
  %802 = vrot.lane.b32.xlu0 %v801, 32
  %v803 = vpop.permute.xlu0 %802
  %v805 = vsel %vm315, %v803, 0
  %807 = vmatpush.bf16.msra.mxu0 0
  %808 = vmatpush.bf16.msra.mxu0 0
  %809 = vmatpush.bf16.msra.mxu0 0
  %810 = vmatpush.bf16.msra.mxu0 0
  %811 = vmatpush.bf16.msra.mxu0 0
  %812 = vmatpush.bf16.msra.mxu0 0
  %813 = vmatpush.bf16.msra.mxu0 %v312
  %814 = vmatpush.bf16.msra.mxu0 %v311
  %815 = vmatmul.bf16.gmra.mxu0 %v805
  %v816 = vpop.f32.mrf.mxu0
  %v817 = vadd.f32 0.0, %v816
  %v818 = vpop.f32.mrf.mxu0
  %v819 = vadd.f32 0.0, %v818
  %820 = vdwg.mxu0
  %v821 = vadd.f32 %v797, %v817
  %v822 = vadd.f32 %v798, %v819
  %v823 = vmul.f32 %v821, %v76
  %v824 = vmul.f32 %v822, %v76
  %v825 = vxor.u32 %v823, 2147483648
  %v826 = vxor.u32 %v824, 2147483648
  %v827 = vmul.f32 %v825, 1.442695
  %v828 = vpow.pop %v827
  %v829 = vmul.f32 %v826, 1.442695
  %v830 = vpow.pop %v829
  %v831 = vadd.f32 %v828, 1.0
  %v832 = vadd.f32 %v830, 1.0
  %v833 = vrcp.pop %v831
  %v834 = vmul.f32 %v831, %v833
  %v835 = vsub.f32 1.0, %v834
  %v836 = vmul.f32 %v833, %v835
  %v837 = vadd.f32 %v833, %v836
  %vm838 = vweird.f32 %v831
  %vm839 = vweird.f32 %v833
  %vm840 = vmor %vm838, %vm839
  %v841 = vsel %vm840, %v833, %v837
  %v842 = vand.u32 2147483647, %v831
  %vm843 = vcmp.eq.f32.partialorder %v842, 8.507059e+37
  %v844 = vand.u32 %v831, 2147483648
  %v845 = vor.u32 1.1754944e-38, %v844
  %v846 = vsel %vm843, %v845, %v841
  %v847 = vmul.f32 1.0, %v846
  %v848 = vrcp.pop %v832
  %v849 = vmul.f32 %v832, %v848
  %v850 = vsub.f32 1.0, %v849
  %v851 = vmul.f32 %v848, %v850
  %v852 = vadd.f32 %v848, %v851
  %vm853 = vweird.f32 %v832
  %vm854 = vweird.f32 %v848
  %vm855 = vmor %vm853, %vm854
  %v856 = vsel %vm855, %v848, %v852
  %v857 = vand.u32 2147483647, %v832
  %vm858 = vcmp.eq.f32.partialorder %v857, 8.507059e+37
  %v859 = vand.u32 %v832, 2147483648
  %v860 = vor.u32 1.1754944e-38, %v859
  %v861 = vsel %vm858, %v860, %v856
  %v862 = vmul.f32 1.0, %v861
  %v863 = vmul.f32 %v847, 2.0
  %v864 = vmul.f32 %v862, 2.0
  %v865 = vsub.f32 %v863, 1.0
  %v866 = vsub.f32 %v864, 1.0
  %v867 = vsel %vm75, %v865, %v847
  %v868 = vsel %vm75, %v866, %v862
  %v869 = vmul.f32 %v867, %v767
  %v870 = vmul.f32 %v868, %v768
  %873 = vrot.lane.b32.xlu0 %v867, 64
  %v874 = vpop.permute.xlu0 %873
  %875 = vrot.lane.b32.xlu0 %v868, 64
  %v876 = vpop.permute.xlu0 %875
  %v879 = vmul.f32 %v867, %v874
  %v880 = vmul.f32 %v868, %v876
  %883 = vrot.lane.b32.xlu0 %v879, 32
  %v884 = vpop.permute.xlu0 %883
  %885 = vrot.lane.b32.xlu0 %v880, 32
  %v886 = vpop.permute.xlu0 %885
  %v889 = vadd.f32 %v869, %v884
  %v890 = vadd.f32 %v870, %v886
  %v891 = vtanh.pop %v889
  %v892 = vtanh.pop %v890
  %895 = vrot.lane.b32.xlu0 %v891, 64
  %v896 = vpop.permute.xlu0 %895
  %897 = vrot.lane.b32.xlu0 %v892, 64
  %v898 = vpop.permute.xlu0 %897
  %v901 = vmul.f32 %v867, %v896
  %v902 = vmul.f32 %v868, %v898
  %v903 = vpack.c.bf16 %v901, %v901
  %v904 = vpack.c.bf16 %v902, %v902
  %907 = vrot.lane.b32.xlu0 %v903, 32
  %v908 = vpop.permute.xlu0 %907
  %909 = vrot.lane.b32.xlu0 %v904, 32
  %v910 = vpop.permute.xlu0 %909
  %s913 = scalar_lea.vmem [#allocation3], 32
  %914 = vst.msk [vmem:[%s913] sm:$0xf] %vm425, %v908
  %915 = vst.msk [vmem:[%s913 + $0x4] sm:$0xf] %vm425, %v910
  %s916 = scalar_lea.vmem [#allocation2], 40
  %v917 = vld [vmem:[%s916] sm:$0xf]
  %v918 = vld [vmem:[%s916 + $0x4] sm:$0xf]
  %v919 = vunpack.c.l.bf16 %v917
  %v920 = vunpack.c.l.bf16 %v918
  %v921 = vunpack.c.l.b16 %v903
  %v922 = vunpack.c.l.b16 %v904
  %v923 = vpack.c.b16 %v922, %v921
  %924 = vrot.lane.b32.xlu0 %v923, 32
  %v925 = vpop.permute.xlu0 %924
  %v927 = vsel %vm315, %v925, 0
  %929 = vmatpush.bf16.msra.mxu0 0
  %930 = vmatpush.bf16.msra.mxu0 0
  %931 = vmatpush.bf16.msra.mxu0 0
  %932 = vmatpush.bf16.msra.mxu0 0
  %933 = vmatpush.bf16.msra.mxu0 0
  %934 = vmatpush.bf16.msra.mxu0 0
  %935 = vmatpush.bf16.msra.mxu0 %v312
  %936 = vmatpush.bf16.msra.mxu0 %v311
  %937 = vmatmul.bf16.gmra.mxu0 %v927
  %v938 = vpop.f32.mrf.mxu0
  %v939 = vadd.f32 0.0, %v938
  %v940 = vpop.f32.mrf.mxu0
  %v941 = vadd.f32 0.0, %v940
  %942 = vdwg.mxu0
  %v943 = vadd.f32 %v919, %v939
  %v944 = vadd.f32 %v920, %v941
  %v945 = vmul.f32 %v943, %v76
  %v946 = vmul.f32 %v944, %v76
  %v947 = vxor.u32 %v945, 2147483648
  %v948 = vxor.u32 %v946, 2147483648
  %v949 = vmul.f32 %v947, 1.442695
  %v950 = vpow.pop %v949
  %v951 = vmul.f32 %v948, 1.442695
  %v952 = vpow.pop %v951
  %v953 = vadd.f32 %v950, 1.0
  %v954 = vadd.f32 %v952, 1.0
  %v955 = vrcp.pop %v953
  %v956 = vmul.f32 %v953, %v955
  %v957 = vsub.f32 1.0, %v956
  %v958 = vmul.f32 %v955, %v957
  %v959 = vadd.f32 %v955, %v958
  %vm960 = vweird.f32 %v953
  %vm961 = vweird.f32 %v955
  %vm962 = vmor %vm960, %vm961
  %v963 = vsel %vm962, %v955, %v959
  %v964 = vand.u32 2147483647, %v953
  %vm965 = vcmp.eq.f32.partialorder %v964, 8.507059e+37
  %v966 = vand.u32 %v953, 2147483648
  %v967 = vor.u32 1.1754944e-38, %v966
  %v968 = vsel %vm965, %v967, %v963
  %v969 = vmul.f32 1.0, %v968
  %v970 = vrcp.pop %v954
  %v971 = vmul.f32 %v954, %v970
  %v972 = vsub.f32 1.0, %v971
  %v973 = vmul.f32 %v970, %v972
  %v974 = vadd.f32 %v970, %v973
  %vm975 = vweird.f32 %v954
  %vm976 = vweird.f32 %v970
  %vm977 = vmor %vm975, %vm976
  %v978 = vsel %vm977, %v970, %v974
  %v979 = vand.u32 2147483647, %v954
  %vm980 = vcmp.eq.f32.partialorder %v979, 8.507059e+37
  %v981 = vand.u32 %v954, 2147483648
  %v982 = vor.u32 1.1754944e-38, %v981
  %v983 = vsel %vm980, %v982, %v978
  %v984 = vmul.f32 1.0, %v983
  %v985 = vmul.f32 %v969, 2.0
  %v986 = vmul.f32 %v984, 2.0
  %v987 = vsub.f32 %v985, 1.0
  %v988 = vsub.f32 %v986, 1.0
  %v989 = vsel %vm75, %v987, %v969
  %v990 = vsel %vm75, %v988, %v984
  %v991 = vmul.f32 %v989, %v889
  %v992 = vmul.f32 %v990, %v890
  %995 = vrot.lane.b32.xlu0 %v989, 64
  %v996 = vpop.permute.xlu0 %995
  %997 = vrot.lane.b32.xlu0 %v990, 64
  %v998 = vpop.permute.xlu0 %997
  %v1001 = vmul.f32 %v989, %v996
  %v1002 = vmul.f32 %v990, %v998
  %1005 = vrot.lane.b32.xlu0 %v1001, 32
  %v1006 = vpop.permute.xlu0 %1005
  %1007 = vrot.lane.b32.xlu0 %v1002, 32
  %v1008 = vpop.permute.xlu0 %1007
  %v1011 = vadd.f32 %v991, %v1006
  %v1012 = vadd.f32 %v992, %v1008
  %v1013 = vtanh.pop %v1011
  %v1014 = vtanh.pop %v1012
  %1017 = vrot.lane.b32.xlu0 %v1013, 64
  %v1018 = vpop.permute.xlu0 %1017
  %1019 = vrot.lane.b32.xlu0 %v1014, 64
  %v1020 = vpop.permute.xlu0 %1019
  %v1023 = vmul.f32 %v989, %v1018
  %v1024 = vmul.f32 %v990, %v1020
  %v1025 = vpack.c.bf16 %v1023, %v1023
  %v1026 = vpack.c.bf16 %v1024, %v1024
  %1029 = vrot.lane.b32.xlu0 %v1025, 32
  %v1030 = vpop.permute.xlu0 %1029
  %1031 = vrot.lane.b32.xlu0 %v1026, 32
  %v1032 = vpop.permute.xlu0 %1031
  %s1035 = scalar_lea.vmem [#allocation3], 40
  %1036 = vst.msk [vmem:[%s1035] sm:$0xf] %vm425, %v1030
  %1037 = vst.msk [vmem:[%s1035 + $0x4] sm:$0xf] %vm425, %v1032
  %s1038 = scalar_lea.vmem [#allocation2], 48
  %v1039 = vld [vmem:[%s1038] sm:$0xf]
  %v1040 = vld [vmem:[%s1038 + $0x4] sm:$0xf]
  %v1041 = vunpack.c.l.bf16 %v1039
  %v1042 = vunpack.c.l.bf16 %v1040
  %v1043 = vunpack.c.l.b16 %v1025
  %v1044 = vunpack.c.l.b16 %v1026
  %v1045 = vpack.c.b16 %v1044, %v1043
  %1046 = vrot.lane.b32.xlu0 %v1045, 32
  %v1047 = vpop.permute.xlu0 %1046
  %v1049 = vsel %vm315, %v1047, 0
  %1051 = vmatpush.bf16.msra.mxu0 0
  %1052 = vmatpush.bf16.msra.mxu0 0
  %1053 = vmatpush.bf16.msra.mxu0 0
  %1054 = vmatpush.bf16.msra.mxu0 0
  %1055 = vmatpush.bf16.msra.mxu0 0
  %1056 = vmatpush.bf16.msra.mxu0 0
  %1057 = vmatpush.bf16.msra.mxu0 %v312
  %1058 = vmatpush.bf16.msra.mxu0 %v311
  %1059 = vmatmul.bf16.gmra.mxu0 %v1049
  %v1060 = vpop.f32.mrf.mxu0
  %v1061 = vadd.f32 0.0, %v1060
  %v1062 = vpop.f32.mrf.mxu0
  %v1063 = vadd.f32 0.0, %v1062
  %1064 = vdwg.mxu0
  %v1065 = vadd.f32 %v1041, %v1061
  %v1066 = vadd.f32 %v1042, %v1063
  %v1067 = vmul.f32 %v1065, %v76
  %v1068 = vmul.f32 %v1066, %v76
  %v1069 = vxor.u32 %v1067, 2147483648
  %v1070 = vxor.u32 %v1068, 2147483648
  %v1071 = vmul.f32 %v1069, 1.442695
  %v1072 = vpow.pop %v1071
  %v1073 = vmul.f32 %v1070, 1.442695
  %v1074 = vpow.pop %v1073
  %v1075 = vadd.f32 %v1072, 1.0
  %v1076 = vadd.f32 %v1074, 1.0
  %v1077 = vrcp.pop %v1075
  %v1078 = vmul.f32 %v1075, %v1077
  %v1079 = vsub.f32 1.0, %v1078
  %v1080 = vmul.f32 %v1077, %v1079
  %v1081 = vadd.f32 %v1077, %v1080
  %vm1082 = vweird.f32 %v1075
  %vm1083 = vweird.f32 %v1077
  %vm1084 = vmor %vm1082, %vm1083
  %v1085 = vsel %vm1084, %v1077, %v1081
  %v1086 = vand.u32 2147483647, %v1075
  %vm1087 = vcmp.eq.f32.partialorder %v1086, 8.507059e+37
  %v1088 = vand.u32 %v1075, 2147483648
  %v1089 = vor.u32 1.1754944e-38, %v1088
  %v1090 = vsel %vm1087, %v1089, %v1085
  %v1091 = vmul.f32 1.0, %v1090
  %v1092 = vrcp.pop %v1076
  %v1093 = vmul.f32 %v1076, %v1092
  %v1094 = vsub.f32 1.0, %v1093
  %v1095 = vmul.f32 %v1092, %v1094
  %v1096 = vadd.f32 %v1092, %v1095
  %vm1097 = vweird.f32 %v1076
  %vm1098 = vweird.f32 %v1092
  %vm1099 = vmor %vm1097, %vm1098
  %v1100 = vsel %vm1099, %v1092, %v1096
  %v1101 = vand.u32 2147483647, %v1076
  %vm1102 = vcmp.eq.f32.partialorder %v1101, 8.507059e+37
  %v1103 = vand.u32 %v1076, 2147483648
  %v1104 = vor.u32 1.1754944e-38, %v1103
  %v1105 = vsel %vm1102, %v1104, %v1100
  %v1106 = vmul.f32 1.0, %v1105
  %v1107 = vmul.f32 %v1091, 2.0
  %v1108 = vmul.f32 %v1106, 2.0
  %v1109 = vsub.f32 %v1107, 1.0
  %v1110 = vsub.f32 %v1108, 1.0
  %v1111 = vsel %vm75, %v1109, %v1091
  %v1112 = vsel %vm75, %v1110, %v1106
  %v1113 = vmul.f32 %v1111, %v1011
  %v1114 = vmul.f32 %v1112, %v1012
  %1117 = vrot.lane.b32.xlu0 %v1111, 64
  %v1118 = vpop.permute.xlu0 %1117
  %1119 = vrot.lane.b32.xlu0 %v1112, 64
  %v1120 = vpop.permute.xlu0 %1119
  %v1123 = vmul.f32 %v1111, %v1118
  %v1124 = vmul.f32 %v1112, %v1120
  %1127 = vrot.lane.b32.xlu0 %v1123, 32
  %v1128 = vpop.permute.xlu0 %1127
  %1129 = vrot.lane.b32.xlu0 %v1124, 32
  %v1130 = vpop.permute.xlu0 %1129
  %v1133 = vadd.f32 %v1113, %v1128
  %v1134 = vadd.f32 %v1114, %v1130
  %v1135 = vtanh.pop %v1133
  %v1136 = vtanh.pop %v1134
  %1139 = vrot.lane.b32.xlu0 %v1135, 64
  %v1140 = vpop.permute.xlu0 %1139
  %1141 = vrot.lane.b32.xlu0 %v1136, 64
  %v1142 = vpop.permute.xlu0 %1141
  %v1145 = vmul.f32 %v1111, %v1140
  %v1146 = vmul.f32 %v1112, %v1142
  %v1147 = vpack.c.bf16 %v1145, %v1145
  %v1148 = vpack.c.bf16 %v1146, %v1146
  %1151 = vrot.lane.b32.xlu0 %v1147, 32
  %v1152 = vpop.permute.xlu0 %1151
  %1153 = vrot.lane.b32.xlu0 %v1148, 32
  %v1154 = vpop.permute.xlu0 %1153
  %s1157 = scalar_lea.vmem [#allocation3], 48
  %1158 = vst.msk [vmem:[%s1157] sm:$0xf] %vm425, %v1152
  %1159 = vst.msk [vmem:[%s1157 + $0x4] sm:$0xf] %vm425, %v1154
  %s1160 = scalar_lea.vmem [#allocation2], 56
  %v1161 = vld [vmem:[%s1160] sm:$0xf]
  %v1162 = vld [vmem:[%s1160 + $0x4] sm:$0xf]
  %v1163 = vunpack.c.l.bf16 %v1161
  %v1164 = vunpack.c.l.bf16 %v1162
  %v1165 = vunpack.c.l.b16 %v1147
  %v1166 = vunpack.c.l.b16 %v1148
  %v1167 = vpack.c.b16 %v1166, %v1165
  %1168 = vrot.lane.b32.xlu0 %v1167, 32
  %v1169 = vpop.permute.xlu0 %1168
  %v1171 = vsel %vm315, %v1169, 0
  %1173 = vmatpush.bf16.msra.mxu0 0
  %1174 = vmatpush.bf16.msra.mxu0 0
  %1175 = vmatpush.bf16.msra.mxu0 0
  %1176 = vmatpush.bf16.msra.mxu0 0
  %1177 = vmatpush.bf16.msra.mxu0 0
  %1178 = vmatpush.bf16.msra.mxu0 0
  %1179 = vmatpush.bf16.msra.mxu0 %v312
  %1180 = vmatpush.bf16.msra.mxu0 %v311
  %1181 = vmatmul.bf16.gmra.mxu0 %v1171
  %v1182 = vpop.f32.mrf.mxu0
  %v1183 = vadd.f32 0.0, %v1182
  %v1184 = vpop.f32.mrf.mxu0
  %v1185 = vadd.f32 0.0, %v1184
  %1186 = vdwg.mxu0
  %v1187 = vadd.f32 %v1163, %v1183
  %v1188 = vadd.f32 %v1164, %v1185
  %v1189 = vmul.f32 %v1187, %v76
  %v1190 = vmul.f32 %v1188, %v76
  %v1191 = vxor.u32 %v1189, 2147483648
  %v1192 = vxor.u32 %v1190, 2147483648
  %v1193 = vmul.f32 %v1191, 1.442695
  %v1194 = vpow.pop %v1193
  %v1195 = vmul.f32 %v1192, 1.442695
  %v1196 = vpow.pop %v1195
  %v1197 = vadd.f32 %v1194, 1.0
  %v1198 = vadd.f32 %v1196, 1.0
  %v1199 = vrcp.pop %v1197
  %v1200 = vmul.f32 %v1197, %v1199
  %v1201 = vsub.f32 1.0, %v1200
  %v1202 = vmul.f32 %v1199, %v1201
  %v1203 = vadd.f32 %v1199, %v1202
  %vm1204 = vweird.f32 %v1197
  %vm1205 = vweird.f32 %v1199
  %vm1206 = vmor %vm1204, %vm1205
  %v1207 = vsel %vm1206, %v1199, %v1203
  %v1208 = vand.u32 2147483647, %v1197
  %vm1209 = vcmp.eq.f32.partialorder %v1208, 8.507059e+37
  %v1210 = vand.u32 %v1197, 2147483648
  %v1211 = vor.u32 1.1754944e-38, %v1210
  %v1212 = vsel %vm1209, %v1211, %v1207
  %v1213 = vmul.f32 1.0, %v1212
  %v1214 = vrcp.pop %v1198
  %v1215 = vmul.f32 %v1198, %v1214
  %v1216 = vsub.f32 1.0, %v1215
  %v1217 = vmul.f32 %v1214, %v1216
  %v1218 = vadd.f32 %v1214, %v1217
  %vm1219 = vweird.f32 %v1198
  %vm1220 = vweird.f32 %v1214
  %vm1221 = vmor %vm1219, %vm1220
  %v1222 = vsel %vm1221, %v1214, %v1218
  %v1223 = vand.u32 2147483647, %v1198
  %vm1224 = vcmp.eq.f32.partialorder %v1223, 8.507059e+37
  %v1225 = vand.u32 %v1198, 2147483648
  %v1226 = vor.u32 1.1754944e-38, %v1225
  %v1227 = vsel %vm1224, %v1226, %v1222
  %v1228 = vmul.f32 1.0, %v1227
  %v1229 = vmul.f32 %v1213, 2.0
  %v1230 = vmul.f32 %v1228, 2.0
  %v1231 = vsub.f32 %v1229, 1.0
  %v1232 = vsub.f32 %v1230, 1.0
  %v1233 = vsel %vm75, %v1231, %v1213
  %v1234 = vsel %vm75, %v1232, %v1228
  %v1235 = vmul.f32 %v1233, %v1133
  %v1236 = vmul.f32 %v1234, %v1134
  %1239 = vrot.lane.b32.xlu0 %v1233, 64
  %v1240 = vpop.permute.xlu0 %1239
  %1241 = vrot.lane.b32.xlu0 %v1234, 64
  %v1242 = vpop.permute.xlu0 %1241
  %v1245 = vmul.f32 %v1233, %v1240
  %v1246 = vmul.f32 %v1234, %v1242
  %1249 = vrot.lane.b32.xlu0 %v1245, 32
  %v1250 = vpop.permute.xlu0 %1249
  %1251 = vrot.lane.b32.xlu0 %v1246, 32
  %v1252 = vpop.permute.xlu0 %1251
  %v1255 = vadd.f32 %v1235, %v1250
  %v1256 = vadd.f32 %v1236, %v1252
  %v1257 = vtanh.pop %v1255
  %v1258 = vtanh.pop %v1256
  %1261 = vrot.lane.b32.xlu0 %v1257, 64
  %v1262 = vpop.permute.xlu0 %1261
  %1263 = vrot.lane.b32.xlu0 %v1258, 64
  %v1264 = vpop.permute.xlu0 %1263
  %v1267 = vmul.f32 %v1233, %v1262
  %v1268 = vmul.f32 %v1234, %v1264
  %v1269 = vpack.c.bf16 %v1267, %v1267
  %v1270 = vpack.c.bf16 %v1268, %v1268
  %1273 = vrot.lane.b32.xlu0 %v1269, 32
  %v1274 = vpop.permute.xlu0 %1273
  %1275 = vrot.lane.b32.xlu0 %v1270, 32
  %v1276 = vpop.permute.xlu0 %1275
  %s1279 = scalar_lea.vmem [#allocation3], 56
  %1280 = vst.msk [vmem:[%s1279] sm:$0xf] %vm425, %v1274
  %1281 = vst.msk [vmem:[%s1279 + $0x4] sm:$0xf] %vm425, %v1276
  %v1282 = vld [vmem:[%s4] sm:$0xf]
  %v1283 = vld [vmem:[%s4 + $0x4] sm:$0xf]
  %v1284 = vld [vmem:[%s4 + $0x8] sm:$0xf]
  %v1285 = vld [vmem:[%s4 + $0xc] sm:$0xf]
  %v1286 = vld [vmem:[%s4 + $0x10] sm:$0xf]
  %v1287 = vld [vmem:[%s4 + $0x14] sm:$0xf]
  %v1288 = vld [vmem:[%s4 + $0x18] sm:$0xf]
  %v1289 = vld [vmem:[%s4 + $0x1c] sm:$0xf]
  %v1290 = vld [vmem:[%s4 + $0x20] sm:$0xf]
  %v1291 = vld [vmem:[%s4 + $0x24] sm:$0xf]
  %v1292 = vld [vmem:[%s4 + $0x28] sm:$0xf]
  %v1293 = vld [vmem:[%s4 + $0x2c] sm:$0xf]
  %v1294 = vld [vmem:[%s4 + $0x30] sm:$0xf]
  %v1295 = vld [vmem:[%s4 + $0x34] sm:$0xf]
  %v1296 = vld [vmem:[%s4 + $0x38] sm:$0xf]
  %v1297 = vld [vmem:[%s4 + $0x3c] sm:$0xf]
  %v1298 = vld [vmem:[%s6] sm:$0x1]
  %s1299 = smul.addr %s94, 4
  %s1300 = scalar_lea.vmem [#allocation3], %s1299
  %v1301 = vld [vmem:[%s1300] sm:$0xf]
  %v1302 = vld [vmem:[%s1300 + $0x4] sm:$0xf]
  %v1303 = vld [vmem:[%s1300 + $0x8] sm:$0xf]
  %v1304 = vld [vmem:[%s1300 + $0xc] sm:$0xf]
  %v1305 = vld [vmem:[%s1300 + $0x10] sm:$0xf]
  %v1306 = vld [vmem:[%s1300 + $0x14] sm:$0xf]
  %v1307 = vld [vmem:[%s1300 + $0x18] sm:$0xf]
  %v1308 = vld [vmem:[%s1300 + $0x1c] sm:$0xf]
  %v1309 = vld [vmem:[%s1300 + $0x20] sm:$0xf]
  %v1310 = vld [vmem:[%s1300 + $0x24] sm:$0xf]
  %v1311 = vld [vmem:[%s1300 + $0x28] sm:$0xf]
  %v1312 = vld [vmem:[%s1300 + $0x2c] sm:$0xf]
  %v1313 = vld [vmem:[%s1300 + $0x30] sm:$0xf]
  %v1314 = vld [vmem:[%s1300 + $0x34] sm:$0xf]
  %v1315 = vld [vmem:[%s1300 + $0x38] sm:$0xf]
  %v1316 = vld [vmem:[%s1300 + $0x3c] sm:$0xf]
  %v1318 = vperm.slane %v1298, 0
  %v1336 = vunpack.c.l.b16 %v1301
  %v1337 = vunpack.c.l.b16 %v1302
  %v1338 = vunpack.c.l.b16 %v1303
  %v1339 = vunpack.c.l.b16 %v1304
  %v1340 = vunpack.c.l.b16 %v1305
  %v1341 = vunpack.c.l.b16 %v1306
  %v1342 = vunpack.c.l.b16 %v1307
  %v1343 = vunpack.c.l.b16 %v1308
  %v1344 = vunpack.c.l.b16 %v1309
  %v1345 = vunpack.c.l.b16 %v1310
  %v1346 = vunpack.c.l.b16 %v1311
  %v1347 = vunpack.c.l.b16 %v1312
  %v1348 = vunpack.c.l.b16 %v1313
  %v1349 = vunpack.c.l.b16 %v1314
  %v1350 = vunpack.c.l.b16 %v1315
  %v1351 = vunpack.c.l.b16 %v1316
  %v1352 = vpack.c.b16 %v1337, %v1336
  %v1353 = vpack.c.b16 %v1339, %v1338
  %v1354 = vpack.c.b16 %v1341, %v1340
  %v1355 = vpack.c.b16 %v1343, %v1342
  %v1356 = vpack.c.b16 %v1345, %v1344
  %v1357 = vpack.c.b16 %v1347, %v1346
  %v1358 = vpack.c.b16 %v1349, %v1348
  %v1359 = vpack.c.b16 %v1351, %v1350
  %v1384 = vunpack.c.l.b16 %v1282
  %v1385 = vunpack.c.l.b16 %v1283
  %v1386 = vunpack.c.l.b16 %v1284
  %v1387 = vunpack.c.l.b16 %v1285
  %v1388 = vunpack.c.l.b16 %v1286
  %v1389 = vunpack.c.l.b16 %v1287
  %v1390 = vunpack.c.l.b16 %v1288
  %v1391 = vunpack.c.l.b16 %v1289
  %v1392 = vunpack.c.l.b16 %v1290
  %v1393 = vunpack.c.l.b16 %v1291
  %v1394 = vunpack.c.l.b16 %v1292
  %v1395 = vunpack.c.l.b16 %v1293
  %v1396 = vunpack.c.l.b16 %v1294
  %v1397 = vunpack.c.l.b16 %v1295
  %v1398 = vunpack.c.l.b16 %v1296
  %v1399 = vunpack.c.l.b16 %v1297
  %v1400 = vpack.c.b16 %v1385, %v1384
  %v1401 = vpack.c.b16 %v1387, %v1386
  %v1402 = vpack.c.b16 %v1389, %v1388
  %v1403 = vpack.c.b16 %v1391, %v1390
  %v1404 = vpack.c.b16 %v1393, %v1392
  %v1405 = vpack.c.b16 %v1395, %v1394
  %v1406 = vpack.c.b16 %v1397, %v1396
  %v1407 = vpack.c.b16 %v1399, %v1398
  %1416 = vmatpush.bf16.msra.mxu0 %v1407
  %1417 = vmatpush.bf16.msra.mxu0 %v1406
  %1418 = vmatpush.bf16.msra.mxu0 %v1405
  %1419 = vmatpush.bf16.msra.mxu0 %v1404
  %1420 = vmatpush.bf16.msra.mxu0 %v1403
  %1421 = vmatpush.bf16.msra.mxu0 %v1402
  %1422 = vmatpush.bf16.msra.mxu0 %v1401
  %1423 = vmatpush.bf16.msra.mxu0 %v1400
  %1424 = vmatmul.bf16.gmra.mxu0 %v1352
  %v1425 = vpop.f32.mrf.mxu0
  %v1426 = vadd.f32 %v1318, %v1425
  %v1427 = vpop.f32.mrf.mxu0
  %v1428 = vadd.f32 %v1318, %v1427
  %1429 = vmatmul.bf16.gmra.mxu0 %v1353
  %v1430 = vpop.f32.mrf.mxu0
  %v1431 = vadd.f32 %v1318, %v1430
  %v1432 = vpop.f32.mrf.mxu0
  %v1433 = vadd.f32 %v1318, %v1432
  %1434 = vmatmul.bf16.gmra.mxu0 %v1354
  %v1435 = vpop.f32.mrf.mxu0
  %v1436 = vadd.f32 %v1318, %v1435
  %v1437 = vpop.f32.mrf.mxu0
  %v1438 = vadd.f32 %v1318, %v1437
  %1439 = vmatmul.bf16.gmra.mxu0 %v1355
  %v1440 = vpop.f32.mrf.mxu0
  %v1441 = vadd.f32 %v1318, %v1440
  %v1442 = vpop.f32.mrf.mxu0
  %v1443 = vadd.f32 %v1318, %v1442
  %1444 = vmatmul.bf16.gmra.mxu0 %v1356
  %v1445 = vpop.f32.mrf.mxu0
  %v1446 = vadd.f32 %v1318, %v1445
  %v1447 = vpop.f32.mrf.mxu0
  %v1448 = vadd.f32 %v1318, %v1447
  %1449 = vmatmul.bf16.gmra.mxu0 %v1357
  %v1450 = vpop.f32.mrf.mxu0
  %v1451 = vadd.f32 %v1318, %v1450
  %v1452 = vpop.f32.mrf.mxu0
  %v1453 = vadd.f32 %v1318, %v1452
  %1454 = vmatmul.bf16.gmra.mxu0 %v1358
  %v1455 = vpop.f32.mrf.mxu0
  %v1456 = vadd.f32 %v1318, %v1455
  %v1457 = vpop.f32.mrf.mxu0
  %v1458 = vadd.f32 %v1318, %v1457
  %1459 = vmatmul.bf16.gmra.mxu0 %v1359
  %v1460 = vpop.f32.mrf.mxu0
  %v1461 = vadd.f32 %v1318, %v1460
  %v1462 = vpop.f32.mrf.mxu0
  %v1463 = vadd.f32 %v1318, %v1462
  %1464 = vdwg.mxu0
  %v1465 = vpack.c.bf16 %v1426, %v1426
  %v1466 = vpack.c.bf16 %v1428, %v1428
  %v1467 = vpack.c.bf16 %v1431, %v1431
  %v1468 = vpack.c.bf16 %v1433, %v1433
  %v1469 = vpack.c.bf16 %v1436, %v1436
  %v1470 = vpack.c.bf16 %v1438, %v1438
  %v1471 = vpack.c.bf16 %v1441, %v1441
  %v1472 = vpack.c.bf16 %v1443, %v1443
  %v1473 = vpack.c.bf16 %v1446, %v1446
  %v1474 = vpack.c.bf16 %v1448, %v1448
  %v1475 = vpack.c.bf16 %v1451, %v1451
  %v1476 = vpack.c.bf16 %v1453, %v1453
  %v1477 = vpack.c.bf16 %v1456, %v1456
  %v1478 = vpack.c.bf16 %v1458, %v1458
  %v1479 = vpack.c.bf16 %v1461, %v1461
  %v1480 = vpack.c.bf16 %v1463, %v1463
  %1481 = vst [vmem:[%s278] sm:$0xf] %v1465
  %1482 = vst [vmem:[%s278 + $0x4] sm:$0xf] %v1466
  %1483 = vst [vmem:[%s278 + $0x8] sm:$0xf] %v1467
  %1484 = vst [vmem:[%s278 + $0xc] sm:$0xf] %v1468
  %1485 = vst [vmem:[%s278 + $0x10] sm:$0xf] %v1469
  %1486 = vst [vmem:[%s278 + $0x14] sm:$0xf] %v1470
  %1487 = vst [vmem:[%s278 + $0x18] sm:$0xf] %v1471
  %1488 = vst [vmem:[%s278 + $0x1c] sm:$0xf] %v1472
  %1489 = vst [vmem:[%s278 + $0x20] sm:$0xf] %v1473
  %1490 = vst [vmem:[%s278 + $0x24] sm:$0xf] %v1474
  %1491 = vst [vmem:[%s278 + $0x28] sm:$0xf] %v1475
  %1492 = vst [vmem:[%s278 + $0x2c] sm:$0xf] %v1476
  %1493 = vst [vmem:[%s278 + $0x30] sm:$0xf] %v1477
  %1494 = vst [vmem:[%s278 + $0x34] sm:$0xf] %v1478
  %1495 = vst [vmem:[%s278 + $0x38] sm:$0xf] %v1479
  %1496 = vst [vmem:[%s278 + $0x3c] sm:$0xf] %v1480
  %v1497 = vld [vmem:[%s5] sm:$0xf]
  %v1498 = vld [vmem:[%s5 + $0x4] sm:$0xf]
  %v1499 = vld [vmem:[%s5 + $0x8] sm:$0xf]
  %v1500 = vld [vmem:[%s5 + $0xc] sm:$0xf]
  %v1501 = vld [vmem:[#allocation2] sm:$0xf]
  %v1502 = vld [vmem:[#allocation2 + $0x4] sm:$0xf]
  %v1503 = vunpack.c.l.bf16 %v1501
  %v1504 = vunpack.c.l.bf16 %v1502
  %v1509 = vunpack.c.l.b16 %v1497
  %v1510 = vunpack.c.l.b16 %v1498
  %v1511 = vunpack.c.l.b16 %v1499
  %v1512 = vunpack.c.l.b16 %v1500
  %v1513 = vpack.c.b16 %v1510, %v1509
  %v1514 = vpack.c.b16 %v1512, %v1511
  %1517 = vmatpush.bf16.msra.mxu0 0
  %1518 = vmatpush.bf16.msra.mxu0 0
  %1519 = vmatpush.bf16.msra.mxu0 0
  %1520 = vmatpush.bf16.msra.mxu0 0
  %1521 = vmatpush.bf16.msra.mxu0 0
  %1522 = vmatpush.bf16.msra.mxu0 0
  %1523 = vmatpush.bf16.msra.mxu0 %v1514
  %1524 = vmatpush.bf16.msra.mxu0 %v1513
  %1525 = vmatmul.bf16.gmra.mxu0 %v317
  %v1526 = vpop.f32.mrf.mxu0
  %v1527 = vadd.f32 0.0, %v1526
  %v1528 = vpop.f32.mrf.mxu0
  %v1529 = vadd.f32 0.0, %v1528
  %1530 = vdwg.mxu0
  %v1531 = vadd.f32 %v1503, %v1527
  %v1532 = vadd.f32 %v1504, %v1529
  %v1533 = vmul.f32 %v1531, %v76
  %v1534 = vmul.f32 %v1532, %v76
  %v1535 = vxor.u32 %v1533, 2147483648
  %v1536 = vxor.u32 %v1534, 2147483648
  %v1537 = vmul.f32 %v1535, 1.442695
  %v1538 = vpow.pop %v1537
  %v1539 = vmul.f32 %v1536, 1.442695
  %v1540 = vpow.pop %v1539
  %v1541 = vadd.f32 %v1538, 1.0
  %v1542 = vadd.f32 %v1540, 1.0
  %v1543 = vrcp.pop %v1541
  %v1544 = vmul.f32 %v1541, %v1543
  %v1545 = vsub.f32 1.0, %v1544
  %v1546 = vmul.f32 %v1543, %v1545
  %v1547 = vadd.f32 %v1543, %v1546
  %vm1548 = vweird.f32 %v1541
  %vm1549 = vweird.f32 %v1543
  %vm1550 = vmor %vm1548, %vm1549
  %v1551 = vsel %vm1550, %v1543, %v1547
  %v1552 = vand.u32 2147483647, %v1541
  %vm1553 = vcmp.eq.f32.partialorder %v1552, 8.507059e+37
  %v1554 = vand.u32 %v1541, 2147483648
  %v1555 = vor.u32 1.1754944e-38, %v1554
  %v1556 = vsel %vm1553, %v1555, %v1551
  %v1557 = vmul.f32 1.0, %v1556
  %v1558 = vrcp.pop %v1542
  %v1559 = vmul.f32 %v1542, %v1558
  %v1560 = vsub.f32 1.0, %v1559
  %v1561 = vmul.f32 %v1558, %v1560
  %v1562 = vadd.f32 %v1558, %v1561
  %vm1563 = vweird.f32 %v1542
  %vm1564 = vweird.f32 %v1558
  %vm1565 = vmor %vm1563, %vm1564
  %v1566 = vsel %vm1565, %v1558, %v1562
  %v1567 = vand.u32 2147483647, %v1542
  %vm1568 = vcmp.eq.f32.partialorder %v1567, 8.507059e+37
  %v1569 = vand.u32 %v1542, 2147483648
  %v1570 = vor.u32 1.1754944e-38, %v1569
  %v1571 = vsel %vm1568, %v1570, %v1566
  %v1572 = vmul.f32 1.0, %v1571
  %v1573 = vmul.f32 %v1557, 2.0
  %v1574 = vmul.f32 %v1572, 2.0
  %v1575 = vsub.f32 %v1573, 1.0
  %v1576 = vsub.f32 %v1574, 1.0
  %v1577 = vsel %vm75, %v1575, %v1557
  %v1578 = vsel %vm75, %v1576, %v1572
  %v1579 = vmul.f32 %v1577, 0.0
  %v1580 = vmul.f32 %v1578, 0.0
  %1583 = vrot.lane.b32.xlu0 %v1577, 64
  %v1584 = vpop.permute.xlu0 %1583
  %1585 = vrot.lane.b32.xlu0 %v1578, 64
  %v1586 = vpop.permute.xlu0 %1585
  %v1589 = vmul.f32 %v1577, %v1584
  %v1590 = vmul.f32 %v1578, %v1586
  %1593 = vrot.lane.b32.xlu0 %v1589, 32
  %v1594 = vpop.permute.xlu0 %1593
  %1595 = vrot.lane.b32.xlu0 %v1590, 32
  %v1596 = vpop.permute.xlu0 %1595
  %v1599 = vadd.f32 %v1579, %v1594
  %v1600 = vadd.f32 %v1580, %v1596
  %v1601 = vtanh.pop %v1599
  %v1602 = vtanh.pop %v1600
  %1605 = vrot.lane.b32.xlu0 %v1601, 64
  %v1606 = vpop.permute.xlu0 %1605
  %1607 = vrot.lane.b32.xlu0 %v1602, 64
  %v1608 = vpop.permute.xlu0 %1607
  %v1611 = vmul.f32 %v1577, %v1606
  %v1612 = vmul.f32 %v1578, %v1608
  %v1613 = vpack.c.bf16 %v1611, %v1611
  %v1614 = vpack.c.bf16 %v1612, %v1612
  %1617 = vrot.lane.b32.xlu0 %v1613, 32
  %v1618 = vpop.permute.xlu0 %1617
  %1619 = vrot.lane.b32.xlu0 %v1614, 32
  %v1620 = vpop.permute.xlu0 %1619
  %1623 = vst.msk [vmem:[#allocation4] sm:$0xf] %vm425, %v1618
  %1624 = vst.msk [vmem:[#allocation4 + $0x4] sm:$0xf] %vm425, %v1620
  %v1625 = vld [vmem:[%s428] sm:$0xf]
  %v1626 = vld [vmem:[%s428 + $0x4] sm:$0xf]
  %v1627 = vunpack.c.l.bf16 %v1625
  %v1628 = vunpack.c.l.bf16 %v1626
  %v1629 = vunpack.c.l.b16 %v1613
  %v1630 = vunpack.c.l.b16 %v1614
  %v1631 = vpack.c.b16 %v1630, %v1629
  %1632 = vrot.lane.b32.xlu0 %v1631, 32
  %v1633 = vpop.permute.xlu0 %1632
  %v1635 = vsel %vm315, %v1633, 0
  %1637 = vmatpush.bf16.msra.mxu0 0
  %1638 = vmatpush.bf16.msra.mxu0 0
  %1639 = vmatpush.bf16.msra.mxu0 0
  %1640 = vmatpush.bf16.msra.mxu0 0
  %1641 = vmatpush.bf16.msra.mxu0 0
  %1642 = vmatpush.bf16.msra.mxu0 0
  %1643 = vmatpush.bf16.msra.mxu0 %v1514
  %1644 = vmatpush.bf16.msra.mxu0 %v1513
  %1645 = vmatmul.bf16.gmra.mxu0 %v1635
  %v1646 = vpop.f32.mrf.mxu0
  %v1647 = vadd.f32 0.0, %v1646
  %v1648 = vpop.f32.mrf.mxu0
  %v1649 = vadd.f32 0.0, %v1648
  %1650 = vdwg.mxu0
  %v1651 = vadd.f32 %v1627, %v1647
  %v1652 = vadd.f32 %v1628, %v1649
  %v1653 = vmul.f32 %v1651, %v76
  %v1654 = vmul.f32 %v1652, %v76
  %v1655 = vxor.u32 %v1653, 2147483648
  %v1656 = vxor.u32 %v1654, 2147483648
  %v1657 = vmul.f32 %v1655, 1.442695
  %v1658 = vpow.pop %v1657
  %v1659 = vmul.f32 %v1656, 1.442695
  %v1660 = vpow.pop %v1659
  %v1661 = vadd.f32 %v1658, 1.0
  %v1662 = vadd.f32 %v1660, 1.0
  %v1663 = vrcp.pop %v1661
  %v1664 = vmul.f32 %v1661, %v1663
  %v1665 = vsub.f32 1.0, %v1664
  %v1666 = vmul.f32 %v1663, %v1665
  %v1667 = vadd.f32 %v1663, %v1666
  %vm1668 = vweird.f32 %v1661
  %vm1669 = vweird.f32 %v1663
  %vm1670 = vmor %vm1668, %vm1669
  %v1671 = vsel %vm1670, %v1663, %v1667
  %v1672 = vand.u32 2147483647, %v1661
  %vm1673 = vcmp.eq.f32.partialorder %v1672, 8.507059e+37
  %v1674 = vand.u32 %v1661, 2147483648
  %v1675 = vor.u32 1.1754944e-38, %v1674
  %v1676 = vsel %vm1673, %v1675, %v1671
  %v1677 = vmul.f32 1.0, %v1676
  %v1678 = vrcp.pop %v1662
  %v1679 = vmul.f32 %v1662, %v1678
  %v1680 = vsub.f32 1.0, %v1679
  %v1681 = vmul.f32 %v1678, %v1680
  %v1682 = vadd.f32 %v1678, %v1681
  %vm1683 = vweird.f32 %v1662
  %vm1684 = vweird.f32 %v1678
  %vm1685 = vmor %vm1683, %vm1684
  %v1686 = vsel %vm1685, %v1678, %v1682
  %v1687 = vand.u32 2147483647, %v1662
  %vm1688 = vcmp.eq.f32.partialorder %v1687, 8.507059e+37
  %v1689 = vand.u32 %v1662, 2147483648
  %v1690 = vor.u32 1.1754944e-38, %v1689
  %v1691 = vsel %vm1688, %v1690, %v1686
  %v1692 = vmul.f32 1.0, %v1691
  %v1693 = vmul.f32 %v1677, 2.0
  %v1694 = vmul.f32 %v1692, 2.0
  %v1695 = vsub.f32 %v1693, 1.0
  %v1696 = vsub.f32 %v1694, 1.0
  %v1697 = vsel %vm75, %v1695, %v1677
  %v1698 = vsel %vm75, %v1696, %v1692
  %v1699 = vmul.f32 %v1697, %v1599
  %v1700 = vmul.f32 %v1698, %v1600
  %1703 = vrot.lane.b32.xlu0 %v1697, 64
  %v1704 = vpop.permute.xlu0 %1703
  %1705 = vrot.lane.b32.xlu0 %v1698, 64
  %v1706 = vpop.permute.xlu0 %1705
  %v1709 = vmul.f32 %v1697, %v1704
  %v1710 = vmul.f32 %v1698, %v1706
  %1713 = vrot.lane.b32.xlu0 %v1709, 32
  %v1714 = vpop.permute.xlu0 %1713
  %1715 = vrot.lane.b32.xlu0 %v1710, 32
  %v1716 = vpop.permute.xlu0 %1715
  %v1719 = vadd.f32 %v1699, %v1714
  %v1720 = vadd.f32 %v1700, %v1716
  %v1721 = vtanh.pop %v1719
  %v1722 = vtanh.pop %v1720
  %1725 = vrot.lane.b32.xlu0 %v1721, 64
  %v1726 = vpop.permute.xlu0 %1725
  %1727 = vrot.lane.b32.xlu0 %v1722, 64
  %v1728 = vpop.permute.xlu0 %1727
  %v1731 = vmul.f32 %v1697, %v1726
  %v1732 = vmul.f32 %v1698, %v1728
  %v1733 = vpack.c.bf16 %v1731, %v1731
  %v1734 = vpack.c.bf16 %v1732, %v1732
  %1737 = vrot.lane.b32.xlu0 %v1733, 32
  %v1738 = vpop.permute.xlu0 %1737
  %1739 = vrot.lane.b32.xlu0 %v1734, 32
  %v1740 = vpop.permute.xlu0 %1739
  %s1743 = scalar_lea.vmem [#allocation4], 8
  %1744 = vst.msk [vmem:[%s1743] sm:$0xf] %vm425, %v1738
  %1745 = vst.msk [vmem:[%s1743 + $0x4] sm:$0xf] %vm425, %v1740
  %v1746 = vld [vmem:[%s550] sm:$0xf]
  %v1747 = vld [vmem:[%s550 + $0x4] sm:$0xf]
  %v1748 = vunpack.c.l.bf16 %v1746
  %v1749 = vunpack.c.l.bf16 %v1747
  %v1750 = vunpack.c.l.b16 %v1733
  %v1751 = vunpack.c.l.b16 %v1734
  %v1752 = vpack.c.b16 %v1751, %v1750
  %1753 = vrot.lane.b32.xlu0 %v1752, 32
  %v1754 = vpop.permute.xlu0 %1753
  %v1756 = vsel %vm315, %v1754, 0
  %1758 = vmatpush.bf16.msra.mxu0 0
  %1759 = vmatpush.bf16.msra.mxu0 0
  %1760 = vmatpush.bf16.msra.mxu0 0
  %1761 = vmatpush.bf16.msra.mxu0 0
  %1762 = vmatpush.bf16.msra.mxu0 0
  %1763 = vmatpush.bf16.msra.mxu0 0
  %1764 = vmatpush.bf16.msra.mxu0 %v1514
  %1765 = vmatpush.bf16.msra.mxu0 %v1513
  %1766 = vmatmul.bf16.gmra.mxu0 %v1756
  %v1767 = vpop.f32.mrf.mxu0
  %v1768 = vadd.f32 0.0, %v1767
  %v1769 = vpop.f32.mrf.mxu0
  %v1770 = vadd.f32 0.0, %v1769
  %1771 = vdwg.mxu0
  %v1772 = vadd.f32 %v1748, %v1768
  %v1773 = vadd.f32 %v1749, %v1770
  %v1774 = vmul.f32 %v1772, %v76
  %v1775 = vmul.f32 %v1773, %v76
  %v1776 = vxor.u32 %v1774, 2147483648
  %v1777 = vxor.u32 %v1775, 2147483648
  %v1778 = vmul.f32 %v1776, 1.442695
  %v1779 = vpow.pop %v1778
  %v1780 = vmul.f32 %v1777, 1.442695
  %v1781 = vpow.pop %v1780
  %v1782 = vadd.f32 %v1779, 1.0
  %v1783 = vadd.f32 %v1781, 1.0
  %v1784 = vrcp.pop %v1782
  %v1785 = vmul.f32 %v1782, %v1784
  %v1786 = vsub.f32 1.0, %v1785
  %v1787 = vmul.f32 %v1784, %v1786
  %v1788 = vadd.f32 %v1784, %v1787
  %vm1789 = vweird.f32 %v1782
  %vm1790 = vweird.f32 %v1784
  %vm1791 = vmor %vm1789, %vm1790
  %v1792 = vsel %vm1791, %v1784, %v1788
  %v1793 = vand.u32 2147483647, %v1782
  %vm1794 = vcmp.eq.f32.partialorder %v1793, 8.507059e+37
  %v1795 = vand.u32 %v1782, 2147483648
  %v1796 = vor.u32 1.1754944e-38, %v1795
  %v1797 = vsel %vm1794, %v1796, %v1792
  %v1798 = vmul.f32 1.0, %v1797
  %v1799 = vrcp.pop %v1783
  %v1800 = vmul.f32 %v1783, %v1799
  %v1801 = vsub.f32 1.0, %v1800
  %v1802 = vmul.f32 %v1799, %v1801
  %v1803 = vadd.f32 %v1799, %v1802
  %vm1804 = vweird.f32 %v1783
  %vm1805 = vweird.f32 %v1799
  %vm1806 = vmor %vm1804, %vm1805
  %v1807 = vsel %vm1806, %v1799, %v1803
  %v1808 = vand.u32 2147483647, %v1783
  %vm1809 = vcmp.eq.f32.partialorder %v1808, 8.507059e+37
  %v1810 = vand.u32 %v1783, 2147483648
  %v1811 = vor.u32 1.1754944e-38, %v1810
  %v1812 = vsel %vm1809, %v1811, %v1807
  %v1813 = vmul.f32 1.0, %v1812
  %v1814 = vmul.f32 %v1798, 2.0
  %v1815 = vmul.f32 %v1813, 2.0
  %v1816 = vsub.f32 %v1814, 1.0
  %v1817 = vsub.f32 %v1815, 1.0
  %v1818 = vsel %vm75, %v1816, %v1798
  %v1819 = vsel %vm75, %v1817, %v1813
  %v1820 = vmul.f32 %v1818, %v1719
  %v1821 = vmul.f32 %v1819, %v1720
  %1824 = vrot.lane.b32.xlu0 %v1818, 64
  %v1825 = vpop.permute.xlu0 %1824
  %1826 = vrot.lane.b32.xlu0 %v1819, 64
  %v1827 = vpop.permute.xlu0 %1826
  %v1830 = vmul.f32 %v1818, %v1825
  %v1831 = vmul.f32 %v1819, %v1827
  %1834 = vrot.lane.b32.xlu0 %v1830, 32
  %v1835 = vpop.permute.xlu0 %1834
  %1836 = vrot.lane.b32.xlu0 %v1831, 32
  %v1837 = vpop.permute.xlu0 %1836
  %v1840 = vadd.f32 %v1820, %v1835
  %v1841 = vadd.f32 %v1821, %v1837
  %v1842 = vtanh.pop %v1840
  %v1843 = vtanh.pop %v1841
  %1846 = vrot.lane.b32.xlu0 %v1842, 64
  %v1847 = vpop.permute.xlu0 %1846
  %1848 = vrot.lane.b32.xlu0 %v1843, 64
  %v1849 = vpop.permute.xlu0 %1848
  %v1852 = vmul.f32 %v1818, %v1847
  %v1853 = vmul.f32 %v1819, %v1849
  %v1854 = vpack.c.bf16 %v1852, %v1852
  %v1855 = vpack.c.bf16 %v1853, %v1853
  %1858 = vrot.lane.b32.xlu0 %v1854, 32
  %v1859 = vpop.permute.xlu0 %1858
  %1860 = vrot.lane.b32.xlu0 %v1855, 32
  %v1861 = vpop.permute.xlu0 %1860
  %s1864 = scalar_lea.vmem [#allocation4], 16
  %1865 = vst.msk [vmem:[%s1864] sm:$0xf] %vm425, %v1859
  %1866 = vst.msk [vmem:[%s1864 + $0x4] sm:$0xf] %vm425, %v1861
  %v1867 = vld [vmem:[%s672] sm:$0xf]
  %v1868 = vld [vmem:[%s672 + $0x4] sm:$0xf]
  %v1869 = vunpack.c.l.bf16 %v1867
  %v1870 = vunpack.c.l.bf16 %v1868
  %v1871 = vunpack.c.l.b16 %v1854
  %v1872 = vunpack.c.l.b16 %v1855
  %v1873 = vpack.c.b16 %v1872, %v1871
  %1874 = vrot.lane.b32.xlu0 %v1873, 32
  %v1875 = vpop.permute.xlu0 %1874
  %v1877 = vsel %vm315, %v1875, 0
  %1879 = vmatpush.bf16.msra.mxu0 0
  %1880 = vmatpush.bf16.msra.mxu0 0
  %1881 = vmatpush.bf16.msra.mxu0 0
  %1882 = vmatpush.bf16.msra.mxu0 0
  %1883 = vmatpush.bf16.msra.mxu0 0
  %1884 = vmatpush.bf16.msra.mxu0 0
  %1885 = vmatpush.bf16.msra.mxu0 %v1514
  %1886 = vmatpush.bf16.msra.mxu0 %v1513
  %1887 = vmatmul.bf16.gmra.mxu0 %v1877
  %v1888 = vpop.f32.mrf.mxu0
  %v1889 = vadd.f32 0.0, %v1888
  %v1890 = vpop.f32.mrf.mxu0
  %v1891 = vadd.f32 0.0, %v1890
  %1892 = vdwg.mxu0
  %v1893 = vadd.f32 %v1869, %v1889
  %v1894 = vadd.f32 %v1870, %v1891
  %v1895 = vmul.f32 %v1893, %v76
  %v1896 = vmul.f32 %v1894, %v76
  %v1897 = vxor.u32 %v1895, 2147483648
  %v1898 = vxor.u32 %v1896, 2147483648
  %v1899 = vmul.f32 %v1897, 1.442695
  %v1900 = vpow.pop %v1899
  %v1901 = vmul.f32 %v1898, 1.442695
  %v1902 = vpow.pop %v1901
  %v1903 = vadd.f32 %v1900, 1.0
  %v1904 = vadd.f32 %v1902, 1.0
  %v1905 = vrcp.pop %v1903
  %v1906 = vmul.f32 %v1903, %v1905
  %v1907 = vsub.f32 1.0, %v1906
  %v1908 = vmul.f32 %v1905, %v1907
  %v1909 = vadd.f32 %v1905, %v1908
  %vm1910 = vweird.f32 %v1903
  %vm1911 = vweird.f32 %v1905
  %vm1912 = vmor %vm1910, %vm1911
  %v1913 = vsel %vm1912, %v1905, %v1909
  %v1914 = vand.u32 2147483647, %v1903
  %vm1915 = vcmp.eq.f32.partialorder %v1914, 8.507059e+37
  %v1916 = vand.u32 %v1903, 2147483648
  %v1917 = vor.u32 1.1754944e-38, %v1916
  %v1918 = vsel %vm1915, %v1917, %v1913
  %v1919 = vmul.f32 1.0, %v1918
  %v1920 = vrcp.pop %v1904
  %v1921 = vmul.f32 %v1904, %v1920
  %v1922 = vsub.f32 1.0, %v1921
  %v1923 = vmul.f32 %v1920, %v1922
  %v1924 = vadd.f32 %v1920, %v1923
  %vm1925 = vweird.f32 %v1904
  %vm1926 = vweird.f32 %v1920
  %vm1927 = vmor %vm1925, %vm1926
  %v1928 = vsel %vm1927, %v1920, %v1924
  %v1929 = vand.u32 2147483647, %v1904
  %vm1930 = vcmp.eq.f32.partialorder %v1929, 8.507059e+37
  %v1931 = vand.u32 %v1904, 2147483648
  %v1932 = vor.u32 1.1754944e-38, %v1931
  %v1933 = vsel %vm1930, %v1932, %v1928
  %v1934 = vmul.f32 1.0, %v1933
  %v1935 = vmul.f32 %v1919, 2.0
  %v1936 = vmul.f32 %v1934, 2.0
  %v1937 = vsub.f32 %v1935, 1.0
  %v1938 = vsub.f32 %v1936, 1.0
  %v1939 = vsel %vm75, %v1937, %v1919
  %v1940 = vsel %vm75, %v1938, %v1934
  %v1941 = vmul.f32 %v1939, %v1840
  %v1942 = vmul.f32 %v1940, %v1841
  %1945 = vrot.lane.b32.xlu0 %v1939, 64
  %v1946 = vpop.permute.xlu0 %1945
  %1947 = vrot.lane.b32.xlu0 %v1940, 64
  %v1948 = vpop.permute.xlu0 %1947
  %v1951 = vmul.f32 %v1939, %v1946
  %v1952 = vmul.f32 %v1940, %v1948
  %1955 = vrot.lane.b32.xlu0 %v1951, 32
  %v1956 = vpop.permute.xlu0 %1955
  %1957 = vrot.lane.b32.xlu0 %v1952, 32
  %v1958 = vpop.permute.xlu0 %1957
  %v1961 = vadd.f32 %v1941, %v1956
  %v1962 = vadd.f32 %v1942, %v1958
  %v1963 = vtanh.pop %v1961
  %v1964 = vtanh.pop %v1962
  %1967 = vrot.lane.b32.xlu0 %v1963, 64
  %v1968 = vpop.permute.xlu0 %1967
  %1969 = vrot.lane.b32.xlu0 %v1964, 64
  %v1970 = vpop.permute.xlu0 %1969
  %v1973 = vmul.f32 %v1939, %v1968
  %v1974 = vmul.f32 %v1940, %v1970
  %v1975 = vpack.c.bf16 %v1973, %v1973
  %v1976 = vpack.c.bf16 %v1974, %v1974
  %1979 = vrot.lane.b32.xlu0 %v1975, 32
  %v1980 = vpop.permute.xlu0 %1979
  %1981 = vrot.lane.b32.xlu0 %v1976, 32
  %v1982 = vpop.permute.xlu0 %1981
  %s1985 = scalar_lea.vmem [#allocation4], 24
  %1986 = vst.msk [vmem:[%s1985] sm:$0xf] %vm425, %v1980
  %1987 = vst.msk [vmem:[%s1985 + $0x4] sm:$0xf] %vm425, %v1982
  %v1988 = vld [vmem:[%s794] sm:$0xf]
  %v1989 = vld [vmem:[%s794 + $0x4] sm:$0xf]
  %v1990 = vunpack.c.l.bf16 %v1988
  %v1991 = vunpack.c.l.bf16 %v1989
  %v1992 = vunpack.c.l.b16 %v1975
  %v1993 = vunpack.c.l.b16 %v1976
  %v1994 = vpack.c.b16 %v1993, %v1992
  %1995 = vrot.lane.b32.xlu0 %v1994, 32
  %v1996 = vpop.permute.xlu0 %1995
  %v1998 = vsel %vm315, %v1996, 0
  %2000 = vmatpush.bf16.msra.mxu0 0
  %2001 = vmatpush.bf16.msra.mxu0 0
  %2002 = vmatpush.bf16.msra.mxu0 0
  %2003 = vmatpush.bf16.msra.mxu0 0
  %2004 = vmatpush.bf16.msra.mxu0 0
  %2005 = vmatpush.bf16.msra.mxu0 0
  %2006 = vmatpush.bf16.msra.mxu0 %v1514
  %2007 = vmatpush.bf16.msra.mxu0 %v1513
  %2008 = vmatmul.bf16.gmra.mxu0 %v1998
  %v2009 = vpop.f32.mrf.mxu0
  %v2010 = vadd.f32 0.0, %v2009
  %v2011 = vpop.f32.mrf.mxu0
  %v2012 = vadd.f32 0.0, %v2011
  %2013 = vdwg.mxu0
  %v2014 = vadd.f32 %v1990, %v2010
  %v2015 = vadd.f32 %v1991, %v2012
  %v2016 = vmul.f32 %v2014, %v76
  %v2017 = vmul.f32 %v2015, %v76
  %v2018 = vxor.u32 %v2016, 2147483648
  %v2019 = vxor.u32 %v2017, 2147483648
  %v2020 = vmul.f32 %v2018, 1.442695
  %v2021 = vpow.pop %v2020
  %v2022 = vmul.f32 %v2019, 1.442695
  %v2023 = vpow.pop %v2022
  %v2024 = vadd.f32 %v2021, 1.0
  %v2025 = vadd.f32 %v2023, 1.0
  %v2026 = vrcp.pop %v2024
  %v2027 = vmul.f32 %v2024, %v2026
  %v2028 = vsub.f32 1.0, %v2027
  %v2029 = vmul.f32 %v2026, %v2028
  %v2030 = vadd.f32 %v2026, %v2029
  %vm2031 = vweird.f32 %v2024
  %vm2032 = vweird.f32 %v2026
  %vm2033 = vmor %vm2031, %vm2032
  %v2034 = vsel %vm2033, %v2026, %v2030
  %v2035 = vand.u32 2147483647, %v2024
  %vm2036 = vcmp.eq.f32.partialorder %v2035, 8.507059e+37
  %v2037 = vand.u32 %v2024, 2147483648
  %v2038 = vor.u32 1.1754944e-38, %v2037
  %v2039 = vsel %vm2036, %v2038, %v2034
  %v2040 = vmul.f32 1.0, %v2039
  %v2041 = vrcp.pop %v2025
  %v2042 = vmul.f32 %v2025, %v2041
  %v2043 = vsub.f32 1.0, %v2042
  %v2044 = vmul.f32 %v2041, %v2043
  %v2045 = vadd.f32 %v2041, %v2044
  %vm2046 = vweird.f32 %v2025
  %vm2047 = vweird.f32 %v2041
  %vm2048 = vmor %vm2046, %vm2047
  %v2049 = vsel %vm2048, %v2041, %v2045
  %v2050 = vand.u32 2147483647, %v2025
  %vm2051 = vcmp.eq.f32.partialorder %v2050, 8.507059e+37
  %v2052 = vand.u32 %v2025, 2147483648
  %v2053 = vor.u32 1.1754944e-38, %v2052
  %v2054 = vsel %vm2051, %v2053, %v2049
  %v2055 = vmul.f32 1.0, %v2054
  %v2056 = vmul.f32 %v2040, 2.0
  %v2057 = vmul.f32 %v2055, 2.0
  %v2058 = vsub.f32 %v2056, 1.0
  %v2059 = vsub.f32 %v2057, 1.0
  %v2060 = vsel %vm75, %v2058, %v2040
  %v2061 = vsel %vm75, %v2059, %v2055
  %v2062 = vmul.f32 %v2060, %v1961
  %v2063 = vmul.f32 %v2061, %v1962
  %2066 = vrot.lane.b32.xlu0 %v2060, 64
  %v2067 = vpop.permute.xlu0 %2066
  %2068 = vrot.lane.b32.xlu0 %v2061, 64
  %v2069 = vpop.permute.xlu0 %2068
  %v2072 = vmul.f32 %v2060, %v2067
  %v2073 = vmul.f32 %v2061, %v2069
  %2076 = vrot.lane.b32.xlu0 %v2072, 32
  %v2077 = vpop.permute.xlu0 %2076
  %2078 = vrot.lane.b32.xlu0 %v2073, 32
  %v2079 = vpop.permute.xlu0 %2078
  %v2082 = vadd.f32 %v2062, %v2077
  %v2083 = vadd.f32 %v2063, %v2079
  %v2084 = vtanh.pop %v2082
  %v2085 = vtanh.pop %v2083
  %2088 = vrot.lane.b32.xlu0 %v2084, 64
  %v2089 = vpop.permute.xlu0 %2088
  %2090 = vrot.lane.b32.xlu0 %v2085, 64
  %v2091 = vpop.permute.xlu0 %2090
  %v2094 = vmul.f32 %v2060, %v2089
  %v2095 = vmul.f32 %v2061, %v2091
  %v2096 = vpack.c.bf16 %v2094, %v2094
  %v2097 = vpack.c.bf16 %v2095, %v2095
  %2100 = vrot.lane.b32.xlu0 %v2096, 32
  %v2101 = vpop.permute.xlu0 %2100
  %2102 = vrot.lane.b32.xlu0 %v2097, 32
  %v2103 = vpop.permute.xlu0 %2102
  %s2106 = scalar_lea.vmem [#allocation4], 32
  %2107 = vst.msk [vmem:[%s2106] sm:$0xf] %vm425, %v2101
  %2108 = vst.msk [vmem:[%s2106 + $0x4] sm:$0xf] %vm425, %v2103
  %v2109 = vld [vmem:[%s916] sm:$0xf]
  %v2110 = vld [vmem:[%s916 + $0x4] sm:$0xf]
  %v2111 = vunpack.c.l.bf16 %v2109
  %v2112 = vunpack.c.l.bf16 %v2110
  %v2113 = vunpack.c.l.b16 %v2096
  %v2114 = vunpack.c.l.b16 %v2097
  %v2115 = vpack.c.b16 %v2114, %v2113
  %2116 = vrot.lane.b32.xlu0 %v2115, 32
  %v2117 = vpop.permute.xlu0 %2116
  %v2119 = vsel %vm315, %v2117, 0
  %2121 = vmatpush.bf16.msra.mxu0 0
  %2122 = vmatpush.bf16.msra.mxu0 0
  %2123 = vmatpush.bf16.msra.mxu0 0
  %2124 = vmatpush.bf16.msra.mxu0 0
  %2125 = vmatpush.bf16.msra.mxu0 0
  %2126 = vmatpush.bf16.msra.mxu0 0
  %2127 = vmatpush.bf16.msra.mxu0 %v1514
  %2128 = vmatpush.bf16.msra.mxu0 %v1513
  %2129 = vmatmul.bf16.gmra.mxu0 %v2119
  %v2130 = vpop.f32.mrf.mxu0
  %v2131 = vadd.f32 0.0, %v2130
  %v2132 = vpop.f32.mrf.mxu0
  %v2133 = vadd.f32 0.0, %v2132
  %2134 = vdwg.mxu0
  %v2135 = vadd.f32 %v2111, %v2131
  %v2136 = vadd.f32 %v2112, %v2133
  %v2137 = vmul.f32 %v2135, %v76
  %v2138 = vmul.f32 %v2136, %v76
  %v2139 = vxor.u32 %v2137, 2147483648
  %v2140 = vxor.u32 %v2138, 2147483648
  %v2141 = vmul.f32 %v2139, 1.442695
  %v2142 = vpow.pop %v2141
  %v2143 = vmul.f32 %v2140, 1.442695
  %v2144 = vpow.pop %v2143
  %v2145 = vadd.f32 %v2142, 1.0
  %v2146 = vadd.f32 %v2144, 1.0
  %v2147 = vrcp.pop %v2145
  %v2148 = vmul.f32 %v2145, %v2147
  %v2149 = vsub.f32 1.0, %v2148
  %v2150 = vmul.f32 %v2147, %v2149
  %v2151 = vadd.f32 %v2147, %v2150
  %vm2152 = vweird.f32 %v2145
  %vm2153 = vweird.f32 %v2147
  %vm2154 = vmor %vm2152, %vm2153
  %v2155 = vsel %vm2154, %v2147, %v2151
  %v2156 = vand.u32 2147483647, %v2145
  %vm2157 = vcmp.eq.f32.partialorder %v2156, 8.507059e+37
  %v2158 = vand.u32 %v2145, 2147483648
  %v2159 = vor.u32 1.1754944e-38, %v2158
  %v2160 = vsel %vm2157, %v2159, %v2155
  %v2161 = vmul.f32 1.0, %v2160
  %v2162 = vrcp.pop %v2146
  %v2163 = vmul.f32 %v2146, %v2162
  %v2164 = vsub.f32 1.0, %v2163
  %v2165 = vmul.f32 %v2162, %v2164
  %v2166 = vadd.f32 %v2162, %v2165
  %vm2167 = vweird.f32 %v2146
  %vm2168 = vweird.f32 %v2162
  %vm2169 = vmor %vm2167, %vm2168
  %v2170 = vsel %vm2169, %v2162, %v2166
  %v2171 = vand.u32 2147483647, %v2146
  %vm2172 = vcmp.eq.f32.partialorder %v2171, 8.507059e+37
  %v2173 = vand.u32 %v2146, 2147483648
  %v2174 = vor.u32 1.1754944e-38, %v2173
  %v2175 = vsel %vm2172, %v2174, %v2170
  %v2176 = vmul.f32 1.0, %v2175
  %v2177 = vmul.f32 %v2161, 2.0
  %v2178 = vmul.f32 %v2176, 2.0
  %v2179 = vsub.f32 %v2177, 1.0
  %v2180 = vsub.f32 %v2178, 1.0
  %v2181 = vsel %vm75, %v2179, %v2161
  %v2182 = vsel %vm75, %v2180, %v2176
  %v2183 = vmul.f32 %v2181, %v2082
  %v2184 = vmul.f32 %v2182, %v2083
  %2187 = vrot.lane.b32.xlu0 %v2181, 64
  %v2188 = vpop.permute.xlu0 %2187
  %2189 = vrot.lane.b32.xlu0 %v2182, 64
  %v2190 = vpop.permute.xlu0 %2189
  %v2193 = vmul.f32 %v2181, %v2188
  %v2194 = vmul.f32 %v2182, %v2190
  %2197 = vrot.lane.b32.xlu0 %v2193, 32
  %v2198 = vpop.permute.xlu0 %2197
  %2199 = vrot.lane.b32.xlu0 %v2194, 32
  %v2200 = vpop.permute.xlu0 %2199
  %v2203 = vadd.f32 %v2183, %v2198
  %v2204 = vadd.f32 %v2184, %v2200
  %v2205 = vtanh.pop %v2203
  %v2206 = vtanh.pop %v2204
  %2209 = vrot.lane.b32.xlu0 %v2205, 64
  %v2210 = vpop.permute.xlu0 %2209
  %2211 = vrot.lane.b32.xlu0 %v2206, 64
  %v2212 = vpop.permute.xlu0 %2211
  %v2215 = vmul.f32 %v2181, %v2210
  %v2216 = vmul.f32 %v2182, %v2212
  %v2217 = vpack.c.bf16 %v2215, %v2215
  %v2218 = vpack.c.bf16 %v2216, %v2216
  %2221 = vrot.lane.b32.xlu0 %v2217, 32
  %v2222 = vpop.permute.xlu0 %2221
  %2223 = vrot.lane.b32.xlu0 %v2218, 32
  %v2224 = vpop.permute.xlu0 %2223
  %s2227 = scalar_lea.vmem [#allocation4], 40
  %2228 = vst.msk [vmem:[%s2227] sm:$0xf] %vm425, %v2222
  %2229 = vst.msk [vmem:[%s2227 + $0x4] sm:$0xf] %vm425, %v2224
  %v2230 = vld [vmem:[%s1038] sm:$0xf]
  %v2231 = vld [vmem:[%s1038 + $0x4] sm:$0xf]
  %v2232 = vunpack.c.l.bf16 %v2230
  %v2233 = vunpack.c.l.bf16 %v2231
  %v2234 = vunpack.c.l.b16 %v2217
  %v2235 = vunpack.c.l.b16 %v2218
  %v2236 = vpack.c.b16 %v2235, %v2234
  %2237 = vrot.lane.b32.xlu0 %v2236, 32
  %v2238 = vpop.permute.xlu0 %2237
  %v2240 = vsel %vm315, %v2238, 0
  %2242 = vmatpush.bf16.msra.mxu0 0
  %2243 = vmatpush.bf16.msra.mxu0 0
  %2244 = vmatpush.bf16.msra.mxu0 0
  %2245 = vmatpush.bf16.msra.mxu0 0
  %2246 = vmatpush.bf16.msra.mxu0 0
  %2247 = vmatpush.bf16.msra.mxu0 0
  %2248 = vmatpush.bf16.msra.mxu0 %v1514
  %2249 = vmatpush.bf16.msra.mxu0 %v1513
  %2250 = vmatmul.bf16.gmra.mxu0 %v2240
  %v2251 = vpop.f32.mrf.mxu0
  %v2252 = vadd.f32 0.0, %v2251
  %v2253 = vpop.f32.mrf.mxu0
  %v2254 = vadd.f32 0.0, %v2253
  %2255 = vdwg.mxu0
  %v2256 = vadd.f32 %v2232, %v2252
  %v2257 = vadd.f32 %v2233, %v2254
  %v2258 = vmul.f32 %v2256, %v76
  %v2259 = vmul.f32 %v2257, %v76
  %v2260 = vxor.u32 %v2258, 2147483648
  %v2261 = vxor.u32 %v2259, 2147483648
  %v2262 = vmul.f32 %v2260, 1.442695
  %v2263 = vpow.pop %v2262
  %v2264 = vmul.f32 %v2261, 1.442695
  %v2265 = vpow.pop %v2264
  %v2266 = vadd.f32 %v2263, 1.0
  %v2267 = vadd.f32 %v2265, 1.0
  %v2268 = vrcp.pop %v2266
  %v2269 = vmul.f32 %v2266, %v2268
  %v2270 = vsub.f32 1.0, %v2269
  %v2271 = vmul.f32 %v2268, %v2270
  %v2272 = vadd.f32 %v2268, %v2271
  %vm2273 = vweird.f32 %v2266
  %vm2274 = vweird.f32 %v2268
  %vm2275 = vmor %vm2273, %vm2274
  %v2276 = vsel %vm2275, %v2268, %v2272
  %v2277 = vand.u32 2147483647, %v2266
  %vm2278 = vcmp.eq.f32.partialorder %v2277, 8.507059e+37
  %v2279 = vand.u32 %v2266, 2147483648
  %v2280 = vor.u32 1.1754944e-38, %v2279
  %v2281 = vsel %vm2278, %v2280, %v2276
  %v2282 = vmul.f32 1.0, %v2281
  %v2283 = vrcp.pop %v2267
  %v2284 = vmul.f32 %v2267, %v2283
  %v2285 = vsub.f32 1.0, %v2284
  %v2286 = vmul.f32 %v2283, %v2285
  %v2287 = vadd.f32 %v2283, %v2286
  %vm2288 = vweird.f32 %v2267
  %vm2289 = vweird.f32 %v2283
  %vm2290 = vmor %vm2288, %vm2289
  %v2291 = vsel %vm2290, %v2283, %v2287
  %v2292 = vand.u32 2147483647, %v2267
  %vm2293 = vcmp.eq.f32.partialorder %v2292, 8.507059e+37
  %v2294 = vand.u32 %v2267, 2147483648
  %v2295 = vor.u32 1.1754944e-38, %v2294
  %v2296 = vsel %vm2293, %v2295, %v2291
  %v2297 = vmul.f32 1.0, %v2296
  %v2298 = vmul.f32 %v2282, 2.0
  %v2299 = vmul.f32 %v2297, 2.0
  %v2300 = vsub.f32 %v2298, 1.0
  %v2301 = vsub.f32 %v2299, 1.0
  %v2302 = vsel %vm75, %v2300, %v2282
  %v2303 = vsel %vm75, %v2301, %v2297
  %v2304 = vmul.f32 %v2302, %v2203
  %v2305 = vmul.f32 %v2303, %v2204
  %2308 = vrot.lane.b32.xlu0 %v2302, 64
  %v2309 = vpop.permute.xlu0 %2308
  %2310 = vrot.lane.b32.xlu0 %v2303, 64
  %v2311 = vpop.permute.xlu0 %2310
  %v2314 = vmul.f32 %v2302, %v2309
  %v2315 = vmul.f32 %v2303, %v2311
  %2318 = vrot.lane.b32.xlu0 %v2314, 32
  %v2319 = vpop.permute.xlu0 %2318
  %2320 = vrot.lane.b32.xlu0 %v2315, 32
  %v2321 = vpop.permute.xlu0 %2320
  %v2324 = vadd.f32 %v2304, %v2319
  %v2325 = vadd.f32 %v2305, %v2321
  %v2326 = vtanh.pop %v2324
  %v2327 = vtanh.pop %v2325
  %2330 = vrot.lane.b32.xlu0 %v2326, 64
  %v2331 = vpop.permute.xlu0 %2330
  %2332 = vrot.lane.b32.xlu0 %v2327, 64
  %v2333 = vpop.permute.xlu0 %2332
  %v2336 = vmul.f32 %v2302, %v2331
  %v2337 = vmul.f32 %v2303, %v2333
  %v2338 = vpack.c.bf16 %v2336, %v2336
  %v2339 = vpack.c.bf16 %v2337, %v2337
  %2342 = vrot.lane.b32.xlu0 %v2338, 32
  %v2343 = vpop.permute.xlu0 %2342
  %2344 = vrot.lane.b32.xlu0 %v2339, 32
  %v2345 = vpop.permute.xlu0 %2344
  %s2348 = scalar_lea.vmem [#allocation4], 48
  %2349 = vst.msk [vmem:[%s2348] sm:$0xf] %vm425, %v2343
  %2350 = vst.msk [vmem:[%s2348 + $0x4] sm:$0xf] %vm425, %v2345
  %v2351 = vld [vmem:[%s1160] sm:$0xf]
  %v2352 = vld [vmem:[%s1160 + $0x4] sm:$0xf]
  %v2353 = vunpack.c.l.bf16 %v2351
  %v2354 = vunpack.c.l.bf16 %v2352
  %v2355 = vunpack.c.l.b16 %v2338
  %v2356 = vunpack.c.l.b16 %v2339
  %v2357 = vpack.c.b16 %v2356, %v2355
  %2358 = vrot.lane.b32.xlu0 %v2357, 32
  %v2359 = vpop.permute.xlu0 %2358
  %v2361 = vsel %vm315, %v2359, 0
  %2363 = vmatpush.bf16.msra.mxu0 0
  %2364 = vmatpush.bf16.msra.mxu0 0
  %2365 = vmatpush.bf16.msra.mxu0 0
  %2366 = vmatpush.bf16.msra.mxu0 0
  %2367 = vmatpush.bf16.msra.mxu0 0
  %2368 = vmatpush.bf16.msra.mxu0 0
  %2369 = vmatpush.bf16.msra.mxu0 %v1514
  %2370 = vmatpush.bf16.msra.mxu0 %v1513
  %2371 = vmatmul.bf16.gmra.mxu0 %v2361
  %v2372 = vpop.f32.mrf.mxu0
  %v2373 = vadd.f32 0.0, %v2372
  %v2374 = vpop.f32.mrf.mxu0
  %v2375 = vadd.f32 0.0, %v2374
  %2376 = vdwg.mxu0
  %v2377 = vadd.f32 %v2353, %v2373
  %v2378 = vadd.f32 %v2354, %v2375
  %v2379 = vmul.f32 %v2377, %v76
  %v2380 = vmul.f32 %v2378, %v76
  %v2381 = vxor.u32 %v2379, 2147483648
  %v2382 = vxor.u32 %v2380, 2147483648
  %v2383 = vmul.f32 %v2381, 1.442695
  %v2384 = vpow.pop %v2383
  %v2385 = vmul.f32 %v2382, 1.442695
  %v2386 = vpow.pop %v2385
  %v2387 = vadd.f32 %v2384, 1.0
  %v2388 = vadd.f32 %v2386, 1.0
  %v2389 = vrcp.pop %v2387
  %v2390 = vmul.f32 %v2387, %v2389
  %v2391 = vsub.f32 1.0, %v2390
  %v2392 = vmul.f32 %v2389, %v2391
  %v2393 = vadd.f32 %v2389, %v2392
  %vm2394 = vweird.f32 %v2387
  %vm2395 = vweird.f32 %v2389
  %vm2396 = vmor %vm2394, %vm2395
  %v2397 = vsel %vm2396, %v2389, %v2393
  %v2398 = vand.u32 2147483647, %v2387
  %vm2399 = vcmp.eq.f32.partialorder %v2398, 8.507059e+37
  %v2400 = vand.u32 %v2387, 2147483648
  %v2401 = vor.u32 1.1754944e-38, %v2400
  %v2402 = vsel %vm2399, %v2401, %v2397
  %v2403 = vmul.f32 1.0, %v2402
  %v2404 = vrcp.pop %v2388
  %v2405 = vmul.f32 %v2388, %v2404
  %v2406 = vsub.f32 1.0, %v2405
  %v2407 = vmul.f32 %v2404, %v2406
  %v2408 = vadd.f32 %v2404, %v2407
  %vm2409 = vweird.f32 %v2388
  %vm2410 = vweird.f32 %v2404
  %vm2411 = vmor %vm2409, %vm2410
  %v2412 = vsel %vm2411, %v2404, %v2408
  %v2413 = vand.u32 2147483647, %v2388
  %vm2414 = vcmp.eq.f32.partialorder %v2413, 8.507059e+37
  %v2415 = vand.u32 %v2388, 2147483648
  %v2416 = vor.u32 1.1754944e-38, %v2415
  %v2417 = vsel %vm2414, %v2416, %v2412
  %v2418 = vmul.f32 1.0, %v2417
  %v2419 = vmul.f32 %v2403, 2.0
  %v2420 = vmul.f32 %v2418, 2.0
  %v2421 = vsub.f32 %v2419, 1.0
  %v2422 = vsub.f32 %v2420, 1.0
  %v2423 = vsel %vm75, %v2421, %v2403
  %v2424 = vsel %vm75, %v2422, %v2418
  %v2425 = vmul.f32 %v2423, %v2324
  %v2426 = vmul.f32 %v2424, %v2325
  %2429 = vrot.lane.b32.xlu0 %v2423, 64
  %v2430 = vpop.permute.xlu0 %2429
  %2431 = vrot.lane.b32.xlu0 %v2424, 64
  %v2432 = vpop.permute.xlu0 %2431
  %v2435 = vmul.f32 %v2423, %v2430
  %v2436 = vmul.f32 %v2424, %v2432
  %2439 = vrot.lane.b32.xlu0 %v2435, 32
  %v2440 = vpop.permute.xlu0 %2439
  %2441 = vrot.lane.b32.xlu0 %v2436, 32
  %v2442 = vpop.permute.xlu0 %2441
  %v2445 = vadd.f32 %v2425, %v2440
  %v2446 = vadd.f32 %v2426, %v2442
  %v2447 = vtanh.pop %v2445
  %v2448 = vtanh.pop %v2446
  %2451 = vrot.lane.b32.xlu0 %v2447, 64
  %v2452 = vpop.permute.xlu0 %2451
  %2453 = vrot.lane.b32.xlu0 %v2448, 64
  %v2454 = vpop.permute.xlu0 %2453
  %v2457 = vmul.f32 %v2423, %v2452
  %v2458 = vmul.f32 %v2424, %v2454
  %v2459 = vpack.c.bf16 %v2457, %v2457
  %v2460 = vpack.c.bf16 %v2458, %v2458
  %2463 = vrot.lane.b32.xlu0 %v2459, 32
  %v2464 = vpop.permute.xlu0 %2463
  %2465 = vrot.lane.b32.xlu0 %v2460, 32
  %v2466 = vpop.permute.xlu0 %2465
  %s2469 = scalar_lea.vmem [#allocation4], 56
  %2470 = vst.msk [vmem:[%s2469] sm:$0xf] %vm425, %v2464
  %2471 = vst.msk [vmem:[%s2469 + $0x4] sm:$0xf] %vm425, %v2466
  %v2472 = vld [vmem:[%s7] sm:$0xf]
  %v2473 = vld [vmem:[%s7 + $0x4] sm:$0xf]
  %v2474 = vld [vmem:[%s7 + $0x8] sm:$0xf]
  %v2475 = vld [vmem:[%s7 + $0xc] sm:$0xf]
  %v2476 = vld [vmem:[%s7 + $0x10] sm:$0xf]
  %v2477 = vld [vmem:[%s7 + $0x14] sm:$0xf]
  %v2478 = vld [vmem:[%s7 + $0x18] sm:$0xf]
  %v2479 = vld [vmem:[%s7 + $0x1c] sm:$0xf]
  %v2480 = vld [vmem:[%s7 + $0x20] sm:$0xf]
  %v2481 = vld [vmem:[%s7 + $0x24] sm:$0xf]
  %v2482 = vld [vmem:[%s7 + $0x28] sm:$0xf]
  %v2483 = vld [vmem:[%s7 + $0x2c] sm:$0xf]
  %v2484 = vld [vmem:[%s7 + $0x30] sm:$0xf]
  %v2485 = vld [vmem:[%s7 + $0x34] sm:$0xf]
  %v2486 = vld [vmem:[%s7 + $0x38] sm:$0xf]
  %v2487 = vld [vmem:[%s7 + $0x3c] sm:$0xf]
  %v2488 = vld [vmem:[%s8] sm:$0x1]
  %v2489 = vld [vmem:[%s9] sm:$0xf]
  %v2490 = vld [vmem:[%s9 + $0x4] sm:$0xf]
  %v2491 = vld [vmem:[%s9 + $0x8] sm:$0xf]
  %v2492 = vld [vmem:[%s9 + $0xc] sm:$0xf]
  %v2493 = vld [vmem:[%s9 + $0x10] sm:$0xf]
  %v2494 = vld [vmem:[%s9 + $0x14] sm:$0xf]
  %v2495 = vld [vmem:[%s9 + $0x18] sm:$0xf]
  %v2496 = vld [vmem:[%s9 + $0x1c] sm:$0xf]
  %v2497 = vld [vmem:[%s9 + $0x20] sm:$0xf]
  %v2498 = vld [vmem:[%s9 + $0x24] sm:$0xf]
  %v2499 = vld [vmem:[%s9 + $0x28] sm:$0xf]
  %v2500 = vld [vmem:[%s9 + $0x2c] sm:$0xf]
  %v2501 = vld [vmem:[%s9 + $0x30] sm:$0xf]
  %v2502 = vld [vmem:[%s9 + $0x34] sm:$0xf]
  %v2503 = vld [vmem:[%s9 + $0x38] sm:$0xf]
  %v2504 = vld [vmem:[%s9 + $0x3c] sm:$0xf]
  %v2505 = vld [vmem:[%s10] sm:$0x1]
  %s2506 = smul.addr %s94, 4
  %s2507 = scalar_lea.vmem [#allocation4], %s2506
  %v2508 = vld [vmem:[%s2507] sm:$0xf]
  %v2509 = vld [vmem:[%s2507 + $0x4] sm:$0xf]
  %v2510 = vld [vmem:[%s2507 + $0x8] sm:$0xf]
  %v2511 = vld [vmem:[%s2507 + $0xc] sm:$0xf]
  %v2512 = vld [vmem:[%s2507 + $0x10] sm:$0xf]
  %v2513 = vld [vmem:[%s2507 + $0x14] sm:$0xf]
  %v2514 = vld [vmem:[%s2507 + $0x18] sm:$0xf]
  %v2515 = vld [vmem:[%s2507 + $0x1c] sm:$0xf]
  %v2516 = vld [vmem:[%s2507 + $0x20] sm:$0xf]
  %v2517 = vld [vmem:[%s2507 + $0x24] sm:$0xf]
  %v2518 = vld [vmem:[%s2507 + $0x28] sm:$0xf]
  %v2519 = vld [vmem:[%s2507 + $0x2c] sm:$0xf]
  %v2520 = vld [vmem:[%s2507 + $0x30] sm:$0xf]
  %v2521 = vld [vmem:[%s2507 + $0x34] sm:$0xf]
  %v2522 = vld [vmem:[%s2507 + $0x38] sm:$0xf]
  %v2523 = vld [vmem:[%s2507 + $0x3c] sm:$0xf]
  %v2524 = vunpack.c.l.bf16 %v2508
  %v2525 = vunpack.c.l.bf16 %v2509
  %v2526 = vunpack.c.l.bf16 %v2510
  %v2527 = vunpack.c.l.bf16 %v2511
  %v2528 = vunpack.c.l.bf16 %v2512
  %v2529 = vunpack.c.l.bf16 %v2513
  %v2530 = vunpack.c.l.bf16 %v2514
  %v2531 = vunpack.c.l.bf16 %v2515
  %v2532 = vunpack.c.l.bf16 %v2516
  %v2533 = vunpack.c.l.bf16 %v2517
  %v2534 = vunpack.c.l.bf16 %v2518
  %v2535 = vunpack.c.l.bf16 %v2519
  %v2536 = vunpack.c.l.bf16 %v2520
  %v2537 = vunpack.c.l.bf16 %v2521
  %v2538 = vunpack.c.l.bf16 %v2522
  %v2539 = vunpack.c.l.bf16 %v2523
  %v2540 = vmax.f32 %v2524, 0.0
  %v2541 = vmax.f32 %v2525, 0.0
  %v2542 = vmax.f32 %v2526, 0.0
  %v2543 = vmax.f32 %v2527, 0.0
  %v2544 = vmax.f32 %v2528, 0.0
  %v2545 = vmax.f32 %v2529, 0.0
  %v2546 = vmax.f32 %v2530, 0.0
  %v2547 = vmax.f32 %v2531, 0.0
  %v2548 = vmax.f32 %v2532, 0.0
  %v2549 = vmax.f32 %v2533, 0.0
  %v2550 = vmax.f32 %v2534, 0.0
  %v2551 = vmax.f32 %v2535, 0.0
  %v2552 = vmax.f32 %v2536, 0.0
  %v2553 = vmax.f32 %v2537, 0.0
  %v2554 = vmax.f32 %v2538, 0.0
  %v2555 = vmax.f32 %v2539, 0.0
  %v2556 = vpack.c.bf16 %v2541, %v2540
  %v2557 = vpack.c.bf16 %v2543, %v2542
  %v2558 = vpack.c.bf16 %v2545, %v2544
  %v2559 = vpack.c.bf16 %v2547, %v2546
  %v2560 = vpack.c.bf16 %v2549, %v2548
  %v2561 = vpack.c.bf16 %v2551, %v2550
  %v2562 = vpack.c.bf16 %v2553, %v2552
  %v2563 = vpack.c.bf16 %v2555, %v2554
  %v2565 = vperm.slane %v2488, 0
  %v2583 = vunpack.c.l.b16 %v2472
  %v2584 = vunpack.c.l.b16 %v2473
  %v2585 = vunpack.c.l.b16 %v2474
  %v2586 = vunpack.c.l.b16 %v2475
  %v2587 = vunpack.c.l.b16 %v2476
  %v2588 = vunpack.c.l.b16 %v2477
  %v2589 = vunpack.c.l.b16 %v2478
  %v2590 = vunpack.c.l.b16 %v2479
  %v2591 = vunpack.c.l.b16 %v2480
  %v2592 = vunpack.c.l.b16 %v2481
  %v2593 = vunpack.c.l.b16 %v2482
  %v2594 = vunpack.c.l.b16 %v2483
  %v2595 = vunpack.c.l.b16 %v2484
  %v2596 = vunpack.c.l.b16 %v2485
  %v2597 = vunpack.c.l.b16 %v2486
  %v2598 = vunpack.c.l.b16 %v2487
  %v2599 = vpack.c.b16 %v2584, %v2583
  %v2600 = vpack.c.b16 %v2586, %v2585
  %v2601 = vpack.c.b16 %v2588, %v2587
  %v2602 = vpack.c.b16 %v2590, %v2589
  %v2603 = vpack.c.b16 %v2592, %v2591
  %v2604 = vpack.c.b16 %v2594, %v2593
  %v2605 = vpack.c.b16 %v2596, %v2595
  %v2606 = vpack.c.b16 %v2598, %v2597
  %2615 = vmatpush.bf16.msra.mxu0 %v2606
  %2616 = vmatpush.bf16.msra.mxu0 %v2605
  %2617 = vmatpush.bf16.msra.mxu0 %v2604
  %2618 = vmatpush.bf16.msra.mxu0 %v2603
  %2619 = vmatpush.bf16.msra.mxu0 %v2602
  %2620 = vmatpush.bf16.msra.mxu0 %v2601
  %2621 = vmatpush.bf16.msra.mxu0 %v2600
  %2622 = vmatpush.bf16.msra.mxu0 %v2599
  %2623 = vmatmul.bf16.gmra.mxu0 %v2556
  %v2624 = vpop.f32.mrf.mxu0
  %v2625 = vadd.f32 %v2565, %v2624
  %v2626 = vpop.f32.mrf.mxu0
  %v2627 = vadd.f32 %v2565, %v2626
  %2628 = vmatmul.bf16.gmra.mxu0 %v2557
  %v2629 = vpop.f32.mrf.mxu0
  %v2630 = vadd.f32 %v2565, %v2629
  %v2631 = vpop.f32.mrf.mxu0
  %v2632 = vadd.f32 %v2565, %v2631
  %2633 = vmatmul.bf16.gmra.mxu0 %v2558
  %v2634 = vpop.f32.mrf.mxu0
  %v2635 = vadd.f32 %v2565, %v2634
  %v2636 = vpop.f32.mrf.mxu0
  %v2637 = vadd.f32 %v2565, %v2636
  %2638 = vmatmul.bf16.gmra.mxu0 %v2559
  %v2639 = vpop.f32.mrf.mxu0
  %v2640 = vadd.f32 %v2565, %v2639
  %v2641 = vpop.f32.mrf.mxu0
  %v2642 = vadd.f32 %v2565, %v2641
  %2643 = vmatmul.bf16.gmra.mxu0 %v2560
  %v2644 = vpop.f32.mrf.mxu0
  %v2645 = vadd.f32 %v2565, %v2644
  %v2646 = vpop.f32.mrf.mxu0
  %v2647 = vadd.f32 %v2565, %v2646
  %2648 = vmatmul.bf16.gmra.mxu0 %v2561
  %v2649 = vpop.f32.mrf.mxu0
  %v2650 = vadd.f32 %v2565, %v2649
  %v2651 = vpop.f32.mrf.mxu0
  %v2652 = vadd.f32 %v2565, %v2651
  %2653 = vmatmul.bf16.gmra.mxu0 %v2562
  %v2654 = vpop.f32.mrf.mxu0
  %v2655 = vadd.f32 %v2565, %v2654
  %v2656 = vpop.f32.mrf.mxu0
  %v2657 = vadd.f32 %v2565, %v2656
  %2658 = vmatmul.bf16.gmra.mxu0 %v2563
  %v2659 = vpop.f32.mrf.mxu0
  %v2660 = vadd.f32 %v2565, %v2659
  %v2661 = vpop.f32.mrf.mxu0
  %v2662 = vadd.f32 %v2565, %v2661
  %2663 = vdwg.mxu0
  %v2664 = vmax.f32 %v2625, 0.0
  %v2665 = vmax.f32 %v2627, 0.0
  %v2666 = vmax.f32 %v2630, 0.0
  %v2667 = vmax.f32 %v2632, 0.0
  %v2668 = vmax.f32 %v2635, 0.0
  %v2669 = vmax.f32 %v2637, 0.0
  %v2670 = vmax.f32 %v2640, 0.0
  %v2671 = vmax.f32 %v2642, 0.0
  %v2672 = vmax.f32 %v2645, 0.0
  %v2673 = vmax.f32 %v2647, 0.0
  %v2674 = vmax.f32 %v2650, 0.0
  %v2675 = vmax.f32 %v2652, 0.0
  %v2676 = vmax.f32 %v2655, 0.0
  %v2677 = vmax.f32 %v2657, 0.0
  %v2678 = vmax.f32 %v2660, 0.0
  %v2679 = vmax.f32 %v2662, 0.0
  %v2680 = vpack.c.bf16 %v2665, %v2664
  %v2681 = vpack.c.bf16 %v2667, %v2666
  %v2682 = vpack.c.bf16 %v2669, %v2668
  %v2683 = vpack.c.bf16 %v2671, %v2670
  %v2684 = vpack.c.bf16 %v2673, %v2672
  %v2685 = vpack.c.bf16 %v2675, %v2674
  %v2686 = vpack.c.bf16 %v2677, %v2676
  %v2687 = vpack.c.bf16 %v2679, %v2678
  %v2689 = vperm.slane %v2505, 0
  %v2707 = vunpack.c.l.b16 %v2489
  %v2708 = vunpack.c.l.b16 %v2490
  %v2709 = vunpack.c.l.b16 %v2491
  %v2710 = vunpack.c.l.b16 %v2492
  %v2711 = vunpack.c.l.b16 %v2493
  %v2712 = vunpack.c.l.b16 %v2494
  %v2713 = vunpack.c.l.b16 %v2495
  %v2714 = vunpack.c.l.b16 %v2496
  %v2715 = vunpack.c.l.b16 %v2497
  %v2716 = vunpack.c.l.b16 %v2498
  %v2717 = vunpack.c.l.b16 %v2499
  %v2718 = vunpack.c.l.b16 %v2500
  %v2719 = vunpack.c.l.b16 %v2501
  %v2720 = vunpack.c.l.b16 %v2502
  %v2721 = vunpack.c.l.b16 %v2503
  %v2722 = vunpack.c.l.b16 %v2504
  %v2723 = vpack.c.b16 %v2708, %v2707
  %v2724 = vpack.c.b16 %v2710, %v2709
  %v2725 = vpack.c.b16 %v2712, %v2711
  %v2726 = vpack.c.b16 %v2714, %v2713
  %v2727 = vpack.c.b16 %v2716, %v2715
  %v2728 = vpack.c.b16 %v2718, %v2717
  %v2729 = vpack.c.b16 %v2720, %v2719
  %v2730 = vpack.c.b16 %v2722, %v2721
  %2739 = vmatpush.bf16.msra.mxu0 %v2730
  %2740 = vmatpush.bf16.msra.mxu0 %v2729
  %2741 = vmatpush.bf16.msra.mxu0 %v2728
  %2742 = vmatpush.bf16.msra.mxu0 %v2727
  %2743 = vmatpush.bf16.msra.mxu0 %v2726
  %2744 = vmatpush.bf16.msra.mxu0 %v2725
  %2745 = vmatpush.bf16.msra.mxu0 %v2724
  %2746 = vmatpush.bf16.msra.mxu0 %v2723
  %2747 = vmatmul.bf16.gmra.mxu0 %v2680
  %v2748 = vpop.f32.mrf.mxu0
  %v2749 = vadd.f32 %v2689, %v2748
  %v2750 = vpop.f32.mrf.mxu0
  %v2751 = vadd.f32 %v2689, %v2750
  %2752 = vmatmul.bf16.gmra.mxu0 %v2681
  %v2753 = vpop.f32.mrf.mxu0
  %v2754 = vadd.f32 %v2689, %v2753
  %v2755 = vpop.f32.mrf.mxu0
  %v2756 = vadd.f32 %v2689, %v2755
  %2757 = vmatmul.bf16.gmra.mxu0 %v2682
  %v2758 = vpop.f32.mrf.mxu0
  %v2759 = vadd.f32 %v2689, %v2758
  %v2760 = vpop.f32.mrf.mxu0
  %v2761 = vadd.f32 %v2689, %v2760
  %2762 = vmatmul.bf16.gmra.mxu0 %v2683
  %v2763 = vpop.f32.mrf.mxu0
  %v2764 = vadd.f32 %v2689, %v2763
  %v2765 = vpop.f32.mrf.mxu0
  %v2766 = vadd.f32 %v2689, %v2765
  %2767 = vmatmul.bf16.gmra.mxu0 %v2684
  %v2768 = vpop.f32.mrf.mxu0
  %v2769 = vadd.f32 %v2689, %v2768
  %v2770 = vpop.f32.mrf.mxu0
  %v2771 = vadd.f32 %v2689, %v2770
  %2772 = vmatmul.bf16.gmra.mxu0 %v2685
  %v2773 = vpop.f32.mrf.mxu0
  %v2774 = vadd.f32 %v2689, %v2773
  %v2775 = vpop.f32.mrf.mxu0
  %v2776 = vadd.f32 %v2689, %v2775
  %2777 = vmatmul.bf16.gmra.mxu0 %v2686
  %v2778 = vpop.f32.mrf.mxu0
  %v2779 = vadd.f32 %v2689, %v2778
  %v2780 = vpop.f32.mrf.mxu0
  %v2781 = vadd.f32 %v2689, %v2780
  %2782 = vmatmul.bf16.gmra.mxu0 %v2687
  %v2783 = vpop.f32.mrf.mxu0
  %v2784 = vadd.f32 %v2689, %v2783
  %v2785 = vpop.f32.mrf.mxu0
  %v2786 = vadd.f32 %v2689, %v2785
  %2787 = vdwg.mxu0
  %2788 = vst [vmem:[%s11] sm:$0xff] %v2749
  %2789 = vst [vmem:[%s11 + $0x8] sm:$0xff] %v2751
  %2790 = vst [vmem:[%s11 + $0x10] sm:$0xff] %v2754
  %2791 = vst [vmem:[%s11 + $0x18] sm:$0xff] %v2756
  %2792 = vst [vmem:[%s11 + $0x20] sm:$0xff] %v2759
  %2793 = vst [vmem:[%s11 + $0x28] sm:$0xff] %v2761
  %2794 = vst [vmem:[%s11 + $0x30] sm:$0xff] %v2764
  %2795 = vst [vmem:[%s11 + $0x38] sm:$0xff] %v2766
  %2796 = vst [vmem:[%s11 + $0x40] sm:$0xff] %v2769
  %2797 = vst [vmem:[%s11 + $0x48] sm:$0xff] %v2771
  %2798 = vst [vmem:[%s11 + $0x50] sm:$0xff] %v2774
  %2799 = vst [vmem:[%s11 + $0x58] sm:$0xff] %v2776
  %2800 = vst [vmem:[%s11 + $0x60] sm:$0xff] %v2779
  %2801 = vst [vmem:[%s11 + $0x68] sm:$0xff] %v2781
  %2802 = vst [vmem:[%s11 + $0x70] sm:$0xff] %v2784
  %2803 = vst [vmem:[%s11 + $0x78] sm:$0xff] %v2786
  // Predicated region
  $region46: #{lstm_imf_lite_forward.1} parent=0 // pred_check
    _
  $region47: #{lstm_imf_lite_forward.1} parent=0 // pred_check_branch
    %2805 = sbr.rel (0) target = $region49
  $region48: #{lstm_imf_lite_forward.1} parent=0 // pred_region
    _
  $region49: #{lstm_imf_lite_forward.1} parent=0 // pred_fallthru
    _
  // Predicated region
  $region50: #{lstm_imf_lite_forward.1} parent=0 // pred_check
    _
  $region51: #{lstm_imf_lite_forward.1} parent=0 // pred_check_branch
    %2807 = sbr.rel (0) target = $region53
  $region52: #{lstm_imf_lite_forward.1} parent=0 // pred_region
    _
  $region53: #{lstm_imf_lite_forward.1} parent=0 // pred_fallthru
    _

</llo_original>
